<compile_context>
chip_gen: v7x
topology: tpu7x:2x2x1
jax: 0.10.0
libtpu: 0.0.40
codegen_flags: <defaults>
</compile_context>

<pallas_src>
import jax
import jax.numpy as jnp
from jax.experimental import pallas as pl
from jax.experimental.pallas import tpu as pltpu

GIN_EPS = 0.0      # PyG GINConv default eps
BN_EPS = 1e-5      # BatchNorm1d default eps


def round_up(x, m):
    return ((x + m - 1) // m) * m


def pad_to(a, shape):
    out = jnp.zeros(shape, a.dtype)
    return out.at[tuple(slice(0, s) for s in a.shape)].set(a)


# ---------------------------------------------------------------------------
# Kernel 1 (fallback path): one GINConv layer, grid over row tiles only.
#   X is VMEM-resident (bf16); A streamed once as (tm, N_pad) row slabs.
#   agg = A_slab @ X                      (one bf16 MXU dot, f32 accumulation)
#   y   = (1 + eps) * x_rows + agg
#   h   = relu(y @ W1' + b1')             (eval BatchNorm folded into W1'/b1')
#   h   = relu(h @ W2 + b2)               (Dropout = identity in eval)
#   pooled_partial = P[:, rows] @ h       (fused global_add_pool contribution)
# ---------------------------------------------------------------------------
def gin_conv_kernel(adj_ref, x_ref, pool_ref, w1_ref, b1_ref, w2_ref, b2_ref,
                    h_ref, pooled_ref):
    tm = h_ref.shape[0]
    row0 = pl.multiple_of(pl.program_id(0) * tm, tm)

    x_all = x_ref[...]                               # (N_pad, F) bf16, VMEM-resident
    x_self = x_ref[pl.ds(row0, tm), :]               # (tm, F) self-term rows

    agg = jnp.dot(adj_ref[...], x_all, preferred_element_type=jnp.float32)
    y = agg + (1.0 + GIN_EPS) * x_self.astype(jnp.float32)

    h = jnp.dot(y.astype(jnp.bfloat16), w1_ref[...],
                preferred_element_type=jnp.float32) + b1_ref[...]
    h = jnp.maximum(h, 0.0)
    h = jnp.dot(h.astype(jnp.bfloat16), w2_ref[...],
                preferred_element_type=jnp.float32) + b2_ref[...]
    h = jnp.maximum(h, 0.0)

    h_bf = h.astype(jnp.bfloat16)
    h_ref[...] = h_bf
    # per-row-tile pooled partial (summed outside; no shared accumulator across the
    # "parallel" row axis -> megacore safe)
    pooled_ref[0] = jnp.dot(pool_ref[...], h_bf, preferred_element_type=jnp.float32)


def gin_conv(x_bf16, adj_bf16, pool_bf16, w1, b1, w2, b2, *, tm=256,
             vmem_limit_bytes=32 * 1024 * 1024):
    """One GINConv layer (eval mode). Returns (h_bf16, pooled_partials)."""
    n_pad, f_pad = x_bf16.shape
    g_pad = pool_bf16.shape[0]
    dh = w1.shape[1]
    assert n_pad % tm == 0
    ni = n_pad // tm

    grid_spec = pltpu.PrefetchScalarGridSpec(
        num_scalar_prefetch=0,
        grid=(ni,),
        in_specs=[
            pl.BlockSpec((tm, n_pad), lambda i: (i, 0)),     # A row slab (bf16), streamed once
            pl.BlockSpec((n_pad, f_pad), lambda i: (0, 0)),  # X, VMEM-resident (constant map)
            pl.BlockSpec((g_pad, tm), lambda i: (0, i)),     # pooling columns of this tile
            pl.BlockSpec((f_pad, dh), lambda i: (0, 0)),     # W1 (BN folded, bf16)
            pl.BlockSpec((1, dh), lambda i: (0, 0)),         # b1
            pl.BlockSpec((dh, dh), lambda i: (0, 0)),        # W2 (bf16)
            pl.BlockSpec((1, dh), lambda i: (0, 0)),         # b2
        ],
        out_specs=[
            pl.BlockSpec((tm, dh), lambda i: (i, 0)),        # h rows (bf16)
            pl.BlockSpec((1, g_pad, dh), lambda i: (i, 0, 0)),  # pooled partial
        ],
    )
    return pl.pallas_call(
        gin_conv_kernel,
        out_shape=(jax.ShapeDtypeStruct((n_pad, dh), jnp.bfloat16),
                   jax.ShapeDtypeStruct((ni, g_pad, dh), jnp.float32)),
        grid_spec=grid_spec,
        compiler_params=pltpu.CompilerParams(
            dimension_semantics=("parallel",),
            vmem_limit_bytes=vmem_limit_bytes,
        ),
    )(adj_bf16, x_bf16, pool_bf16, w1, b1, w2, b2)


# ---------------------------------------------------------------------------
# Kernel 2 (primary path): all three GINConv layers + pooling + MLP head fused
# into one pallas_call; grid=(3,) over layers, A/X/pool/weights VMEM-resident.
# ---------------------------------------------------------------------------
def gin_fused3_kernel(adj_ref, x0_ref, pool_ref,
                      w1s_ref, b1s_ref, w2s_ref, b2s_ref,
                      w1a_ref, w1b_ref, w1c_ref, bl1_ref, wl2_ref, bl2_ref,
                      out_ref, hbuf_ref, p1_ref, p2_ref):
    l = pl.program_id(0)

    @pl.when(l == 0)
    def _():
        hbuf_ref[...] = x0_ref[...]          # seed the activation buffer with x

    xin = hbuf_ref[...]                       # (N_pad, DH) bf16, previous layer / x
    agg = jnp.dot(adj_ref[...], xin, preferred_element_type=jnp.float32)
    y = agg + (1.0 + GIN_EPS) * xin.astype(jnp.float32)

    h = jnp.dot(y.astype(jnp.bfloat16), w1s_ref[0],
                preferred_element_type=jnp.float32) + b1s_ref[0]
    h = jnp.maximum(h, 0.0)
    h = jnp.dot(h.astype(jnp.bfloat16), w2s_ref[0],
                preferred_element_type=jnp.float32) + b2s_ref[0]
    h = jnp.maximum(h, 0.0)

    h_bf = h.astype(jnp.bfloat16)
    hbuf_ref[...] = h_bf                      # becomes next layer's input
    pooled = jnp.dot(pool_ref[...], h_bf, preferred_element_type=jnp.float32)

    @pl.when(l == 0)
    def _():
        p1_ref[...] = pooled

    @pl.when(l == 1)
    def _():
        p2_ref[...] = pooled

    @pl.when(l == 2)
    def _():
        # readout head: Wl1 split row-wise into 3 blocks -> no lane-axis concat
        hh = (jnp.dot(p1_ref[...].astype(jnp.bfloat16), w1a_ref[...],
                      preferred_element_type=jnp.float32)
              + jnp.dot(p2_ref[...].astype(jnp.bfloat16), w1b_ref[...],
                        preferred_element_type=jnp.float32)
              + jnp.dot(pooled.astype(jnp.bfloat16), w1c_ref[...],
                        preferred_element_type=jnp.float32)
              + bl1_ref[...])
        hh = jnp.maximum(hh, 0.0)              # Dropout = identity in eval
        out_ref[...] = jnp.dot(hh.astype(jnp.bfloat16), wl2_ref[...],
                               preferred_element_type=jnp.float32) + bl2_ref[...]


def gin_fused3(x_bf16, adj_bf16, pool_bf16, kparams, *,
               vmem_limit_bytes=48 * 1024 * 1024):
    n_pad, f_pad = x_bf16.shape
    g_pad = pool_bf16.shape[0]
    convs = kparams["convs"]
    dh = convs[0][0].shape[1]
    assert f_pad == dh, "fused path needs a uniform (padded) activation width"

    w1s = jnp.stack([c[0] for c in convs])    # (3, F, DH) bf16
    b1s = jnp.stack([c[1] for c in convs])    # (3, 1, DH) f32
    w2s = jnp.stack([c[2] for c in convs])    # (3, DH, DH) bf16
    b2s = jnp.stack([c[3] for c in convs])    # (3, 1, DH) f32
    w1a, w1b, w1c, bl1, wl2, bl2 = kparams["head"]
    hid, out_pad = wl2.shape

    grid_spec = pltpu.PrefetchScalarGridSpec(
        num_scalar_prefetch=0,
        grid=(3,),
        in_specs=[
            pl.BlockSpec((n_pad, n_pad), lambda l: (0, 0)),    # A, resident, fetched once
            pl.BlockSpec((n_pad, f_pad), lambda l: (0, 0)),    # x0, resident
            pl.BlockSpec((g_pad, n_pad), lambda l: (0, 0)),    # pool, resident
            pl.BlockSpec((1, f_pad, dh), lambda l: (l, 0, 0)),  # W1[l] (BN folded, bf16)
            pl.BlockSpec((1, 1, dh), lambda l: (l, 0, 0)),      # b1[l]
            pl.BlockSpec((1, dh, dh), lambda l: (l, 0, 0)),     # W2[l] (bf16)
            pl.BlockSpec((1, 1, dh), lambda l: (l, 0, 0)),      # b2[l]
            pl.BlockSpec((dh, hid), lambda l: (0, 0)),          # Wl1 block 1 (bf16)
            pl.BlockSpec((dh, hid), lambda l: (0, 0)),          # Wl1 block 2 (bf16)
            pl.BlockSpec((dh, hid), lambda l: (0, 0)),          # Wl1 block 3 (bf16)
            pl.BlockSpec((1, hid), lambda l: (0, 0)),           # bl1
            pl.BlockSpec((hid, out_pad), lambda l: (0, 0)),     # Wl2 (bf16)
            pl.BlockSpec((1, out_pad), lambda l: (0, 0)),       # bl2
        ],
        out_specs=pl.BlockSpec((g_pad, out_pad), lambda l: (0, 0)),
        scratch_shapes=[
            pltpu.VMEM((n_pad, dh), jnp.bfloat16),   # activation carry buffer
            pltpu.VMEM((g_pad, dh), jnp.float32),    # pooled h1
            pltpu.VMEM((g_pad, dh), jnp.float32),    # pooled h2
        ],
    )
    return pl.pallas_call(
        gin_fused3_kernel,
        out_shape=jax.ShapeDtypeStruct((g_pad, out_pad), jnp.float32),
        grid_spec=grid_spec,
        compiler_params=pltpu.CompilerParams(
            dimension_semantics=("arbitrary",),      # layers are sequentially dependent
            vmem_limit_bytes=vmem_limit_bytes,
        ),
    )(adj_bf16, x_bf16, pool_bf16, w1s, b1s, w2s, b2s,
      w1a, w1b, w1c, bl1, wl2, bl2)


# ---------------------------------------------------------------------------
# Readout head for the non-fused path. Operands are KB-sized -> plain XLA
# (dispatch-overhead dominated; see review), bf16 MXU path kept.
# ---------------------------------------------------------------------------
def head_xla(partials, head_params):
    w1a, w1b, w1c, bl1, wl2, bl2 = head_params
    p1 = partials[0].sum(axis=0).astype(jnp.bfloat16)
    p2 = partials[1].sum(axis=0).astype(jnp.bfloat16)
    p3 = partials[2].sum(axis=0).astype(jnp.bfloat16)
    h = (jnp.dot(p1, w1a, preferred_element_type=jnp.float32)
         + jnp.dot(p2, w1b, preferred_element_type=jnp.float32)
         + jnp.dot(p3, w1c, preferred_element_type=jnp.float32)
         + bl1)
    h = jnp.maximum(h, 0.0)
    return jnp.dot(h.astype(jnp.bfloat16), wl2,
                   preferred_element_type=jnp.float32) + bl2


# ---------------------------------------------------------------------------
# Full forward pass (padded / kernel-parameter domain)
# ---------------------------------------------------------------------------
def simple_gin_forward(x_bf16, adj_bf16, pool_bf16, kparams, *, tm=256,
                       fuse=None, vmem_budget_bytes=48 * 1024 * 1024):
    n_pad, f_pad = x_bf16.shape
    dh = kparams["convs"][0][0].shape[1]
    # Conservative VMEM estimate for full-fusion (A counted once: constant index_map,
    # fetched once).  Budget default leaves headroom on v7x (64 MiB physical);
    # v5e/v6e (128 MiB) can raise it.
    need = (n_pad * n_pad * 2            # bf16 adjacency
            + 2 * n_pad * dh * 2         # resident x0 + activation carry buffer
            + 4 * 1024 * 1024)           # weights / pooled scratch / slack
    fits = (f_pad == dh) and (need <= vmem_budget_bytes)
    if fuse is None:
        fuse = fits
    if fuse:
        assert fits
        return gin_fused3(x_bf16, adj_bf16, pool_bf16, kparams,
                          vmem_limit_bytes=vmem_budget_bytes)
    # fallback: one pallas_call per layer (A streamed as row slabs), XLA head
    h = x_bf16
    partials = []
    for cp in kparams["convs"]:
        h, p = gin_conv(h, adj_bf16, pool_bf16, *cp, tm=tm)
        partials.append(p)
    return head_xla(partials, kparams["head"])


# ---------------------------------------------------------------------------
# Parameter construction, BN folding and padding to TPU tiles
# ---------------------------------------------------------------------------
def make_conv_params(key, f_in, d_h):
    ks = jax.random.split(key, 8)
    s1 = 1.0 / jnp.sqrt(f_in)
    s2 = 1.0 / jnp.sqrt(d_h)
    return dict(
        w1=jax.random.uniform(ks[0], (f_in, d_h), jnp.float32, -s1, s1),
        b1=jax.random.uniform(ks[1], (1, d_h), jnp.float32, -s1, s1),
        gamma=1.0 + 0.1 * jax.random.normal(ks[2], (1, d_h), jnp.float32),
        beta=0.1 * jax.random.normal(ks[3], (1, d_h), jnp.float32),
        mean=0.1 * jax.random.normal(ks[4], (1, d_h), jnp.float32),
        var=1.0 + 0.1 * jax.random.uniform(ks[5], (1, d_h), jnp.float32),
        w2=jax.random.uniform(ks[6], (d_h, d_h), jnp.float32, -s2, s2),
        b2=jax.random.uniform(ks[7], (1, d_h), jnp.float32, -s2, s2),
    )


def make_params(key, in_channels, d_h, out_channels):
    k1, k2, k3, k4, k5, k6, k7 = jax.random.split(key, 7)
    sh = 1.0 / jnp.sqrt(3.0 * d_h)
    return dict(
        conv1=make_conv_params(k1, in_channels, d_h),
        conv2=make_conv_params(k2, d_h, d_h),
        conv3=make_conv_params(k3, d_h, d_h),
        head=dict(
            wl1=jax.random.uniform(k4, (3 * d_h, 3 * d_h), jnp.float32, -sh, sh),
            bl1=jax.random.uniform(k5, (1, 3 * d_h), jnp.float32, -sh, sh),
            wl2=jax.random.uniform(k6, (3 * d_h, out_channels), jnp.float32, -sh, sh),
            bl2=jax.random.uniform(k7, (1, out_channels), jnp.float32, -sh, sh),
        ),
    )


def fold_bn(w1, b1, gamma, beta, mean, var):
    """Fold eval-mode BatchNorm1d (running stats) into the preceding Linear."""
    scale = gamma * jax.lax.rsqrt(var + BN_EPS)          # (1, DH)
    return w1 * scale, (b1 - mean) * scale + beta


def prepare_kernel_params(params, dim_h, f_pad, dh_pad, hid_pad, out_pad):
    convs = []
    for name, fin_pad in (("conv1", f_pad), ("conv2", dh_pad), ("conv3", dh_pad)):
        p = params[name]
        w1f, b1f = fold_bn(p["w1"], p["b1"], p["gamma"], p["beta"], p["mean"], p["var"])
        convs.append((
            pad_to(w1f, (fin_pad, dh_pad)).astype(jnp.bfloat16),
            pad_to(b1f, (1, dh_pad)),
            pad_to(p["w2"], (dh_pad, dh_pad)).astype(jnp.bfloat16),
            pad_to(p["b2"], (1, dh_pad)),
        ))
    hp = params["head"]
    wl1 = hp["wl1"]
    head = (
        pad_to(wl1[0 * dim_h:1 * dim_h], (dh_pad, hid_pad)).astype(jnp.bfloat16),
        pad_to(wl1[1 * dim_h:2 * dim_h], (dh_pad, hid_pad)).astype(jnp.bfloat16),
        pad_to(wl1[2 * dim_h:3 * dim_h], (dh_pad, hid_pad)).astype(jnp.bfloat16),
        pad_to(hp["bl1"], (1, hid_pad)),
        pad_to(hp["wl2"], (hid_pad, out_pad)).astype(jnp.bfloat16),
        pad_to(hp["bl2"], (1, out_pad)),
    )
    return {"convs": convs, "head": head}


# ---------------------------------------------------------------------------
# Pure-JAX references
# ---------------------------------------------------------------------------
def ref_forward_f32(x, adj, pool, params):
    """Eval-mode module semantics in full f32 (BN running stats, Dropout=identity)."""
    def conv(xin, p):
        y = (1.0 + GIN_EPS) * xin + adj @ xin
        h = y @ p["w1"] + p["b1"]
        h = (h - p["mean"]) * jax.lax.rsqrt(p["var"] + BN_EPS) * p["gamma"] + p["beta"]
        h = jnp.maximum(h, 0.0)
        h = h @ p["w2"] + p["b2"]
        return jnp.maximum(h, 0.0)

    h1 = conv(x, params["conv1"])
    h2 = conv(h1, params["conv2"])
    h3 = conv(h2, params["conv3"])
    hp = params["head"]
    hcat = jnp.concatenate([pool @ h1, pool @ h2, pool @ h3], axis=1)
    hh = jnp.maximum(hcat @ hp["wl1"] + hp["bl1"], 0.0)
    return hh @ hp["wl2"] + hp["bl2"]


def ref_forward_bf16(x, adj, pool, params):
    """Same forward, mirroring the kernels' bf16/f32 mixed precision."""
    bf = lambda a: a.astype(jnp.bfloat16)
    adj_b, pool_b = bf(adj), bf(pool)
    xin = bf(x)
    pooled = []
    for name in ("conv1", "conv2", "conv3"):
        p = params[name]
        w1f, b1f = fold_bn(p["w1"], p["b1"], p["gamma"], p["beta"], p["mean"], p["var"])
        agg = jnp.dot(adj_b, xin, preferred_element_type=jnp.float32)
        y = agg + (1.0 + GIN_EPS) * xin.astype(jnp.float32)
        h = jnp.maximum(jnp.dot(bf(y), bf(w1f), preferred_element_type=jnp.float32) + b1f, 0.0)
        h = jnp.maximum(jnp.dot(bf(h), bf(p["w2"]), preferred_element_type=jnp.float32) + p["b2"], 0.0)
        xin = bf(h)
        pooled.append(jnp.dot(pool_b, xin, preferred_element_type=jnp.float32))
    hp = params["head"]
    pcat = bf(jnp.concatenate(pooled, axis=1))
    hh = jnp.maximum(jnp.dot(pcat, bf(hp["wl1"]), preferred_element_type=jnp.float32) + hp["bl1"], 0.0)
    return jnp.dot(bf(hh), bf(hp["wl2"]), preferred_element_type=jnp.float32) + hp["bl2"]


if __name__ == "__main__":
    key = jax.random.PRNGKey(0)
    kx, kp_key = jax.random.split(key)

    # logical model sizes (small, consistent with the module)
    N, IN_C, DIM_H, OUT_C, G = 16, 8, 32, 4, 2

    # TPU-padded sizes: 128 lanes, >=8 sublanes; N padded so the tiled fallback
    # path still runs a 2-step grid.
    TM = 256                                   # 256 fills the v6e/v7x MXU; use 128 on v5e
    N_PAD = max(round_up(N, TM), 2 * TM)
    F_PAD = round_up(IN_C, 128)
    DH_PAD = round_up(DIM_H, 128)
    HID_PAD = round_up(3 * DIM_H, 128)
    OUT_PAD = round_up(OUT_C, 128)
    G_PAD = max(round_up(G, 8), 8)

    # node features
    x = jax.random.normal(kx, (N, IN_C), jnp.float32)

    # deterministic ring edges per graph -> dense adjacency A[dst, src] = 1
    src, dst = [], []
    for g in range(G):
        base = g * (N // G)
        for i in range(N // G):
            s = base + i
            t = base + (i + 1) % (N // G)
            src += [s, t]
            dst += [t, s]
    adj = jnp.zeros((N, N), jnp.float32).at[jnp.array(dst), jnp.array(src)].set(1.0)

    # batch assignment -> one-hot pooling matrix P (G, N)
    batch = jnp.repeat(jnp.arange(G), N // G)
    pool = jax.nn.one_hot(batch, G, dtype=jnp.float32).T

    params = make_params(kp_key, IN_C, DIM_H, OUT_C)
    kparams = prepare_kernel_params(params, DIM_H, F_PAD, DH_PAD, HID_PAD, OUT_PAD)

    # bf16 kernel-domain inputs (0/1 adjacency and pooling matrices are exact in bf16)
    x_bf = pad_to(x, (N_PAD, F_PAD)).astype(jnp.bfloat16)
    adj_bf = pad_to(adj, (N_PAD, N_PAD)).astype(jnp.bfloat16)
    pool_bf = pad_to(pool, (G_PAD, N_PAD)).astype(jnp.bfloat16)

    # Invariant: padded COLUMNS of A and pool are zero, so garbage accumulated in
    # padded node rows (nonzero because biases are nonzero) never leaks into real
    # rows or pooled outputs.
    assert bool(jnp.all(adj_bf[:, N:] == 0)) and bool(jnp.all(pool_bf[:, N:] == 0))

    # primary fused path (A resident in VMEM) and tiled per-layer fallback path
    out_fused = simple_gin_forward(x_bf, adj_bf, pool_bf, kparams, tm=TM, fuse=True)
    out_tiled = simple_gin_forward(x_bf, adj_bf, pool_bf, kparams, tm=TM, fuse=False)
    jax.block_until_ready((out_fused, out_tiled))

    ref_b = ref_forward_bf16(x, adj, pool, params)     # mirrors kernel precision
    ref_f = ref_forward_f32(x, adj, pool, params)      # full-f32 module semantics

    for out_full in (out_fused, out_tiled):
        out = out_full[:G, :OUT_C]
        assert out.shape == (G, OUT_C)
        err = float(jnp.max(jnp.abs(out - ref_b)))
        assert err < 1e-2, f"kernel vs mixed-precision reference: max abs err {err}"
        rel = float(jnp.max(jnp.abs(out - ref_f) / (jnp.abs(ref_f) + 1.0)))
        assert rel < 0.25, f"kernel vs f32 module reference: max rel err {rel}"

    print("KERNEL_OK")
</pallas_src>

<mosaic_0001>
module attributes {stable_mosaic.version = 11 : i64} {
  func.func @gin_fused3_kernel(%arg0: i32, %arg1: memref<512x512xbf16, #tpu.memory_space<vmem>>, %arg2: memref<512x128xbf16, #tpu.memory_space<vmem>>, %arg3: memref<8x512xbf16, #tpu.memory_space<vmem>>, %arg4: memref<1x128x128xbf16, #tpu.memory_space<vmem>>, %arg5: memref<1x1x128xf32, #tpu.memory_space<vmem>>, %arg6: memref<1x128x128xbf16, #tpu.memory_space<vmem>>, %arg7: memref<1x1x128xf32, #tpu.memory_space<vmem>>, %arg8: memref<128x128xbf16, #tpu.memory_space<vmem>>, %arg9: memref<128x128xbf16, #tpu.memory_space<vmem>>, %arg10: memref<128x128xbf16, #tpu.memory_space<vmem>>, %arg11: memref<1x128xf32, #tpu.memory_space<vmem>>, %arg12: memref<128x128xbf16, #tpu.memory_space<vmem>>, %arg13: memref<1x128xf32, #tpu.memory_space<vmem>>, %arg14: memref<8x128xf32, #tpu.memory_space<vmem>>, %arg15: memref<512x128xbf16, #tpu.memory_space<vmem>>, %arg16: memref<8x128xf32, #tpu.memory_space<vmem>>, %arg17: memref<8x128xf32, #tpu.memory_space<vmem>>) attributes {dimension_semantics = [#tpu.dimension_semantics<arbitrary>], iteration_bounds = array<i64: 3>, scalar_prefetch = 0 : i64, scratch_operands = 3 : i64, tpu.core_type = #tpu.core_type<tc>, window_params = [{pipeline_mode = #tpu.pipeline_mode<synchronous>, transform_indices = @transform_0, window_bounds = array<i64: 512, 512>}, {pipeline_mode = #tpu.pipeline_mode<synchronous>, transform_indices = @transform_1, window_bounds = array<i64: 512, 128>}, {pipeline_mode = #tpu.pipeline_mode<synchronous>, transform_indices = @transform_2, window_bounds = array<i64: 8, 512>}, {transform_indices = @transform_3, window_bounds = array<i64: 1, 128, 128>}, {transform_indices = @transform_4, window_bounds = array<i64: 1, 1, 128>}, {transform_indices = @transform_5, window_bounds = array<i64: 1, 128, 128>}, {transform_indices = @transform_6, window_bounds = array<i64: 1, 1, 128>}, {pipeline_mode = #tpu.pipeline_mode<synchronous>, transform_indices = @transform_7, window_bounds = array<i64: 128, 128>}, {pipeline_mode = #tpu.pipeline_mode<synchronous>, transform_indices = @transform_8, window_bounds = array<i64: 128, 128>}, {pipeline_mode = #tpu.pipeline_mode<synchronous>, transform_indices = @transform_9, window_bounds = array<i64: 128, 128>}, {pipeline_mode = #tpu.pipeline_mode<synchronous>, transform_indices = @transform_10, window_bounds = array<i64: 1, 128>}, {pipeline_mode = #tpu.pipeline_mode<synchronous>, transform_indices = @transform_11, window_bounds = array<i64: 128, 128>}, {pipeline_mode = #tpu.pipeline_mode<synchronous>, transform_indices = @transform_12, window_bounds = array<i64: 1, 128>}, {pipeline_mode = #tpu.pipeline_mode<synchronous>, transform_indices = @transform_13, window_bounds = array<i64: 8, 128>}]} {
    %c0_i32 = arith.constant 0 : i32
    %0 = arith.cmpi eq, %arg0, %c0_i32 : i32
    %1 = arith.extui %0 : i1 to i32
    %c0_i32_0 = arith.constant 0 : i32
    %2 = arith.cmpi ne, %1, %c0_i32_0 : i32
    scf.if %2 {
      %c0_30 = arith.constant 0 : index
      %c0_31 = arith.constant 0 : index
      %43 = vector.load %arg2[%c0_30, %c0_31] : memref<512x128xbf16, #tpu.memory_space<vmem>>, vector<512x128xbf16>
      %c0_32 = arith.constant 0 : index
      %c0_33 = arith.constant 0 : index
      %44 = vector.load %arg15[%c0_32, %c0_33] : memref<512x128xbf16, #tpu.memory_space<vmem>>, vector<512x128xbf16>
      tpu.vector_store %arg15[%c0_32, %c0_33], %43 {strides = array<i32>} : memref<512x128xbf16, #tpu.memory_space<vmem>>, vector<512x128xbf16>,
    } else {
    }
    %c0 = arith.constant 0 : index
    %c0_1 = arith.constant 0 : index
    %3 = vector.load %arg15[%c0, %c0_1] : memref<512x128xbf16, #tpu.memory_space<vmem>>, vector<512x128xbf16>
    %c0_2 = arith.constant 0 : index
    %c0_3 = arith.constant 0 : index
    %4 = vector.load %arg1[%c0_2, %c0_3] : memref<512x512xbf16, #tpu.memory_space<vmem>>, vector<512x512xbf16>
    %cst = arith.constant dense<0.000000e+00> : vector<512x128xf32>
    %5 = tpu.matmul %4, %3, %cst {dimension_numbers = #tpu.dot_dimension_numbers<[1], [0], [0], [1], [0, 0, 1, 1], [], []>} : vector<512x512xbf16>, vector<512x128xbf16>, vector<512x128xf32> -> vector<512x128xf32>
    %6 = arith.extf %3 : vector<512x128xbf16> to vector<512x128xf32>
    %cst_4 = arith.constant 1.000000e+00 : f32
    %7 = vector.broadcast %cst_4 : f32 to vector<512x128xf32>
    %8 = arith.mulf %7, %6 : vector<512x128xf32>
    %9 = arith.addf %5, %8 : vector<512x128xf32>
    %10 = arith.truncf %9 : vector<512x128xf32> to vector<512x128xbf16>
    %c0_5 = arith.constant 0 : index
    %c0_6 = arith.constant 0 : index
    %c0_7 = arith.constant 0 : index
    %11 = vector.load %arg4[%c0_5, %c0_6, %c0_7] : memref<1x128x128xbf16, #tpu.memory_space<vmem>>, vector<1x128x128xbf16>
    %12 = vector.shape_cast %11 : vector<1x128x128xbf16> to vector<128x128xbf16>
    %cst_8 = arith.constant dense<0.000000e+00> : vector<512x128xf32>
    %13 = tpu.matmul %10, %12, %cst_8 {dimension_numbers = #tpu.dot_dimension_numbers<[1], [0], [0], [1], [0, 0, 1, 1], [], []>} : vector<512x128xbf16>, vector<128x128xbf16>, vector<512x128xf32> -> vector<512x128xf32>
    %c0_9 = arith.constant 0 : index
    %c0_10 = arith.constant 0 : index
    %c0_11 = arith.constant 0 : index
    %14 = vector.load %arg5[%c0_9, %c0_10, %c0_11] : memref<1x1x128xf32, #tpu.memory_space<vmem>>, vector<1x1x128xf32>
    %15 = vector.shape_cast %14 : vector<1x1x128xf32> to vector<1x128xf32>
    %16 = vector.broadcast %15 : vector<1x128xf32> to vector<512x128xf32>
    %17 = arith.addf %13, %16 : vector<512x128xf32>
    %cst_12 = arith.constant 0.000000e+00 : f32
    %18 = vector.broadcast %cst_12 : f32 to vector<512x128xf32>
    %19 = arith.maximumf %17, %18 : vector<512x128xf32>
    %20 = arith.truncf %19 : vector<512x128xf32> to vector<512x128xbf16>
    %c0_13 = arith.constant 0 : index
    %c0_14 = arith.constant 0 : index
    %c0_15 = arith.constant 0 : index
    %21 = vector.load %arg6[%c0_13, %c0_14, %c0_15] : memref<1x128x128xbf16, #tpu.memory_space<vmem>>, vector<1x128x128xbf16>
    %22 = vector.shape_cast %21 : vector<1x128x128xbf16> to vector<128x128xbf16>
    %cst_16 = arith.constant dense<0.000000e+00> : vector<512x128xf32>
    %23 = tpu.matmul %20, %22, %cst_16 {dimension_numbers = #tpu.dot_dimension_numbers<[1], [0], [0], [1], [0, 0, 1, 1], [], []>} : vector<512x128xbf16>, vector<128x128xbf16>, vector<512x128xf32> -> vector<512x128xf32>
    %c0_17 = arith.constant 0 : index
    %c0_18 = arith.constant 0 : index
    %c0_19 = arith.constant 0 : index
    %24 = vector.load %arg7[%c0_17, %c0_18, %c0_19] : memref<1x1x128xf32, #tpu.memory_space<vmem>>, vector<1x1x128xf32>
    %25 = vector.shape_cast %24 : vector<1x1x128xf32> to vector<1x128xf32>
    %26 = vector.broadcast %25 : vector<1x128xf32> to vector<512x128xf32>
    %27 = arith.addf %23, %26 : vector<512x128xf32>
    %cst_20 = arith.constant 0.000000e+00 : f32
    %28 = vector.broadcast %cst_20 : f32 to vector<512x128xf32>
    %29 = arith.maximumf %27, %28 : vector<512x128xf32>
    %30 = arith.truncf %29 : vector<512x128xf32> to vector<512x128xbf16>
    %c0_21 = arith.constant 0 : index
    %c0_22 = arith.constant 0 : index
    %31 = vector.load %arg15[%c0_21, %c0_22] : memref<512x128xbf16, #tpu.memory_space<vmem>>, vector<512x128xbf16>
    tpu.vector_store %arg15[%c0_21, %c0_22], %30 {strides = array<i32>} : memref<512x128xbf16, #tpu.memory_space<vmem>>, vector<512x128xbf16>,
    %c0_23 = arith.constant 0 : index
    %c0_24 = arith.constant 0 : index
    %32 = vector.load %arg3[%c0_23, %c0_24] : memref<8x512xbf16, #tpu.memory_space<vmem>>, vector<8x512xbf16>
    %cst_25 = arith.constant dense<0.000000e+00> : vector<8x128xf32>
    %33 = tpu.matmul %32, %30, %cst_25 {dimension_numbers = #tpu.dot_dimension_numbers<[1], [0], [0], [1], [0, 0, 1, 1], [], []>} : vector<8x512xbf16>, vector<512x128xbf16>, vector<8x128xf32> -> vector<8x128xf32>
    %c0_i32_26 = arith.constant 0 : i32
    %34 = arith.cmpi eq, %arg0, %c0_i32_26 : i32
    %35 = arith.extui %34 : i1 to i32
    %c0_i32_27 = arith.constant 0 : i32
    %36 = arith.cmpi ne, %35, %c0_i32_27 : i32
    scf.if %36 {
      %c0_30 = arith.constant 0 : index
      %c0_31 = arith.constant 0 : index
      %43 = vector.load %arg16[%c0_30, %c0_31] : memref<8x128xf32, #tpu.memory_space<vmem>>, vector<8x128xf32>
      tpu.vector_store %arg16[%c0_30, %c0_31], %33 {strides = array<i32>} : memref<8x128xf32, #tpu.memory_space<vmem>>, vector<8x128xf32>,
    } else {
    }
    %c1_i32 = arith.constant 1 : i32
    %37 = arith.cmpi eq, %arg0, %c1_i32 : i32
    %38 = arith.extui %37 : i1 to i32
    %c0_i32_28 = arith.constant 0 : i32
    %39 = arith.cmpi ne, %38, %c0_i32_28 : i32
    scf.if %39 {
      %c0_30 = arith.constant 0 : index
      %c0_31 = arith.constant 0 : index
      %43 = vector.load %arg17[%c0_30, %c0_31] : memref<8x128xf32, #tpu.memory_space<vmem>>, vector<8x128xf32>
      tpu.vector_store %arg17[%c0_30, %c0_31], %33 {strides = array<i32>} : memref<8x128xf32, #tpu.memory_space<vmem>>, vector<8x128xf32>,
    } else {
    }
    %c2_i32 = arith.constant 2 : i32
    %40 = arith.cmpi eq, %arg0, %c2_i32 : i32
    %41 = arith.extui %40 : i1 to i32
    %c0_i32_29 = arith.constant 0 : i32
    %42 = arith.cmpi ne, %41, %c0_i32_29 : i32
    scf.if %42 {
      %c0_30 = arith.constant 0 : index
      %c0_31 = arith.constant 0 : index
      %43 = vector.load %arg16[%c0_30, %c0_31] : memref<8x128xf32, #tpu.memory_space<vmem>>, vector<8x128xf32>
      %44 = arith.truncf %43 : vector<8x128xf32> to vector<8x128xbf16>
      %c0_32 = arith.constant 0 : index
      %c0_33 = arith.constant 0 : index
      %45 = vector.load %arg8[%c0_32, %c0_33] : memref<128x128xbf16, #tpu.memory_space<vmem>>, vector<128x128xbf16>
      %cst_34 = arith.constant dense<0.000000e+00> : vector<8x128xf32>
      %46 = tpu.matmul %44, %45, %cst_34 {dimension_numbers = #tpu.dot_dimension_numbers<[1], [0], [0], [1], [0, 0, 1, 1], [], []>} : vector<8x128xbf16>, vector<128x128xbf16>, vector<8x128xf32> -> vector<8x128xf32>
      %c0_35 = arith.constant 0 : index
      %c0_36 = arith.constant 0 : index
      %47 = vector.load %arg17[%c0_35, %c0_36] : memref<8x128xf32, #tpu.memory_space<vmem>>, vector<8x128xf32>
      %48 = arith.truncf %47 : vector<8x128xf32> to vector<8x128xbf16>
      %c0_37 = arith.constant 0 : index
      %c0_38 = arith.constant 0 : index
      %49 = vector.load %arg9[%c0_37, %c0_38] : memref<128x128xbf16, #tpu.memory_space<vmem>>, vector<128x128xbf16>
      %cst_39 = arith.constant dense<0.000000e+00> : vector<8x128xf32>
      %50 = tpu.matmul %48, %49, %cst_39 {dimension_numbers = #tpu.dot_dimension_numbers<[1], [0], [0], [1], [0, 0, 1, 1], [], []>} : vector<8x128xbf16>, vector<128x128xbf16>, vector<8x128xf32> -> vector<8x128xf32>
      %51 = arith.addf %46, %50 : vector<8x128xf32>
      %52 = arith.truncf %33 : vector<8x128xf32> to vector<8x128xbf16>
      %c0_40 = arith.constant 0 : index
      %c0_41 = arith.constant 0 : index
      %53 = vector.load %arg10[%c0_40, %c0_41] : memref<128x128xbf16, #tpu.memory_space<vmem>>, vector<128x128xbf16>
      %cst_42 = arith.constant dense<0.000000e+00> : vector<8x128xf32>
      %54 = tpu.matmul %52, %53, %cst_42 {dimension_numbers = #tpu.dot_dimension_numbers<[1], [0], [0], [1], [0, 0, 1, 1], [], []>} : vector<8x128xbf16>, vector<128x128xbf16>, vector<8x128xf32> -> vector<8x128xf32>
      %55 = arith.addf %51, %54 : vector<8x128xf32>
      %c0_43 = arith.constant 0 : index
      %c0_44 = arith.constant 0 : index
      %56 = vector.load %arg11[%c0_43, %c0_44] : memref<1x128xf32, #tpu.memory_space<vmem>>, vector<1x128xf32>
      %57 = vector.broadcast %56 : vector<1x128xf32> to vector<8x128xf32>
      %58 = arith.addf %55, %57 : vector<8x128xf32>
      %cst_45 = arith.constant 0.000000e+00 : f32
      %59 = vector.broadcast %cst_45 : f32 to vector<8x128xf32>
      %60 = arith.maximumf %58, %59 : vector<8x128xf32>
      %61 = arith.truncf %60 : vector<8x128xf32> to vector<8x128xbf16>
      %c0_46 = arith.constant 0 : index
      %c0_47 = arith.constant 0 : index
      %62 = vector.load %arg12[%c0_46, %c0_47] : memref<128x128xbf16, #tpu.memory_space<vmem>>, vector<128x128xbf16>
      %cst_48 = arith.constant dense<0.000000e+00> : vector<8x128xf32>
      %63 = tpu.matmul %61, %62, %cst_48 {dimension_numbers = #tpu.dot_dimension_numbers<[1], [0], [0], [1], [0, 0, 1, 1], [], []>} : vector<8x128xbf16>, vector<128x128xbf16>, vector<8x128xf32> -> vector<8x128xf32>
      %c0_49 = arith.constant 0 : index
      %c0_50 = arith.constant 0 : index
      %64 = vector.load %arg13[%c0_49, %c0_50] : memref<1x128xf32, #tpu.memory_space<vmem>>, vector<1x128xf32>
      %65 = vector.broadcast %64 : vector<1x128xf32> to vector<8x128xf32>
      %66 = arith.addf %63, %65 : vector<8x128xf32>
      %c0_51 = arith.constant 0 : index
      %c0_52 = arith.constant 0 : index
      %67 = vector.load %arg14[%c0_51, %c0_52] : memref<8x128xf32, #tpu.memory_space<vmem>>, vector<8x128xf32>
      tpu.vector_store %arg14[%c0_51, %c0_52], %66 {strides = array<i32>} : memref<8x128xf32, #tpu.memory_space<vmem>>, vector<8x128xf32>,
    } else {
    }
    return
  }
  func.func @transform_0(%arg0: i32) -> (i32, i32) {
    %c0_i32 = arith.constant 0 : i32
    %c0_i32_0 = arith.constant 0 : i32
    %c0_i32_1 = arith.constant 0 : i32
    return %c0_i32, %c0_i32_0 : i32, i32
  }
  func.func @transform_1(%arg0: i32) -> (i32, i32) {
    %c0_i32 = arith.constant 0 : i32
    %c0_i32_0 = arith.constant 0 : i32
    %c0_i32_1 = arith.constant 0 : i32
    return %c0_i32, %c0_i32_0 : i32, i32
  }
  func.func @transform_2(%arg0: i32) -> (i32, i32) {
    %c0_i32 = arith.constant 0 : i32
    %c0_i32_0 = arith.constant 0 : i32
    %c0_i32_1 = arith.constant 0 : i32
    return %c0_i32, %c0_i32_0 : i32, i32
  }
  func.func @transform_3(%arg0: i32) -> (i32, i32, i32) {
    %c0_i32 = arith.constant 0 : i32
    %c0_i32_0 = arith.constant 0 : i32
    %c0_i32_1 = arith.constant 0 : i32
    return %arg0, %c0_i32, %c0_i32_0 : i32, i32, i32
  }
  func.func @transform_4(%arg0: i32) -> (i32, i32, i32) {
    %c0_i32 = arith.constant 0 : i32
    %c0_i32_0 = arith.constant 0 : i32
    %c0_i32_1 = arith.constant 0 : i32
    return %arg0, %c0_i32, %c0_i32_0 : i32, i32, i32
  }
  func.func @transform_5(%arg0: i32) -> (i32, i32, i32) {
    %c0_i32 = arith.constant 0 : i32
    %c0_i32_0 = arith.constant 0 : i32
    %c0_i32_1 = arith.constant 0 : i32
    return %arg0, %c0_i32, %c0_i32_0 : i32, i32, i32
  }
  func.func @transform_6(%arg0: i32) -> (i32, i32, i32) {
    %c0_i32 = arith.constant 0 : i32
    %c0_i32_0 = arith.constant 0 : i32
    %c0_i32_1 = arith.constant 0 : i32
    return %arg0, %c0_i32, %c0_i32_0 : i32, i32, i32
  }
  func.func @transform_7(%arg0: i32) -> (i32, i32) {
    %c0_i32 = arith.constant 0 : i32
    %c0_i32_0 = arith.constant 0 : i32
    %c0_i32_1 = arith.constant 0 : i32
    return %c0_i32, %c0_i32_0 : i32, i32
  }
  func.func @transform_8(%arg0: i32) -> (i32, i32) {
    %c0_i32 = arith.constant 0 : i32
    %c0_i32_0 = arith.constant 0 : i32
    %c0_i32_1 = arith.constant 0 : i32
    return %c0_i32, %c0_i32_0 : i32, i32
  }
  func.func @transform_9(%arg0: i32) -> (i32, i32) {
    %c0_i32 = arith.constant 0 : i32
    %c0_i32_0 = arith.constant 0 : i32
    %c0_i32_1 = arith.constant 0 : i32
    return %c0_i32, %c0_i32_0 : i32, i32
  }
  func.func @transform_10(%arg0: i32) -> (i32, i32) {
    %c0_i32 = arith.constant 0 : i32
    %c0_i32_0 = arith.constant 0 : i32
    %c0_i32_1 = arith.constant 0 : i32
    return %c0_i32, %c0_i32_0 : i32, i32
  }
  func.func @transform_11(%arg0: i32) -> (i32, i32) {
    %c0_i32 = arith.constant 0 : i32
    %c0_i32_0 = arith.constant 0 : i32
    %c0_i32_1 = arith.constant 0 : i32
    return %c0_i32, %c0_i32_0 : i32, i32
  }
  func.func @transform_12(%arg0: i32) -> (i32, i32) {
    %c0_i32 = arith.constant 0 : i32
    %c0_i32_0 = arith.constant 0 : i32
    %c0_i32_1 = arith.constant 0 : i32
    return %c0_i32, %c0_i32_0 : i32, i32
  }
  func.func @transform_13(%arg0: i32) -> (i32, i32) {
    %c0_i32 = arith.constant 0 : i32
    %c0_i32_0 = arith.constant 0 : i32
    %c0_i32_1 = arith.constant 0 : i32
    return %c0_i32, %c0_i32_0 : i32, i32
  }
}

</mosaic_0001>

<llo_original>
// kernel: tpu_custom_call.1
$region0: #{tpu_custom_call.1}
  #allocation0 [shape = 'u32[]', space=smem, size = 0x4, offset = 0x4, fixed_abs, tag = 'smem constant byte address 0x4 - core index']
  #allocation1 [shape = 'u32[144,128]{1,0:T(1,128)}', space=vmem, size = 0x12000, scoped, tag = 'internal scratch']
  #allocation2 [shape = 'bf16[512,128]{1,0:T(16,128)(2,1)}', space=vmem, size = 0x20000, scoped, tag = 'scratch operand']
  #allocation3 [shape = 'f32[8,128]{1,0:T(8,128)}', space=vmem, size = 0x1000, scoped, tag = 'scratch operand']
  #allocation4 [shape = 'f32[8,128]{1,0:T(8,128)}', space=vmem, size = 0x1000, scoped, tag = 'scratch operand']
  %s0 = inlined_call_operand.hbm [shape: bf16[512,512], index: 0, kind: input, shape index: {}]
  %s1 = inlined_call_operand.hbm [shape: bf16[512,128], index: 1, kind: input, shape index: {}]
  %s2 = inlined_call_operand.hbm [shape: bf16[8,512], index: 2, kind: input, shape index: {}]
  %s3 = inlined_call_operand.hbm [shape: bf16[3,128,128], index: 3, kind: input, shape index: {}]
  %s4 = inlined_call_operand.vmem [shape: f32[3,1,128], index: 4, kind: input, shape index: {}]
  %s5 = inlined_call_operand.hbm [shape: bf16[3,128,128], index: 5, kind: input, shape index: {}]
  %s6 = inlined_call_operand.vmem [shape: f32[3,1,128], index: 6, kind: input, shape index: {}]
  %s7 = inlined_call_operand.hbm [shape: bf16[128,128], index: 7, kind: input, shape index: {}]
  %s8 = inlined_call_operand.hbm [shape: bf16[128,128], index: 8, kind: input, shape index: {}]
  %s9 = inlined_call_operand.hbm [shape: bf16[128,128], index: 9, kind: input, shape index: {}]
  %s10 = inlined_call_operand.vmem [shape: f32[1,128], index: 10, kind: input, shape index: {}]
  %s11 = inlined_call_operand.hbm [shape: bf16[128,128], index: 11, kind: input, shape index: {}]
  %s12 = inlined_call_operand.vmem [shape: f32[1,128], index: 12, kind: input, shape index: {}]
  %s13 = inlined_call_operand.hbm [shape: f32[8,128], index: 13, kind: output, shape index: {}]
  %s14 = sld [smem:[#allocation0]]
  $region137: #{tpu_custom_call.1} parent=0
    _
  %s16 = ssub.s32 1, %s14
  %s17 = scalar_select 0, %s16, %s14
  $region1: #{tpu_custom_call.1} parent=0
    #allocation5 [shape = 'u8[524288]{0}', space=vmem, size = 0x80000, scoped, tag = 'input window, operand 0, single buffered']
    #allocation6 [shape = 's32[2]{0}', space=sflag, size = 0x8, scoped, tag = 'scoped memory for tpu_custom_call.1']
    #allocation7 [shape = 's32[2]{0}', space=sflag, size = 0x8, scoped, tag = 'scoped memory for tpu_custom_call.1']
    #allocation8 [shape = 'u8[131072]{0}', space=vmem, size = 0x20000, scoped, tag = 'input window, operand 1, single buffered']
    #allocation9 [shape = 's32[1]{0}', space=sflag, size = 0x4, scoped, tag = 'scoped memory for tpu_custom_call.1']
    #allocation10 [shape = 'u8[8192]{0}', space=vmem, size = 0x2000, scoped, tag = 'input window, operand 2, single buffered']
    #allocation11 [shape = 'u8[65536]{0}', space=vmem, size = 0x10000, scoped, tag = 'input window, operand 3']
    #allocation12 [shape = 's32[2]{0}', space=sflag, size = 0x8, scoped, tag = 'scoped memory for tpu_custom_call.1']
    #allocation13 [shape = 'u8[65536]{0}', space=vmem, size = 0x10000, scoped, tag = 'input window, operand 5']
    #allocation14 [shape = 'u8[32768]{0}', space=vmem, size = 0x8000, scoped, tag = 'input window, operand 7, single buffered']
    #allocation15 [shape = 's32[1]{0}', space=sflag, size = 0x4, scoped, tag = 'scoped memory for tpu_custom_call.1']
    #allocation16 [shape = 'u8[32768]{0}', space=vmem, size = 0x8000, scoped, tag = 'input window, operand 8, single buffered']
    #allocation17 [shape = 'u8[32768]{0}', space=vmem, size = 0x8000, scoped, tag = 'input window, operand 9, single buffered']
    #allocation18 [shape = 's32[1]{0}', space=sflag, size = 0x4, scoped, tag = 'scoped memory for tpu_custom_call.1']
    #allocation19 [shape = 'u8[32768]{0}', space=vmem, size = 0x8000, scoped, tag = 'input window, operand 11, single buffered']
    #allocation20 [shape = 'u8[4096]{0}', space=vmem, size = 0x1000, scoped, tag = 'output window, operand 0, single buffered']
    %18 = vsyncpa [#allocation6], 0
    %19 = vsyncpa [#allocation9], 0
    %20 = vsyncpa [#allocation12], 0
    %s21 = scalar_lea.sflag [#allocation12], 1
    %22 = vsyncpa %s21, 0
    %23 = vsyncpa [#allocation15], 0
    %24 = vsyncpa [#allocation18], 0
    %25 = vsyncpa [#allocation7], 0
    loop: start=0, step=1, limit=5
    $region2: #{tpu_custom_call.1} parent=1 // loop_pre_header
      _
    $region3: #{tpu_custom_call.1} parent=1 // loop_header
      %s27 = sphi 0, %s31
      %p28 = scmp.ge.s32.totalorder %s27, 5
      %s35 = sphi 0, %s35
      %s37 = sphi 0, %s35
      %s38 = sphi 0, %s37
      %s52 = sphi 0, %s38
      %s56 = sphi 0, %s56
      %s58 = sphi 0, %s56
      %s59 = sphi 0, %s58
      %s73 = sphi 0, %s59
      %s77 = sphi 0, %s77
      %s79 = sphi 0, %s77
      %s80 = sphi 0, %s79
      %s94 = sphi 0, %s80
      %s100 = sphi 0, %s102
      %s103 = sphi 0, %s100
      %s104 = sphi 0, %s103
      %s120 = sphi 0, %s104
      %s126 = sphi 0, %s128
      %s129 = sphi 0, %s126
      %s130 = sphi 0, %s129
      %s146 = sphi 0, %s130
      %s152 = sphi 0, %s154
      %s155 = sphi 0, %s152
      %s156 = sphi 0, %s155
      %s172 = sphi 0, %s156
      %s178 = sphi 0, %s180
      %s181 = sphi 0, %s178
      %s182 = sphi 0, %s181
      %s198 = sphi 0, %s182
      %s202 = sphi 0, %s202
      %s204 = sphi 0, %s202
      %s205 = sphi 0, %s204
      %s219 = sphi 0, %s205
      %s223 = sphi 0, %s223
      %s225 = sphi 0, %s223
      %s226 = sphi 0, %s225
      %s240 = sphi 0, %s226
      %s244 = sphi 0, %s244
      %s246 = sphi 0, %s244
      %s247 = sphi 0, %s246
      %s261 = sphi 0, %s247
      %s265 = sphi 0, %s265
      %s267 = sphi 0, %s265
      %s268 = sphi 0, %s267
      %s282 = sphi 0, %s268
      %s286 = sphi 0, %s286
      %s288 = sphi 0, %s286
      %s289 = sphi 0, %s288
      %s303 = sphi 0, %s289
      %s307 = sphi 0, %s307
      %s309 = sphi 0, %s307
      %s310 = sphi 0, %s309
      %s324 = sphi 0, %s310
      %s328 = sphi 0, %s328
      %s330 = sphi 0, %s328
      %s331 = sphi 0, %s330
      %s345 = sphi 0, %s331
    $region4: #{tpu_custom_call.1} parent=1 // loop_header_branch
      %30 = sbr.rel (%p28) target = $region8
    $region5: #{tpu_custom_call.1} parent=1 // loop_body
      %s32 = ssub.s32 %s27, 1
      %s33 = ssub.s32 %s27, 2
      %s34 = sadd.s32 %s27, 1
      %s36 = sadd.s32 %s35, 1
      %p39 = scmp.eq.s32.totalorder %s27, 2
      %p40 = scmp.ne.s32.totalorder %s35, %s37
      %p41 = scmp.eq.s32.totalorder %s27, 0
      %p42 = por %p40, %p41
      %p43 = scmp.ne.s32.totalorder %s35, %s37
      %p44 = scmp.eq.s32.totalorder %s32, 2
      %p45 = por %p43, %p44
      %p46 = scmp.ne.s32.totalorder %s37, %s38
      %p47 = scmp.eq.s32.totalorder %s32, 0
      %p48 = por %p46, %p47
      %p49 = scmp.ne.s32.totalorder %s37, %s38
      %p50 = scmp.eq.s32.totalorder %s33, 2
      %p51 = por %p49, %p50
      %p53 = scmp.ne.s32.totalorder %s38, %s52
      %p54 = scmp.eq.s32.totalorder %s33, 0
      %p55 = por %p53, %p54
      %s57 = sadd.s32 %s56, 1
      %p60 = scmp.eq.s32.totalorder %s27, 2
      %p61 = scmp.ne.s32.totalorder %s56, %s58
      %p62 = scmp.eq.s32.totalorder %s27, 0
      %p63 = por %p61, %p62
      %p64 = scmp.ne.s32.totalorder %s56, %s58
      %p65 = scmp.eq.s32.totalorder %s32, 2
      %p66 = por %p64, %p65
      %p67 = scmp.ne.s32.totalorder %s58, %s59
      %p68 = scmp.eq.s32.totalorder %s32, 0
      %p69 = por %p67, %p68
      %p70 = scmp.ne.s32.totalorder %s58, %s59
      %p71 = scmp.eq.s32.totalorder %s33, 2
      %p72 = por %p70, %p71
      %p74 = scmp.ne.s32.totalorder %s59, %s73
      %p75 = scmp.eq.s32.totalorder %s33, 0
      %p76 = por %p74, %p75
      %s78 = sadd.s32 %s77, 1
      %p81 = scmp.eq.s32.totalorder %s27, 2
      %p82 = scmp.ne.s32.totalorder %s77, %s79
      %p83 = scmp.eq.s32.totalorder %s27, 0
      %p84 = por %p82, %p83
      %p85 = scmp.ne.s32.totalorder %s77, %s79
      %p86 = scmp.eq.s32.totalorder %s32, 2
      %p87 = por %p85, %p86
      %p88 = scmp.ne.s32.totalorder %s79, %s80
      %p89 = scmp.eq.s32.totalorder %s32, 0
      %p90 = por %p88, %p89
      %p91 = scmp.ne.s32.totalorder %s79, %s80
      %p92 = scmp.eq.s32.totalorder %s33, 2
      %p93 = por %p91, %p92
      %p95 = scmp.ne.s32.totalorder %s80, %s94
      %p96 = scmp.eq.s32.totalorder %s33, 0
      %p97 = por %p95, %p96
      %s98 = ssub.s32 %s27, %s34
      %p99 = scmp.eq.s32.totalorder %s98, 0
      %s101 = sadd.s32 %s100, 1
      %s102 = scalar_select %p99, %s100, %s101
      %p105 = pneg %p99
      %p106 = scmp.eq.s32.totalorder %s27, 2
      %p107 = por %p105, %p106
      %p108 = scmp.ne.s32.totalorder %s100, %s103
      %p109 = scmp.eq.s32.totalorder %s27, 0
      %p110 = por %p108, %p109
      %p111 = scmp.ne.s32.totalorder %s100, %s103
      %p112 = scmp.eq.s32.totalorder %s32, 2
      %p113 = por %p111, %p112
      %p114 = scmp.ne.s32.totalorder %s103, %s104
      %p115 = scmp.eq.s32.totalorder %s32, 0
      %p116 = por %p114, %p115
      %p117 = scmp.ne.s32.totalorder %s103, %s104
      %p118 = scmp.eq.s32.totalorder %s33, 2
      %p119 = por %p117, %p118
      %p121 = scmp.ne.s32.totalorder %s104, %s120
      %p122 = scmp.eq.s32.totalorder %s33, 0
      %p123 = por %p121, %p122
      %s124 = ssub.s32 %s27, %s34
      %p125 = scmp.eq.s32.totalorder %s124, 0
      %s127 = sadd.s32 %s126, 1
      %s128 = scalar_select %p125, %s126, %s127
      %p131 = pneg %p125
      %p132 = scmp.eq.s32.totalorder %s27, 2
      %p133 = por %p131, %p132
      %p134 = scmp.ne.s32.totalorder %s126, %s129
      %p135 = scmp.eq.s32.totalorder %s27, 0
      %p136 = por %p134, %p135
      %p137 = scmp.ne.s32.totalorder %s126, %s129
      %p138 = scmp.eq.s32.totalorder %s32, 2
      %p139 = por %p137, %p138
      %p140 = scmp.ne.s32.totalorder %s129, %s130
      %p141 = scmp.eq.s32.totalorder %s32, 0
      %p142 = por %p140, %p141
      %p143 = scmp.ne.s32.totalorder %s129, %s130
      %p144 = scmp.eq.s32.totalorder %s33, 2
      %p145 = por %p143, %p144
      %p147 = scmp.ne.s32.totalorder %s130, %s146
      %p148 = scmp.eq.s32.totalorder %s33, 0
      %p149 = por %p147, %p148
      %s150 = ssub.s32 %s27, %s34
      %p151 = scmp.eq.s32.totalorder %s150, 0
      %s153 = sadd.s32 %s152, 1
      %s154 = scalar_select %p151, %s152, %s153
      %p157 = pneg %p151
      %p158 = scmp.eq.s32.totalorder %s27, 2
      %p159 = por %p157, %p158
      %p160 = scmp.ne.s32.totalorder %s152, %s155
      %p161 = scmp.eq.s32.totalorder %s27, 0
      %p162 = por %p160, %p161
      %p163 = scmp.ne.s32.totalorder %s152, %s155
      %p164 = scmp.eq.s32.totalorder %s32, 2
      %p165 = por %p163, %p164
      %p166 = scmp.ne.s32.totalorder %s155, %s156
      %p167 = scmp.eq.s32.totalorder %s32, 0
      %p168 = por %p166, %p167
      %p169 = scmp.ne.s32.totalorder %s155, %s156
      %p170 = scmp.eq.s32.totalorder %s33, 2
      %p171 = por %p169, %p170
      %p173 = scmp.ne.s32.totalorder %s156, %s172
      %p174 = scmp.eq.s32.totalorder %s33, 0
      %p175 = por %p173, %p174
      %s176 = ssub.s32 %s27, %s34
      %p177 = scmp.eq.s32.totalorder %s176, 0
      %s179 = sadd.s32 %s178, 1
      %s180 = scalar_select %p177, %s178, %s179
      %p183 = pneg %p177
      %p184 = scmp.eq.s32.totalorder %s27, 2
      %p185 = por %p183, %p184
      %p186 = scmp.ne.s32.totalorder %s178, %s181
      %p187 = scmp.eq.s32.totalorder %s27, 0
      %p188 = por %p186, %p187
      %p189 = scmp.ne.s32.totalorder %s178, %s181
      %p190 = scmp.eq.s32.totalorder %s32, 2
      %p191 = por %p189, %p190
      %p192 = scmp.ne.s32.totalorder %s181, %s182
      %p193 = scmp.eq.s32.totalorder %s32, 0
      %p194 = por %p192, %p193
      %p195 = scmp.ne.s32.totalorder %s181, %s182
      %p196 = scmp.eq.s32.totalorder %s33, 2
      %p197 = por %p195, %p196
      %p199 = scmp.ne.s32.totalorder %s182, %s198
      %p200 = scmp.eq.s32.totalorder %s33, 0
      %p201 = por %p199, %p200
      %s203 = sadd.s32 %s202, 1
      %p206 = scmp.eq.s32.totalorder %s27, 2
      %p207 = scmp.ne.s32.totalorder %s202, %s204
      %p208 = scmp.eq.s32.totalorder %s27, 0
      %p209 = por %p207, %p208
      %p210 = scmp.ne.s32.totalorder %s202, %s204
      %p211 = scmp.eq.s32.totalorder %s32, 2
      %p212 = por %p210, %p211
      %p213 = scmp.ne.s32.totalorder %s204, %s205
      %p214 = scmp.eq.s32.totalorder %s32, 0
      %p215 = por %p213, %p214
      %p216 = scmp.ne.s32.totalorder %s204, %s205
      %p217 = scmp.eq.s32.totalorder %s33, 2
      %p218 = por %p216, %p217
      %p220 = scmp.ne.s32.totalorder %s205, %s219
      %p221 = scmp.eq.s32.totalorder %s33, 0
      %p222 = por %p220, %p221
      %s224 = sadd.s32 %s223, 1
      %p227 = scmp.eq.s32.totalorder %s27, 2
      %p228 = scmp.ne.s32.totalorder %s223, %s225
      %p229 = scmp.eq.s32.totalorder %s27, 0
      %p230 = por %p228, %p229
      %p231 = scmp.ne.s32.totalorder %s223, %s225
      %p232 = scmp.eq.s32.totalorder %s32, 2
      %p233 = por %p231, %p232
      %p234 = scmp.ne.s32.totalorder %s225, %s226
      %p235 = scmp.eq.s32.totalorder %s32, 0
      %p236 = por %p234, %p235
      %p237 = scmp.ne.s32.totalorder %s225, %s226
      %p238 = scmp.eq.s32.totalorder %s33, 2
      %p239 = por %p237, %p238
      %p241 = scmp.ne.s32.totalorder %s226, %s240
      %p242 = scmp.eq.s32.totalorder %s33, 0
      %p243 = por %p241, %p242
      %s245 = sadd.s32 %s244, 1
      %p248 = scmp.eq.s32.totalorder %s27, 2
      %p249 = scmp.ne.s32.totalorder %s244, %s246
      %p250 = scmp.eq.s32.totalorder %s27, 0
      %p251 = por %p249, %p250
      %p252 = scmp.ne.s32.totalorder %s244, %s246
      %p253 = scmp.eq.s32.totalorder %s32, 2
      %p254 = por %p252, %p253
      %p255 = scmp.ne.s32.totalorder %s246, %s247
      %p256 = scmp.eq.s32.totalorder %s32, 0
      %p257 = por %p255, %p256
      %p258 = scmp.ne.s32.totalorder %s246, %s247
      %p259 = scmp.eq.s32.totalorder %s33, 2
      %p260 = por %p258, %p259
      %p262 = scmp.ne.s32.totalorder %s247, %s261
      %p263 = scmp.eq.s32.totalorder %s33, 0
      %p264 = por %p262, %p263
      %s266 = sadd.s32 %s265, 1
      %p269 = scmp.eq.s32.totalorder %s27, 2
      %p270 = scmp.ne.s32.totalorder %s265, %s267
      %p271 = scmp.eq.s32.totalorder %s27, 0
      %p272 = por %p270, %p271
      %p273 = scmp.ne.s32.totalorder %s265, %s267
      %p274 = scmp.eq.s32.totalorder %s32, 2
      %p275 = por %p273, %p274
      %p276 = scmp.ne.s32.totalorder %s267, %s268
      %p277 = scmp.eq.s32.totalorder %s32, 0
      %p278 = por %p276, %p277
      %p279 = scmp.ne.s32.totalorder %s267, %s268
      %p280 = scmp.eq.s32.totalorder %s33, 2
      %p281 = por %p279, %p280
      %p283 = scmp.ne.s32.totalorder %s268, %s282
      %p284 = scmp.eq.s32.totalorder %s33, 0
      %p285 = por %p283, %p284
      %s287 = sadd.s32 %s286, 1
      %p290 = scmp.eq.s32.totalorder %s27, 2
      %p291 = scmp.ne.s32.totalorder %s286, %s288
      %p292 = scmp.eq.s32.totalorder %s27, 0
      %p293 = por %p291, %p292
      %p294 = scmp.ne.s32.totalorder %s286, %s288
      %p295 = scmp.eq.s32.totalorder %s32, 2
      %p296 = por %p294, %p295
      %p297 = scmp.ne.s32.totalorder %s288, %s289
      %p298 = scmp.eq.s32.totalorder %s32, 0
      %p299 = por %p297, %p298
      %p300 = scmp.ne.s32.totalorder %s288, %s289
      %p301 = scmp.eq.s32.totalorder %s33, 2
      %p302 = por %p300, %p301
      %p304 = scmp.ne.s32.totalorder %s289, %s303
      %p305 = scmp.eq.s32.totalorder %s33, 0
      %p306 = por %p304, %p305
      %s308 = sadd.s32 %s307, 1
      %p311 = scmp.eq.s32.totalorder %s27, 2
      %p312 = scmp.ne.s32.totalorder %s307, %s309
      %p313 = scmp.eq.s32.totalorder %s27, 0
      %p314 = por %p312, %p313
      %p315 = scmp.ne.s32.totalorder %s307, %s309
      %p316 = scmp.eq.s32.totalorder %s32, 2
      %p317 = por %p315, %p316
      %p318 = scmp.ne.s32.totalorder %s309, %s310
      %p319 = scmp.eq.s32.totalorder %s32, 0
      %p320 = por %p318, %p319
      %p321 = scmp.ne.s32.totalorder %s309, %s310
      %p322 = scmp.eq.s32.totalorder %s33, 2
      %p323 = por %p321, %p322
      %p325 = scmp.ne.s32.totalorder %s310, %s324
      %p326 = scmp.eq.s32.totalorder %s33, 0
      %p327 = por %p325, %p326
      %s329 = sadd.s32 %s328, 1
      %p332 = scmp.eq.s32.totalorder %s27, 2
      %p333 = scmp.ne.s32.totalorder %s328, %s330
      %p334 = scmp.eq.s32.totalorder %s27, 0
      %p335 = por %p333, %p334
      %p336 = scmp.ne.s32.totalorder %s328, %s330
      %p337 = scmp.eq.s32.totalorder %s32, 2
      %p338 = por %p336, %p337
      %p339 = scmp.ne.s32.totalorder %s330, %s331
      %p340 = scmp.eq.s32.totalorder %s32, 0
      %p341 = por %p339, %p340
      %p342 = scmp.ne.s32.totalorder %s330, %s331
      %p343 = scmp.eq.s32.totalorder %s33, 2
      %p344 = por %p342, %p343
      %p346 = scmp.ne.s32.totalorder %s331, %s345
      %p347 = scmp.eq.s32.totalorder %s33, 0
      %p348 = por %p346, %p347
      %p349 = scmp.le.s32.totalorder 1, %s27
      %p350 = scmp.lt.s32.totalorder %s27, 4
      %p351 = pnand %p349, %p350
      %p352 = pneg %p351
      // Predicated region
      $region9: #{tpu_custom_call.1} parent=5 // pred_check
        _
      $region10: #{tpu_custom_call.1} parent=5 // pred_check_branch
        %354 = sbr.rel (%p351) target = $region12
      $region11: #{tpu_custom_call.1} parent=5 // pred_region
        %s355 = ssub.s32 %s27, 1
        // Predicated region
        $region13: #{tpu_custom_call.1} parent=11 // pred_check
          %p356 = pneg %p48
        $region14: #{tpu_custom_call.1} parent=11 // pred_check_branch
          %358 = sbr.rel (%p356) target = $region16
        $region15: #{tpu_custom_call.1} parent=11 // pred_region
          %s360 = ssub.s32 16384, 16384
          %361 = vsyncadd [#allocation6], %s360
          %s362 = sshll.u32 [#allocation5], 4
          %s363 = int_to_ptr.vmem [resolvable:$true] %s362
          %368 = dma.hbm_to_vmem [thread:$0]  %s0, 16384, %s363, [#allocation6], 256, 256, 16
        $region16: #{tpu_custom_call.1} parent=11 // pred_fallthru
          _
        // Predicated region
        $region17: #{tpu_custom_call.1} parent=11 // pred_check
          %p369 = pneg %p69
        $region18: #{tpu_custom_call.1} parent=11 // pred_check_branch
          %371 = sbr.rel (%p369) target = $region20
        $region19: #{tpu_custom_call.1} parent=11 // pred_region
          %s373 = ssub.s32 4096, 4096
          %374 = vsyncadd [#allocation9], %s373
          %s375 = sshll.u32 [#allocation8], 4
          %s376 = int_to_ptr.vmem [resolvable:$true] %s375
          %381 = dma.hbm_to_vmem [thread:$0]  %s1, 4096, %s376, [#allocation9], 64, 64, 4
        $region20: #{tpu_custom_call.1} parent=11 // pred_fallthru
          _
        // Predicated region
        $region21: #{tpu_custom_call.1} parent=11 // pred_check
          %p382 = pneg %p90
        $region22: #{tpu_custom_call.1} parent=11 // pred_check_branch
          %384 = sbr.rel (%p382) target = $region24
        $region23: #{tpu_custom_call.1} parent=11 // pred_region
          %s386 = ssub.s32 256, 256
          %387 = vsyncadd [#allocation9], %s386
          %s389 = sshll.u32 [#allocation10], 4
          %s390 = int_to_ptr.vmem [resolvable:$true] %s389
          %392 = dma.hbm_to_vmem [thread:$0]  %s2, 256, %s390, [#allocation9]
        $region24: #{tpu_custom_call.1} parent=11 // pred_fallthru
          _
        // Predicated region
        $region25: #{tpu_custom_call.1} parent=11 // pred_check
          %p393 = pneg %p215
        $region26: #{tpu_custom_call.1} parent=11 // pred_check_branch
          %395 = sbr.rel (%p393) target = $region28
        $region27: #{tpu_custom_call.1} parent=11 // pred_region
          %s397 = ssub.s32 1024, 1024
          %398 = vsyncadd [#allocation15], %s397
          %s399 = sshll.u32 [#allocation14], 4
          %s400 = int_to_ptr.vmem [resolvable:$true] %s399
          %405 = dma.hbm_to_vmem [thread:$0]  %s7, 1024, %s400, [#allocation15], 64, 64, 4
        $region28: #{tpu_custom_call.1} parent=11 // pred_fallthru
          _
        // Predicated region
        $region29: #{tpu_custom_call.1} parent=11 // pred_check
          %p406 = pneg %p236
        $region30: #{tpu_custom_call.1} parent=11 // pred_check_branch
          %408 = sbr.rel (%p406) target = $region32
        $region31: #{tpu_custom_call.1} parent=11 // pred_region
          %s410 = ssub.s32 1024, 1024
          %411 = vsyncadd [#allocation15], %s410
          %s412 = sshll.u32 [#allocation16], 4
          %s413 = int_to_ptr.vmem [resolvable:$true] %s412
          %418 = dma.hbm_to_vmem [thread:$0]  %s8, 1024, %s413, [#allocation15], 64, 64, 4
        $region32: #{tpu_custom_call.1} parent=11 // pred_fallthru
          _
        // Predicated region
        $region33: #{tpu_custom_call.1} parent=11 // pred_check
          %p419 = pneg %p257
        $region34: #{tpu_custom_call.1} parent=11 // pred_check_branch
          %421 = sbr.rel (%p419) target = $region36
        $region35: #{tpu_custom_call.1} parent=11 // pred_region
          %s423 = ssub.s32 1024, 1024
          %424 = vsyncadd [#allocation18], %s423
          %s425 = sshll.u32 [#allocation17], 4
          %s426 = int_to_ptr.vmem [resolvable:$true] %s425
          %431 = dma.hbm_to_vmem [thread:$0]  %s9, 1024, %s426, [#allocation18], 64, 64, 4
        $region36: #{tpu_custom_call.1} parent=11 // pred_fallthru
          _
        // Predicated region
        $region37: #{tpu_custom_call.1} parent=11 // pred_check
          %p432 = pneg %p278
        $region38: #{tpu_custom_call.1} parent=11 // pred_check_branch
          %434 = sbr.rel (%p432) target = $region40
        $region39: #{tpu_custom_call.1} parent=11 // pred_region
          _
        $region40: #{tpu_custom_call.1} parent=11 // pred_fallthru
          _
        // Predicated region
        $region41: #{tpu_custom_call.1} parent=11 // pred_check
          %p435 = pneg %p299
        $region42: #{tpu_custom_call.1} parent=11 // pred_check_branch
          %437 = sbr.rel (%p435) target = $region44
        $region43: #{tpu_custom_call.1} parent=11 // pred_region
          %s439 = ssub.s32 1024, 1024
          %440 = vsyncadd [#allocation18], %s439
          %s441 = sshll.u32 [#allocation19], 4
          %s442 = int_to_ptr.vmem [resolvable:$true] %s441
          %447 = dma.hbm_to_vmem [thread:$0]  %s11, 1024, %s442, [#allocation18], 64, 64, 4
        $region44: #{tpu_custom_call.1} parent=11 // pred_fallthru
          _
        // Predicated region
        $region45: #{tpu_custom_call.1} parent=11 // pred_check
          %p448 = pneg %p320
        $region46: #{tpu_custom_call.1} parent=11 // pred_check_branch
          %450 = sbr.rel (%p448) target = $region48
        $region47: #{tpu_custom_call.1} parent=11 // pred_region
          _
        $region48: #{tpu_custom_call.1} parent=11 // pred_fallthru
          _
      $region12: #{tpu_custom_call.1} parent=5 // pred_fallthru
        _
      %p451 = scmp.lt.s32.totalorder %s27, 3
      // Predicated region
      $region49: #{tpu_custom_call.1} parent=5 // pred_check
        %p452 = pneg %p451
      $region50: #{tpu_custom_call.1} parent=5 // pred_check_branch
        %454 = sbr.rel (%p452) target = $region52
      $region51: #{tpu_custom_call.1} parent=5 // pred_region
        // Predicated region
        $region53: #{tpu_custom_call.1} parent=51 // pred_check
          %p455 = pneg %p110
        $region54: #{tpu_custom_call.1} parent=51 // pred_check_branch
          %457 = sbr.rel (%p455) target = $region56
        $region55: #{tpu_custom_call.1} parent=51 // pred_region
          %s458 = sand.u32 %s27, 1
          %s459 = scalar_lea.sflag [#allocation12], %s458
          %s460 = sand.u32 %s100, 1
          %s461 = smul.addr %s460, 64
          %s462 = scalar_lea.vmem [#allocation11], %s461
          %s464 = ssub.s32 1024, 1024
          %465 = vsyncadd %s459, %s464
          %s466 = smul.addr %s27, 16
          %s467 = smul.addr %s466, 64
          %s468 = scalar_lea.hbm %s3, %s467
          %s469 = sshll.u32 %s462, 4
          %s470 = int_to_ptr.vmem [resolvable:$true] %s469
          %475 = dma.hbm_to_vmem [thread:$0]  %s468, 1024, %s470, %s459, 64, 64, 4
        $region56: #{tpu_custom_call.1} parent=51 // pred_fallthru
          _
        // Predicated region
        $region57: #{tpu_custom_call.1} parent=51 // pred_check
          %p476 = pneg %p136
        $region58: #{tpu_custom_call.1} parent=51 // pred_check_branch
          %478 = sbr.rel (%p476) target = $region60
        $region59: #{tpu_custom_call.1} parent=51 // pred_region
          %p479 = scmp.lt.s32.totalorder %s27, 2
          %s480 = scalar_select %p479, %s27, 2
          %s481 = scalar_lea.vmem %s4, %s480
        $region60: #{tpu_custom_call.1} parent=51 // pred_fallthru
          _
        // Predicated region
        $region61: #{tpu_custom_call.1} parent=51 // pred_check
          %p482 = pneg %p162
        $region62: #{tpu_custom_call.1} parent=51 // pred_check_branch
          %484 = sbr.rel (%p482) target = $region64
        $region63: #{tpu_custom_call.1} parent=51 // pred_region
          %s485 = sand.u32 %s27, 1
          %s486 = scalar_lea.sflag [#allocation12], %s485
          %s487 = sand.u32 %s152, 1
          %s488 = smul.addr %s487, 64
          %s489 = scalar_lea.vmem [#allocation13], %s488
          %s491 = ssub.s32 1024, 1024
          %492 = vsyncadd %s486, %s491
          %s493 = smul.addr %s27, 16
          %s494 = smul.addr %s493, 64
          %s495 = scalar_lea.hbm %s5, %s494
          %s496 = sshll.u32 %s489, 4
          %s497 = int_to_ptr.vmem [resolvable:$true] %s496
          %502 = dma.hbm_to_vmem [thread:$0]  %s495, 1024, %s497, %s486, 64, 64, 4
        $region64: #{tpu_custom_call.1} parent=51 // pred_fallthru
          _
        // Predicated region
        $region65: #{tpu_custom_call.1} parent=51 // pred_check
          %p503 = pneg %p188
        $region66: #{tpu_custom_call.1} parent=51 // pred_check_branch
          %505 = sbr.rel (%p503) target = $region68
        $region67: #{tpu_custom_call.1} parent=51 // pred_region
          %p506 = scmp.lt.s32.totalorder %s27, 2
          %s507 = scalar_select %p506, %s27, 2
          %s508 = scalar_lea.vmem %s6, %s507
        $region68: #{tpu_custom_call.1} parent=51 // pred_fallthru
          _
      $region52: #{tpu_custom_call.1} parent=5 // pred_fallthru
        _
      %p509 = scmp.le.s32.totalorder 1, %s27
      %p510 = scmp.lt.s32.totalorder %s27, 4
      %p511 = pnand %p509, %p510
      %p512 = pneg %p511
      // Predicated region
      $region69: #{tpu_custom_call.1} parent=5 // pred_check
        _
      $region70: #{tpu_custom_call.1} parent=5 // pred_check_branch
        %514 = sbr.rel (%p511) target = $region72
      $region71: #{tpu_custom_call.1} parent=5 // pred_region
        %s515 = ssub.s32 %s27, 1
        // Predicated region
        $region73: #{tpu_custom_call.1} parent=71 // pred_check
          %p516 = pneg %p48
        $region74: #{tpu_custom_call.1} parent=71 // pred_check_branch
          %518 = sbr.rel (%p516) target = $region76
        $region75: #{tpu_custom_call.1} parent=71 // pred_region
          %519 = dma.done [#allocation6], 16384
        $region76: #{tpu_custom_call.1} parent=71 // pred_fallthru
          _
        // Predicated region
        $region77: #{tpu_custom_call.1} parent=71 // pred_check
          %p520 = pneg %p69
        $region78: #{tpu_custom_call.1} parent=71 // pred_check_branch
          %522 = sbr.rel (%p520) target = $region80
        $region79: #{tpu_custom_call.1} parent=71 // pred_region
          %523 = dma.done [#allocation9], 4096
        $region80: #{tpu_custom_call.1} parent=71 // pred_fallthru
          _
        // Predicated region
        $region81: #{tpu_custom_call.1} parent=71 // pred_check
          %p524 = pneg %p90
        $region82: #{tpu_custom_call.1} parent=71 // pred_check_branch
          %526 = sbr.rel (%p524) target = $region84
        $region83: #{tpu_custom_call.1} parent=71 // pred_region
          %527 = dma.done [#allocation9], 256
        $region84: #{tpu_custom_call.1} parent=71 // pred_fallthru
          _
        %s528 = sand.u32 %s32, 1
        %s529 = scalar_lea.sflag [#allocation12], %s528
        %s530 = sand.u32 %s103, 1
        %s531 = smul.addr %s530, 64
        %s532 = scalar_lea.vmem [#allocation11], %s531
        // Predicated region
        $region85: #{tpu_custom_call.1} parent=71 // pred_check
          %p533 = pneg %p116
        $region86: #{tpu_custom_call.1} parent=71 // pred_check_branch
          %535 = sbr.rel (%p533) target = $region88
        $region87: #{tpu_custom_call.1} parent=71 // pred_region
          %536 = dma.done %s529, 1024
        $region88: #{tpu_custom_call.1} parent=71 // pred_fallthru
          _
        %s537 = sand.u32 %s32, 1
        %s538 = scalar_lea.sflag [#allocation12], %s537
        %s539 = sand.u32 %s155, 1
        %s540 = smul.addr %s539, 64
        %s541 = scalar_lea.vmem [#allocation13], %s540
        // Predicated region
        $region89: #{tpu_custom_call.1} parent=71 // pred_check
          %p542 = pneg %p168
        $region90: #{tpu_custom_call.1} parent=71 // pred_check_branch
          %544 = sbr.rel (%p542) target = $region92
        $region91: #{tpu_custom_call.1} parent=71 // pred_region
          %545 = dma.done %s538, 1024
        $region92: #{tpu_custom_call.1} parent=71 // pred_fallthru
          _
        // Predicated region
        $region93: #{tpu_custom_call.1} parent=71 // pred_check
          %p546 = pneg %p215
        $region94: #{tpu_custom_call.1} parent=71 // pred_check_branch
          %548 = sbr.rel (%p546) target = $region96
        $region95: #{tpu_custom_call.1} parent=71 // pred_region
          %549 = dma.done [#allocation15], 1024
        $region96: #{tpu_custom_call.1} parent=71 // pred_fallthru
          _
        // Predicated region
        $region97: #{tpu_custom_call.1} parent=71 // pred_check
          %p550 = pneg %p236
        $region98: #{tpu_custom_call.1} parent=71 // pred_check_branch
          %552 = sbr.rel (%p550) target = $region100
        $region99: #{tpu_custom_call.1} parent=71 // pred_region
          %553 = dma.done [#allocation15], 1024
        $region100: #{tpu_custom_call.1} parent=71 // pred_fallthru
          _
        // Predicated region
        $region101: #{tpu_custom_call.1} parent=71 // pred_check
          %p554 = pneg %p257
        $region102: #{tpu_custom_call.1} parent=71 // pred_check_branch
          %556 = sbr.rel (%p554) target = $region104
        $region103: #{tpu_custom_call.1} parent=71 // pred_region
          %557 = dma.done [#allocation18], 1024
        $region104: #{tpu_custom_call.1} parent=71 // pred_fallthru
          _
        // Predicated region
        $region105: #{tpu_custom_call.1} parent=71 // pred_check
          %p558 = pneg %p299
        $region106: #{tpu_custom_call.1} parent=71 // pred_check_branch
          %560 = sbr.rel (%p558) target = $region108
        $region107: #{tpu_custom_call.1} parent=71 // pred_region
          %561 = dma.done [#allocation18], 1024
        $region108: #{tpu_custom_call.1} parent=71 // pred_fallthru
          _
        %p562 = pneg %p48
        %p563 = pneg %p45
        %p564 = pneg %p69
        %p565 = pneg %p66
        %p566 = pneg %p90
        %p567 = pneg %p87
        %s568 = sand.u32 %s32, 1
        %s569 = scalar_lea.sflag [#allocation12], %s568
        %s570 = sand.u32 %s103, 1
        %s571 = smul.addr %s570, 64
        %s572 = scalar_lea.vmem [#allocation11], %s571
        %p573 = pneg %p116
        %p574 = pneg %p113
        %p575 = scmp.lt.s32.totalorder %s32, 2
        %s576 = scalar_select %p575, %s32, 2
        %s577 = scalar_lea.vmem %s4, %s576
        %p578 = pneg %p142
        %p579 = pneg %p139
        %s580 = sand.u32 %s32, 1
        %s581 = scalar_lea.sflag [#allocation12], %s580
        %s582 = sand.u32 %s155, 1
        %s583 = smul.addr %s582, 64
        %s584 = scalar_lea.vmem [#allocation13], %s583
        %p585 = pneg %p168
        %p586 = pneg %p165
        %p587 = scmp.lt.s32.totalorder %s32, 2
        %s588 = scalar_select %p587, %s32, 2
        %s589 = scalar_lea.vmem %s6, %s588
        %p590 = pneg %p194
        %p591 = pneg %p191
        %p592 = pneg %p215
        %p593 = pneg %p212
        %p594 = pneg %p236
        %p595 = pneg %p233
        %p596 = pneg %p257
        %p597 = pneg %p254
        %p598 = pneg %p278
        %p599 = pneg %p275
        %p600 = pneg %p299
        %p601 = pneg %p296
        %p602 = pneg %p320
        %p603 = pneg %p317
        %p604 = pneg %p341
        %p605 = pneg %p338
        %p606 = scmp.lt.s32.totalorder %s32, 2
        %s607 = scalar_select %p606, %s32, 2
        %s608 = scalar_lea.vmem %s4, %s607
        %p609 = scmp.lt.s32.totalorder %s32, 2
        %s610 = scalar_select %p609, %s32, 2
        %s611 = scalar_lea.vmem %s6, %s610
        %p613 = scmp.eq.s32.totalorder %s32, 0
        // Predicated region
        $region109: #{tpu_custom_call.1} parent=71 // pred_check
          %p614 = pneg %p613
        $region110: #{tpu_custom_call.1} parent=71 // pred_check_branch
          %616 = sbr.rel (%p614) target = $region112
        $region111: #{tpu_custom_call.1} parent=71 // pred_region
          %v617 = vld [vmem:[#allocation8] sm:$0xf]
          %v618 = vld [vmem:[#allocation8 + $0x4] sm:$0xf]
          %v619 = vld [vmem:[#allocation8 + $0x8] sm:$0xf]
          %v620 = vld [vmem:[#allocation8 + $0xc] sm:$0xf]
          %v621 = vld [vmem:[#allocation8 + $0x10] sm:$0xf]
          %v622 = vld [vmem:[#allocation8 + $0x14] sm:$0xf]
          %v623 = vld [vmem:[#allocation8 + $0x18] sm:$0xf]
          %v624 = vld [vmem:[#allocation8 + $0x1c] sm:$0xf]
          %v625 = vld [vmem:[#allocation8 + $0x20] sm:$0xf]
          %v626 = vld [vmem:[#allocation8 + $0x24] sm:$0xf]
          %v627 = vld [vmem:[#allocation8 + $0x28] sm:$0xf]
          %v628 = vld [vmem:[#allocation8 + $0x2c] sm:$0xf]
          %v629 = vld [vmem:[#allocation8 + $0x30] sm:$0xf]
          %v630 = vld [vmem:[#allocation8 + $0x34] sm:$0xf]
          %v631 = vld [vmem:[#allocation8 + $0x38] sm:$0xf]
          %v632 = vld [vmem:[#allocation8 + $0x3c] sm:$0xf]
          %v633 = vld [vmem:[#allocation8 + $0x40] sm:$0xf]
          %v634 = vld [vmem:[#allocation8 + $0x44] sm:$0xf]
          %v635 = vld [vmem:[#allocation8 + $0x48] sm:$0xf]
          %v636 = vld [vmem:[#allocation8 + $0x4c] sm:$0xf]
          %v637 = vld [vmem:[#allocation8 + $0x50] sm:$0xf]
          %v638 = vld [vmem:[#allocation8 + $0x54] sm:$0xf]
          %v639 = vld [vmem:[#allocation8 + $0x58] sm:$0xf]
          %v640 = vld [vmem:[#allocation8 + $0x5c] sm:$0xf]
          %v641 = vld [vmem:[#allocation8 + $0x60] sm:$0xf]
          %v642 = vld [vmem:[#allocation8 + $0x64] sm:$0xf]
          %v643 = vld [vmem:[#allocation8 + $0x68] sm:$0xf]
          %v644 = vld [vmem:[#allocation8 + $0x6c] sm:$0xf]
          %v645 = vld [vmem:[#allocation8 + $0x70] sm:$0xf]
          %v646 = vld [vmem:[#allocation8 + $0x74] sm:$0xf]
          %v647 = vld [vmem:[#allocation8 + $0x78] sm:$0xf]
          %v648 = vld [vmem:[#allocation8 + $0x7c] sm:$0xf]
          %v649 = vld [vmem:[#allocation8 + $0x80] sm:$0xf]
          %v650 = vld [vmem:[#allocation8 + $0x84] sm:$0xf]
          %v651 = vld [vmem:[#allocation8 + $0x88] sm:$0xf]
          %v652 = vld [vmem:[#allocation8 + $0x8c] sm:$0xf]
          %v653 = vld [vmem:[#allocation8 + $0x90] sm:$0xf]
          %v654 = vld [vmem:[#allocation8 + $0x94] sm:$0xf]
          %v655 = vld [vmem:[#allocation8 + $0x98] sm:$0xf]
          %v656 = vld [vmem:[#allocation8 + $0x9c] sm:$0xf]
          %v657 = vld [vmem:[#allocation8 + $0xa0] sm:$0xf]
          %v658 = vld [vmem:[#allocation8 + $0xa4] sm:$0xf]
          %v659 = vld [vmem:[#allocation8 + $0xa8] sm:$0xf]
          %v660 = vld [vmem:[#allocation8 + $0xac] sm:$0xf]
          %v661 = vld [vmem:[#allocation8 + $0xb0] sm:$0xf]
          %v662 = vld [vmem:[#allocation8 + $0xb4] sm:$0xf]
          %v663 = vld [vmem:[#allocation8 + $0xb8] sm:$0xf]
          %v664 = vld [vmem:[#allocation8 + $0xbc] sm:$0xf]
          %v665 = vld [vmem:[#allocation8 + $0xc0] sm:$0xf]
          %v666 = vld [vmem:[#allocation8 + $0xc4] sm:$0xf]
          %v667 = vld [vmem:[#allocation8 + $0xc8] sm:$0xf]
          %v668 = vld [vmem:[#allocation8 + $0xcc] sm:$0xf]
          %v669 = vld [vmem:[#allocation8 + $0xd0] sm:$0xf]
          %v670 = vld [vmem:[#allocation8 + $0xd4] sm:$0xf]
          %v671 = vld [vmem:[#allocation8 + $0xd8] sm:$0xf]
          %v672 = vld [vmem:[#allocation8 + $0xdc] sm:$0xf]
          %v673 = vld [vmem:[#allocation8 + $0xe0] sm:$0xf]
          %v674 = vld [vmem:[#allocation8 + $0xe4] sm:$0xf]
          %v675 = vld [vmem:[#allocation8 + $0xe8] sm:$0xf]
          %v676 = vld [vmem:[#allocation8 + $0xec] sm:$0xf]
          %v677 = vld [vmem:[#allocation8 + $0xf0] sm:$0xf]
          %v678 = vld [vmem:[#allocation8 + $0xf4] sm:$0xf]
          %v679 = vld [vmem:[#allocation8 + $0xf8] sm:$0xf]
          %v680 = vld [vmem:[#allocation8 + $0xfc] sm:$0xf]
          %v745 = vunpack.c.l.b16 %v617
          %v746 = vunpack.c.l.b16 %v618
          %v747 = vunpack.c.l.b16 %v619
          %v748 = vunpack.c.l.b16 %v620
          %v749 = vunpack.c.l.b16 %v621
          %v750 = vunpack.c.l.b16 %v622
          %v751 = vunpack.c.l.b16 %v623
          %v752 = vunpack.c.l.b16 %v624
          %v753 = vunpack.c.l.b16 %v625
          %v754 = vunpack.c.l.b16 %v626
          %v755 = vunpack.c.l.b16 %v627
          %v756 = vunpack.c.l.b16 %v628
          %v757 = vunpack.c.l.b16 %v629
          %v758 = vunpack.c.l.b16 %v630
          %v759 = vunpack.c.l.b16 %v631
          %v760 = vunpack.c.l.b16 %v632
          %v761 = vunpack.c.l.b16 %v633
          %v762 = vunpack.c.l.b16 %v634
          %v763 = vunpack.c.l.b16 %v635
          %v764 = vunpack.c.l.b16 %v636
          %v765 = vunpack.c.l.b16 %v637
          %v766 = vunpack.c.l.b16 %v638
          %v767 = vunpack.c.l.b16 %v639
          %v768 = vunpack.c.l.b16 %v640
          %v769 = vunpack.c.l.b16 %v641
          %v770 = vunpack.c.l.b16 %v642
          %v771 = vunpack.c.l.b16 %v643
          %v772 = vunpack.c.l.b16 %v644
          %v773 = vunpack.c.l.b16 %v645
          %v774 = vunpack.c.l.b16 %v646
          %v775 = vunpack.c.l.b16 %v647
          %v776 = vunpack.c.l.b16 %v648
          %v777 = vunpack.c.l.b16 %v649
          %v778 = vunpack.c.l.b16 %v650
          %v779 = vunpack.c.l.b16 %v651
          %v780 = vunpack.c.l.b16 %v652
          %v781 = vunpack.c.l.b16 %v653
          %v782 = vunpack.c.l.b16 %v654
          %v783 = vunpack.c.l.b16 %v655
          %v784 = vunpack.c.l.b16 %v656
          %v785 = vunpack.c.l.b16 %v657
          %v786 = vunpack.c.l.b16 %v658
          %v787 = vunpack.c.l.b16 %v659
          %v788 = vunpack.c.l.b16 %v660
          %v789 = vunpack.c.l.b16 %v661
          %v790 = vunpack.c.l.b16 %v662
          %v791 = vunpack.c.l.b16 %v663
          %v792 = vunpack.c.l.b16 %v664
          %v793 = vunpack.c.l.b16 %v665
          %v794 = vunpack.c.l.b16 %v666
          %v795 = vunpack.c.l.b16 %v667
          %v796 = vunpack.c.l.b16 %v668
          %v797 = vunpack.c.l.b16 %v669
          %v798 = vunpack.c.l.b16 %v670
          %v799 = vunpack.c.l.b16 %v671
          %v800 = vunpack.c.l.b16 %v672
          %v801 = vunpack.c.l.b16 %v673
          %v802 = vunpack.c.l.b16 %v674
          %v803 = vunpack.c.l.b16 %v675
          %v804 = vunpack.c.l.b16 %v676
          %v805 = vunpack.c.l.b16 %v677
          %v806 = vunpack.c.l.b16 %v678
          %v807 = vunpack.c.l.b16 %v679
          %v808 = vunpack.c.l.b16 %v680
          %v809 = vpack.c.b16 %v746, %v745
          %v810 = vpack.c.b16 %v748, %v747
          %v811 = vpack.c.b16 %v750, %v749
          %v812 = vpack.c.b16 %v752, %v751
          %v813 = vpack.c.b16 %v754, %v753
          %v814 = vpack.c.b16 %v756, %v755
          %v815 = vpack.c.b16 %v758, %v757
          %v816 = vpack.c.b16 %v760, %v759
          %v817 = vpack.c.b16 %v762, %v761
          %v818 = vpack.c.b16 %v764, %v763
          %v819 = vpack.c.b16 %v766, %v765
          %v820 = vpack.c.b16 %v768, %v767
          %v821 = vpack.c.b16 %v770, %v769
          %v822 = vpack.c.b16 %v772, %v771
          %v823 = vpack.c.b16 %v774, %v773
          %v824 = vpack.c.b16 %v776, %v775
          %v825 = vpack.c.b16 %v778, %v777
          %v826 = vpack.c.b16 %v780, %v779
          %v827 = vpack.c.b16 %v782, %v781
          %v828 = vpack.c.b16 %v784, %v783
          %v829 = vpack.c.b16 %v786, %v785
          %v830 = vpack.c.b16 %v788, %v787
          %v831 = vpack.c.b16 %v790, %v789
          %v832 = vpack.c.b16 %v792, %v791
          %v833 = vpack.c.b16 %v794, %v793
          %v834 = vpack.c.b16 %v796, %v795
          %v835 = vpack.c.b16 %v798, %v797
          %v836 = vpack.c.b16 %v800, %v799
          %v837 = vpack.c.b16 %v802, %v801
          %v838 = vpack.c.b16 %v804, %v803
          %v839 = vpack.c.b16 %v806, %v805
          %v840 = vpack.c.b16 %v808, %v807
          %873 = vst [vmem:[#allocation2] sm:$0xff] %v809
          %874 = vst [vmem:[#allocation2 + $0x8] sm:$0xff] %v810
          %875 = vst [vmem:[#allocation2 + $0x10] sm:$0xff] %v811
          %876 = vst [vmem:[#allocation2 + $0x18] sm:$0xff] %v812
          %877 = vst [vmem:[#allocation2 + $0x20] sm:$0xff] %v813
          %878 = vst [vmem:[#allocation2 + $0x28] sm:$0xff] %v814
          %879 = vst [vmem:[#allocation2 + $0x30] sm:$0xff] %v815
          %880 = vst [vmem:[#allocation2 + $0x38] sm:$0xff] %v816
          %881 = vst [vmem:[#allocation2 + $0x40] sm:$0xff] %v817
          %882 = vst [vmem:[#allocation2 + $0x48] sm:$0xff] %v818
          %883 = vst [vmem:[#allocation2 + $0x50] sm:$0xff] %v819
          %884 = vst [vmem:[#allocation2 + $0x58] sm:$0xff] %v820
          %885 = vst [vmem:[#allocation2 + $0x60] sm:$0xff] %v821
          %886 = vst [vmem:[#allocation2 + $0x68] sm:$0xff] %v822
          %887 = vst [vmem:[#allocation2 + $0x70] sm:$0xff] %v823
          %888 = vst [vmem:[#allocation2 + $0x78] sm:$0xff] %v824
          %889 = vst [vmem:[#allocation2 + $0x80] sm:$0xff] %v825
          %890 = vst [vmem:[#allocation2 + $0x88] sm:$0xff] %v826
          %891 = vst [vmem:[#allocation2 + $0x90] sm:$0xff] %v827
          %892 = vst [vmem:[#allocation2 + $0x98] sm:$0xff] %v828
          %893 = vst [vmem:[#allocation2 + $0xa0] sm:$0xff] %v829
          %894 = vst [vmem:[#allocation2 + $0xa8] sm:$0xff] %v830
          %895 = vst [vmem:[#allocation2 + $0xb0] sm:$0xff] %v831
          %896 = vst [vmem:[#allocation2 + $0xb8] sm:$0xff] %v832
          %897 = vst [vmem:[#allocation2 + $0xc0] sm:$0xff] %v833
          %898 = vst [vmem:[#allocation2 + $0xc8] sm:$0xff] %v834
          %899 = vst [vmem:[#allocation2 + $0xd0] sm:$0xff] %v835
          %900 = vst [vmem:[#allocation2 + $0xd8] sm:$0xff] %v836
          %901 = vst [vmem:[#allocation2 + $0xe0] sm:$0xff] %v837
          %902 = vst [vmem:[#allocation2 + $0xe8] sm:$0xff] %v838
          %903 = vst [vmem:[#allocation2 + $0xf0] sm:$0xff] %v839
          %904 = vst [vmem:[#allocation2 + $0xf8] sm:$0xff] %v840
        $region112: #{tpu_custom_call.1} parent=71 // pred_fallthru
          _
        %v905 = vld [vmem:[#allocation2] sm:$0xff]
        %v906 = vld [vmem:[#allocation2 + $0x8] sm:$0xff]
        %v907 = vld [vmem:[#allocation2 + $0x10] sm:$0xff]
        %v908 = vld [vmem:[#allocation2 + $0x18] sm:$0xff]
        %v909 = vld [vmem:[#allocation2 + $0x20] sm:$0xff]
        %v910 = vld [vmem:[#allocation2 + $0x28] sm:$0xff]
        %v911 = vld [vmem:[#allocation2 + $0x30] sm:$0xff]
        %v912 = vld [vmem:[#allocation2 + $0x38] sm:$0xff]
        %v913 = vld [vmem:[#allocation2 + $0x40] sm:$0xff]
        %v914 = vld [vmem:[#allocation2 + $0x48] sm:$0xff]
        %v915 = vld [vmem:[#allocation2 + $0x50] sm:$0xff]
        %v916 = vld [vmem:[#allocation2 + $0x58] sm:$0xff]
        %v917 = vld [vmem:[#allocation2 + $0x60] sm:$0xff]
        %v918 = vld [vmem:[#allocation2 + $0x68] sm:$0xff]
        %v919 = vld [vmem:[#allocation2 + $0x70] sm:$0xff]
        %v920 = vld [vmem:[#allocation2 + $0x78] sm:$0xff]
        %v921 = vld [vmem:[#allocation2 + $0x80] sm:$0xff]
        %v922 = vld [vmem:[#allocation2 + $0x88] sm:$0xff]
        %v923 = vld [vmem:[#allocation2 + $0x90] sm:$0xff]
        %v924 = vld [vmem:[#allocation2 + $0x98] sm:$0xff]
        %v925 = vld [vmem:[#allocation2 + $0xa0] sm:$0xff]
        %v926 = vld [vmem:[#allocation2 + $0xa8] sm:$0xff]
        %v927 = vld [vmem:[#allocation2 + $0xb0] sm:$0xff]
        %v928 = vld [vmem:[#allocation2 + $0xb8] sm:$0xff]
        %v929 = vld [vmem:[#allocation2 + $0xc0] sm:$0xff]
        %v930 = vld [vmem:[#allocation2 + $0xc8] sm:$0xff]
        %v931 = vld [vmem:[#allocation2 + $0xd0] sm:$0xff]
        %v932 = vld [vmem:[#allocation2 + $0xd8] sm:$0xff]
        %v933 = vld [vmem:[#allocation2 + $0xe0] sm:$0xff]
        %v934 = vld [vmem:[#allocation2 + $0xe8] sm:$0xff]
        %v935 = vld [vmem:[#allocation2 + $0xf0] sm:$0xff]
        %v936 = vld [vmem:[#allocation2 + $0xf8] sm:$0xff]
        %v937 = vld [vmem:[#allocation5] sm:$0xff]
        %v938 = vld [vmem:[#allocation5 + $0x8] sm:$0xff]
        %v939 = vld [vmem:[#allocation5 + $0x10] sm:$0xff]
        %v940 = vld [vmem:[#allocation5 + $0x18] sm:$0xff]
        %v941 = vld [vmem:[#allocation5 + $0x20] sm:$0xff]
        %v942 = vld [vmem:[#allocation5 + $0x28] sm:$0xff]
        %v943 = vld [vmem:[#allocation5 + $0x30] sm:$0xff]
        %v944 = vld [vmem:[#allocation5 + $0x38] sm:$0xff]
        %v945 = vld [vmem:[#allocation5 + $0x40] sm:$0xff]
        %v946 = vld [vmem:[#allocation5 + $0x48] sm:$0xff]
        %v947 = vld [vmem:[#allocation5 + $0x50] sm:$0xff]
        %v948 = vld [vmem:[#allocation5 + $0x58] sm:$0xff]
        %v949 = vld [vmem:[#allocation5 + $0x60] sm:$0xff]
        %v950 = vld [vmem:[#allocation5 + $0x68] sm:$0xff]
        %v951 = vld [vmem:[#allocation5 + $0x70] sm:$0xff]
        %v952 = vld [vmem:[#allocation5 + $0x78] sm:$0xff]
        %v953 = vld [vmem:[#allocation5 + $0x80] sm:$0xff]
        %v954 = vld [vmem:[#allocation5 + $0x88] sm:$0xff]
        %v955 = vld [vmem:[#allocation5 + $0x90] sm:$0xff]
        %v956 = vld [vmem:[#allocation5 + $0x98] sm:$0xff]
        %v957 = vld [vmem:[#allocation5 + $0xa0] sm:$0xff]
        %v958 = vld [vmem:[#allocation5 + $0xa8] sm:$0xff]
        %v959 = vld [vmem:[#allocation5 + $0xb0] sm:$0xff]
        %v960 = vld [vmem:[#allocation5 + $0xb8] sm:$0xff]
        %v961 = vld [vmem:[#allocation5 + $0xc0] sm:$0xff]
        %v962 = vld [vmem:[#allocation5 + $0xc8] sm:$0xff]
        %v963 = vld [vmem:[#allocation5 + $0xd0] sm:$0xff]
        %v964 = vld [vmem:[#allocation5 + $0xd8] sm:$0xff]
        %v965 = vld [vmem:[#allocation5 + $0xe0] sm:$0xff]
        %v966 = vld [vmem:[#allocation5 + $0xe8] sm:$0xff]
        %v967 = vld [vmem:[#allocation5 + $0xf0] sm:$0xff]
        %v968 = vld [vmem:[#allocation5 + $0xf8] sm:$0xff]
        %v969 = vld [vmem:[#allocation5 + $0x100] sm:$0xff]
        %v970 = vld [vmem:[#allocation5 + $0x108] sm:$0xff]
        %v971 = vld [vmem:[#allocation5 + $0x110] sm:$0xff]
        %v972 = vld [vmem:[#allocation5 + $0x118] sm:$0xff]
        %v973 = vld [vmem:[#allocation5 + $0x120] sm:$0xff]
        %v974 = vld [vmem:[#allocation5 + $0x128] sm:$0xff]
        %v975 = vld [vmem:[#allocation5 + $0x130] sm:$0xff]
        %v976 = vld [vmem:[#allocation5 + $0x138] sm:$0xff]
        %v977 = vld [vmem:[#allocation5 + $0x140] sm:$0xff]
        %v978 = vld [vmem:[#allocation5 + $0x148] sm:$0xff]
        %v979 = vld [vmem:[#allocation5 + $0x150] sm:$0xff]
        %v980 = vld [vmem:[#allocation5 + $0x158] sm:$0xff]
        %v981 = vld [vmem:[#allocation5 + $0x160] sm:$0xff]
        %v982 = vld [vmem:[#allocation5 + $0x168] sm:$0xff]
        %v983 = vld [vmem:[#allocation5 + $0x170] sm:$0xff]
        %v984 = vld [vmem:[#allocation5 + $0x178] sm:$0xff]
        %v985 = vld [vmem:[#allocation5 + $0x180] sm:$0xff]
        %v986 = vld [vmem:[#allocation5 + $0x188] sm:$0xff]
        %v987 = vld [vmem:[#allocation5 + $0x190] sm:$0xff]
        %v988 = vld [vmem:[#allocation5 + $0x198] sm:$0xff]
        %v989 = vld [vmem:[#allocation5 + $0x1a0] sm:$0xff]
        %v990 = vld [vmem:[#allocation5 + $0x1a8] sm:$0xff]
        %v991 = vld [vmem:[#allocation5 + $0x1b0] sm:$0xff]
        %v992 = vld [vmem:[#allocation5 + $0x1b8] sm:$0xff]
        %v993 = vld [vmem:[#allocation5 + $0x1c0] sm:$0xff]
        %v994 = vld [vmem:[#allocation5 + $0x1c8] sm:$0xff]
        %v995 = vld [vmem:[#allocation5 + $0x1d0] sm:$0xff]
        %v996 = vld [vmem:[#allocation5 + $0x1d8] sm:$0xff]
        %v997 = vld [vmem:[#allocation5 + $0x1e0] sm:$0xff]
        %v998 = vld [vmem:[#allocation5 + $0x1e8] sm:$0xff]
        %v999 = vld [vmem:[#allocation5 + $0x1f0] sm:$0xff]
        %v1000 = vld [vmem:[#allocation5 + $0x1f8] sm:$0xff]
        %v1001 = vld [vmem:[#allocation5 + $0x200] sm:$0xff]
        %v1002 = vld [vmem:[#allocation5 + $0x208] sm:$0xff]
        %v1003 = vld [vmem:[#allocation5 + $0x210] sm:$0xff]
        %v1004 = vld [vmem:[#allocation5 + $0x218] sm:$0xff]
        %v1005 = vld [vmem:[#allocation5 + $0x220] sm:$0xff]
        %v1006 = vld [vmem:[#allocation5 + $0x228] sm:$0xff]
        %v1007 = vld [vmem:[#allocation5 + $0x230] sm:$0xff]
        %v1008 = vld [vmem:[#allocation5 + $0x238] sm:$0xff]
        %v1009 = vld [vmem:[#allocation5 + $0x240] sm:$0xff]
        %v1010 = vld [vmem:[#allocation5 + $0x248] sm:$0xff]
        %v1011 = vld [vmem:[#allocation5 + $0x250] sm:$0xff]
        %v1012 = vld [vmem:[#allocation5 + $0x258] sm:$0xff]
        %v1013 = vld [vmem:[#allocation5 + $0x260] sm:$0xff]
        %v1014 = vld [vmem:[#allocation5 + $0x268] sm:$0xff]
        %v1015 = vld [vmem:[#allocation5 + $0x270] sm:$0xff]
        %v1016 = vld [vmem:[#allocation5 + $0x278] sm:$0xff]
        %v1017 = vld [vmem:[#allocation5 + $0x280] sm:$0xff]
        %v1018 = vld [vmem:[#allocation5 + $0x288] sm:$0xff]
        %v1019 = vld [vmem:[#allocation5 + $0x290] sm:$0xff]
        %v1020 = vld [vmem:[#allocation5 + $0x298] sm:$0xff]
        %v1021 = vld [vmem:[#allocation5 + $0x2a0] sm:$0xff]
        %v1022 = vld [vmem:[#allocation5 + $0x2a8] sm:$0xff]
        %v1023 = vld [vmem:[#allocation5 + $0x2b0] sm:$0xff]
        %v1024 = vld [vmem:[#allocation5 + $0x2b8] sm:$0xff]
        %v1025 = vld [vmem:[#allocation5 + $0x2c0] sm:$0xff]
        %v1026 = vld [vmem:[#allocation5 + $0x2c8] sm:$0xff]
        %v1027 = vld [vmem:[#allocation5 + $0x2d0] sm:$0xff]
        %v1028 = vld [vmem:[#allocation5 + $0x2d8] sm:$0xff]
        %v1029 = vld [vmem:[#allocation5 + $0x2e0] sm:$0xff]
        %v1030 = vld [vmem:[#allocation5 + $0x2e8] sm:$0xff]
        %v1031 = vld [vmem:[#allocation5 + $0x2f0] sm:$0xff]
        %v1032 = vld [vmem:[#allocation5 + $0x2f8] sm:$0xff]
        %v1033 = vld [vmem:[#allocation5 + $0x300] sm:$0xff]
        %v1034 = vld [vmem:[#allocation5 + $0x308] sm:$0xff]
        %v1035 = vld [vmem:[#allocation5 + $0x310] sm:$0xff]
        %v1036 = vld [vmem:[#allocation5 + $0x318] sm:$0xff]
        %v1037 = vld [vmem:[#allocation5 + $0x320] sm:$0xff]
        %v1038 = vld [vmem:[#allocation5 + $0x328] sm:$0xff]
        %v1039 = vld [vmem:[#allocation5 + $0x330] sm:$0xff]
        %v1040 = vld [vmem:[#allocation5 + $0x338] sm:$0xff]
        %v1041 = vld [vmem:[#allocation5 + $0x340] sm:$0xff]
        %v1042 = vld [vmem:[#allocation5 + $0x348] sm:$0xff]
        %v1043 = vld [vmem:[#allocation5 + $0x350] sm:$0xff]
        %v1044 = vld [vmem:[#allocation5 + $0x358] sm:$0xff]
        %v1045 = vld [vmem:[#allocation5 + $0x360] sm:$0xff]
        %v1046 = vld [vmem:[#allocation5 + $0x368] sm:$0xff]
        %v1047 = vld [vmem:[#allocation5 + $0x370] sm:$0xff]
        %v1048 = vld [vmem:[#allocation5 + $0x378] sm:$0xff]
        %v1049 = vld [vmem:[#allocation5 + $0x380] sm:$0xff]
        %v1050 = vld [vmem:[#allocation5 + $0x388] sm:$0xff]
        %v1051 = vld [vmem:[#allocation5 + $0x390] sm:$0xff]
        %v1052 = vld [vmem:[#allocation5 + $0x398] sm:$0xff]
        %v1053 = vld [vmem:[#allocation5 + $0x3a0] sm:$0xff]
        %v1054 = vld [vmem:[#allocation5 + $0x3a8] sm:$0xff]
        %v1055 = vld [vmem:[#allocation5 + $0x3b0] sm:$0xff]
        %v1056 = vld [vmem:[#allocation5 + $0x3b8] sm:$0xff]
        %v1057 = vld [vmem:[#allocation5 + $0x3c0] sm:$0xff]
        %v1058 = vld [vmem:[#allocation5 + $0x3c8] sm:$0xff]
        %v1059 = vld [vmem:[#allocation5 + $0x3d0] sm:$0xff]
        %v1060 = vld [vmem:[#allocation5 + $0x3d8] sm:$0xff]
        %v1061 = vld [vmem:[#allocation5 + $0x3e0] sm:$0xff]
        %v1062 = vld [vmem:[#allocation5 + $0x3e8] sm:$0xff]
        %v1063 = vld [vmem:[#allocation5 + $0x3f0] sm:$0xff]
        %v1064 = vld [vmem:[#allocation5 + $0x3f8] sm:$0xff]
        %v1065 = vunpack.c.l.bf16 %v905
        %v1066 = vunpack.c.h.bf16 %v905
        %v1067 = vunpack.c.l.bf16 %v906
        %v1068 = vunpack.c.h.bf16 %v906
        %v1069 = vunpack.c.l.bf16 %v907
        %v1070 = vunpack.c.h.bf16 %v907
        %v1071 = vunpack.c.l.bf16 %v908
        %v1072 = vunpack.c.h.bf16 %v908
        %v1073 = vunpack.c.l.bf16 %v909
        %v1074 = vunpack.c.h.bf16 %v909
        %v1075 = vunpack.c.l.bf16 %v910
        %v1076 = vunpack.c.h.bf16 %v910
        %v1077 = vunpack.c.l.bf16 %v911
        %v1078 = vunpack.c.h.bf16 %v911
        %v1079 = vunpack.c.l.bf16 %v912
        %v1080 = vunpack.c.h.bf16 %v912
        %v1081 = vunpack.c.l.bf16 %v913
        %v1082 = vunpack.c.h.bf16 %v913
        %v1083 = vunpack.c.l.bf16 %v914
        %v1084 = vunpack.c.h.bf16 %v914
        %v1085 = vunpack.c.l.bf16 %v915
        %v1086 = vunpack.c.h.bf16 %v915
        %v1087 = vunpack.c.l.bf16 %v916
        %v1088 = vunpack.c.h.bf16 %v916
        %v1089 = vunpack.c.l.bf16 %v917
        %v1090 = vunpack.c.h.bf16 %v917
        %v1091 = vunpack.c.l.bf16 %v918
        %v1092 = vunpack.c.h.bf16 %v918
        %v1093 = vunpack.c.l.bf16 %v919
        %v1094 = vunpack.c.h.bf16 %v919
        %v1095 = vunpack.c.l.bf16 %v920
        %v1096 = vunpack.c.h.bf16 %v920
        %v1097 = vunpack.c.l.bf16 %v921
        %v1098 = vunpack.c.h.bf16 %v921
        %v1099 = vunpack.c.l.bf16 %v922
        %v1100 = vunpack.c.h.bf16 %v922
        %v1101 = vunpack.c.l.bf16 %v923
        %v1102 = vunpack.c.h.bf16 %v923
        %v1103 = vunpack.c.l.bf16 %v924
        %v1104 = vunpack.c.h.bf16 %v924
        %v1105 = vunpack.c.l.bf16 %v925
        %v1106 = vunpack.c.h.bf16 %v925
        %v1107 = vunpack.c.l.bf16 %v926
        %v1108 = vunpack.c.h.bf16 %v926
        %v1109 = vunpack.c.l.bf16 %v927
        %v1110 = vunpack.c.h.bf16 %v927
        %v1111 = vunpack.c.l.bf16 %v928
        %v1112 = vunpack.c.h.bf16 %v928
        %v1113 = vunpack.c.l.bf16 %v929
        %v1114 = vunpack.c.h.bf16 %v929
        %v1115 = vunpack.c.l.bf16 %v930
        %v1116 = vunpack.c.h.bf16 %v930
        %v1117 = vunpack.c.l.bf16 %v931
        %v1118 = vunpack.c.h.bf16 %v931
        %v1119 = vunpack.c.l.bf16 %v932
        %v1120 = vunpack.c.h.bf16 %v932
        %v1121 = vunpack.c.l.bf16 %v933
        %v1122 = vunpack.c.h.bf16 %v933
        %v1123 = vunpack.c.l.bf16 %v934
        %v1124 = vunpack.c.h.bf16 %v934
        %v1125 = vunpack.c.l.bf16 %v935
        %v1126 = vunpack.c.h.bf16 %v935
        %v1127 = vunpack.c.l.bf16 %v936
        %v1128 = vunpack.c.h.bf16 %v936
        %v1257 = vunpack.c.l.b16 %v937
        %v1258 = vunpack.c.h.b16 %v937
        %v1259 = vunpack.c.l.b16 %v938
        %v1260 = vunpack.c.h.b16 %v938
        %v1261 = vunpack.c.l.b16 %v939
        %v1262 = vunpack.c.h.b16 %v939
        %v1263 = vunpack.c.l.b16 %v940
        %v1264 = vunpack.c.h.b16 %v940
        %v1265 = vunpack.c.l.b16 %v941
        %v1266 = vunpack.c.h.b16 %v941
        %v1267 = vunpack.c.l.b16 %v942
        %v1268 = vunpack.c.h.b16 %v942
        %v1269 = vunpack.c.l.b16 %v943
        %v1270 = vunpack.c.h.b16 %v943
        %v1271 = vunpack.c.l.b16 %v944
        %v1272 = vunpack.c.h.b16 %v944
        %v1273 = vunpack.c.l.b16 %v945
        %v1274 = vunpack.c.h.b16 %v945
        %v1275 = vunpack.c.l.b16 %v946
        %v1276 = vunpack.c.h.b16 %v946
        %v1277 = vunpack.c.l.b16 %v947
        %v1278 = vunpack.c.h.b16 %v947
        %v1279 = vunpack.c.l.b16 %v948
        %v1280 = vunpack.c.h.b16 %v948
        %v1281 = vunpack.c.l.b16 %v949
        %v1282 = vunpack.c.h.b16 %v949
        %v1283 = vunpack.c.l.b16 %v950
        %v1284 = vunpack.c.h.b16 %v950
        %v1285 = vunpack.c.l.b16 %v951
        %v1286 = vunpack.c.h.b16 %v951
        %v1287 = vunpack.c.l.b16 %v952
        %v1288 = vunpack.c.h.b16 %v952
        %v1289 = vunpack.c.l.b16 %v953
        %v1290 = vunpack.c.h.b16 %v953
        %v1291 = vunpack.c.l.b16 %v954
        %v1292 = vunpack.c.h.b16 %v954
        %v1293 = vunpack.c.l.b16 %v955
        %v1294 = vunpack.c.h.b16 %v955
        %v1295 = vunpack.c.l.b16 %v956
        %v1296 = vunpack.c.h.b16 %v956
        %v1297 = vunpack.c.l.b16 %v957
        %v1298 = vunpack.c.h.b16 %v957
        %v1299 = vunpack.c.l.b16 %v958
        %v1300 = vunpack.c.h.b16 %v958
        %v1301 = vunpack.c.l.b16 %v959
        %v1302 = vunpack.c.h.b16 %v959
        %v1303 = vunpack.c.l.b16 %v960
        %v1304 = vunpack.c.h.b16 %v960
        %v1305 = vunpack.c.l.b16 %v961
        %v1306 = vunpack.c.h.b16 %v961
        %v1307 = vunpack.c.l.b16 %v962
        %v1308 = vunpack.c.h.b16 %v962
        %v1309 = vunpack.c.l.b16 %v963
        %v1310 = vunpack.c.h.b16 %v963
        %v1311 = vunpack.c.l.b16 %v964
        %v1312 = vunpack.c.h.b16 %v964
        %v1313 = vunpack.c.l.b16 %v965
        %v1314 = vunpack.c.h.b16 %v965
        %v1315 = vunpack.c.l.b16 %v966
        %v1316 = vunpack.c.h.b16 %v966
        %v1317 = vunpack.c.l.b16 %v967
        %v1318 = vunpack.c.h.b16 %v967
        %v1319 = vunpack.c.l.b16 %v968
        %v1320 = vunpack.c.h.b16 %v968
        %v1321 = vunpack.c.l.b16 %v969
        %v1322 = vunpack.c.h.b16 %v969
        %v1323 = vunpack.c.l.b16 %v970
        %v1324 = vunpack.c.h.b16 %v970
        %v1325 = vunpack.c.l.b16 %v971
        %v1326 = vunpack.c.h.b16 %v971
        %v1327 = vunpack.c.l.b16 %v972
        %v1328 = vunpack.c.h.b16 %v972
        %v1329 = vunpack.c.l.b16 %v973
        %v1330 = vunpack.c.h.b16 %v973
        %v1331 = vunpack.c.l.b16 %v974
        %v1332 = vunpack.c.h.b16 %v974
        %v1333 = vunpack.c.l.b16 %v975
        %v1334 = vunpack.c.h.b16 %v975
        %v1335 = vunpack.c.l.b16 %v976
        %v1336 = vunpack.c.h.b16 %v976
        %v1337 = vunpack.c.l.b16 %v977
        %v1338 = vunpack.c.h.b16 %v977
        %v1339 = vunpack.c.l.b16 %v978
        %v1340 = vunpack.c.h.b16 %v978
        %v1341 = vunpack.c.l.b16 %v979
        %v1342 = vunpack.c.h.b16 %v979
        %v1343 = vunpack.c.l.b16 %v980
        %v1344 = vunpack.c.h.b16 %v980
        %v1345 = vunpack.c.l.b16 %v981
        %v1346 = vunpack.c.h.b16 %v981
        %v1347 = vunpack.c.l.b16 %v982
        %v1348 = vunpack.c.h.b16 %v982
        %v1349 = vunpack.c.l.b16 %v983
        %v1350 = vunpack.c.h.b16 %v983
        %v1351 = vunpack.c.l.b16 %v984
        %v1352 = vunpack.c.h.b16 %v984
        %v1353 = vunpack.c.l.b16 %v985
        %v1354 = vunpack.c.h.b16 %v985
        %v1355 = vunpack.c.l.b16 %v986
        %v1356 = vunpack.c.h.b16 %v986
        %v1357 = vunpack.c.l.b16 %v987
        %v1358 = vunpack.c.h.b16 %v987
        %v1359 = vunpack.c.l.b16 %v988
        %v1360 = vunpack.c.h.b16 %v988
        %v1361 = vunpack.c.l.b16 %v989
        %v1362 = vunpack.c.h.b16 %v989
        %v1363 = vunpack.c.l.b16 %v990
        %v1364 = vunpack.c.h.b16 %v990
        %v1365 = vunpack.c.l.b16 %v991
        %v1366 = vunpack.c.h.b16 %v991
        %v1367 = vunpack.c.l.b16 %v992
        %v1368 = vunpack.c.h.b16 %v992
        %v1369 = vunpack.c.l.b16 %v993
        %v1370 = vunpack.c.h.b16 %v993
        %v1371 = vunpack.c.l.b16 %v994
        %v1372 = vunpack.c.h.b16 %v994
        %v1373 = vunpack.c.l.b16 %v995
        %v1374 = vunpack.c.h.b16 %v995
        %v1375 = vunpack.c.l.b16 %v996
        %v1376 = vunpack.c.h.b16 %v996
        %v1377 = vunpack.c.l.b16 %v997
        %v1378 = vunpack.c.h.b16 %v997
        %v1379 = vunpack.c.l.b16 %v998
        %v1380 = vunpack.c.h.b16 %v998
        %v1381 = vunpack.c.l.b16 %v999
        %v1382 = vunpack.c.h.b16 %v999
        %v1383 = vunpack.c.l.b16 %v1000
        %v1384 = vunpack.c.h.b16 %v1000
        %v1385 = vunpack.c.l.b16 %v1001
        %v1386 = vunpack.c.h.b16 %v1001
        %v1387 = vunpack.c.l.b16 %v1002
        %v1388 = vunpack.c.h.b16 %v1002
        %v1389 = vunpack.c.l.b16 %v1003
        %v1390 = vunpack.c.h.b16 %v1003
        %v1391 = vunpack.c.l.b16 %v1004
        %v1392 = vunpack.c.h.b16 %v1004
        %v1393 = vunpack.c.l.b16 %v1005
        %v1394 = vunpack.c.h.b16 %v1005
        %v1395 = vunpack.c.l.b16 %v1006
        %v1396 = vunpack.c.h.b16 %v1006
        %v1397 = vunpack.c.l.b16 %v1007
        %v1398 = vunpack.c.h.b16 %v1007
        %v1399 = vunpack.c.l.b16 %v1008
        %v1400 = vunpack.c.h.b16 %v1008
        %v1401 = vunpack.c.l.b16 %v1009
        %v1402 = vunpack.c.h.b16 %v1009
        %v1403 = vunpack.c.l.b16 %v1010
        %v1404 = vunpack.c.h.b16 %v1010
        %v1405 = vunpack.c.l.b16 %v1011
        %v1406 = vunpack.c.h.b16 %v1011
        %v1407 = vunpack.c.l.b16 %v1012
        %v1408 = vunpack.c.h.b16 %v1012
        %v1409 = vunpack.c.l.b16 %v1013
        %v1410 = vunpack.c.h.b16 %v1013
        %v1411 = vunpack.c.l.b16 %v1014
        %v1412 = vunpack.c.h.b16 %v1014
        %v1413 = vunpack.c.l.b16 %v1015
        %v1414 = vunpack.c.h.b16 %v1015
        %v1415 = vunpack.c.l.b16 %v1016
        %v1416 = vunpack.c.h.b16 %v1016
        %v1417 = vunpack.c.l.b16 %v1017
        %v1418 = vunpack.c.h.b16 %v1017
        %v1419 = vunpack.c.l.b16 %v1018
        %v1420 = vunpack.c.h.b16 %v1018
        %v1421 = vunpack.c.l.b16 %v1019
        %v1422 = vunpack.c.h.b16 %v1019
        %v1423 = vunpack.c.l.b16 %v1020
        %v1424 = vunpack.c.h.b16 %v1020
        %v1425 = vunpack.c.l.b16 %v1021
        %v1426 = vunpack.c.h.b16 %v1021
        %v1427 = vunpack.c.l.b16 %v1022
        %v1428 = vunpack.c.h.b16 %v1022
        %v1429 = vunpack.c.l.b16 %v1023
        %v1430 = vunpack.c.h.b16 %v1023
        %v1431 = vunpack.c.l.b16 %v1024
        %v1432 = vunpack.c.h.b16 %v1024
        %v1433 = vunpack.c.l.b16 %v1025
        %v1434 = vunpack.c.h.b16 %v1025
        %v1435 = vunpack.c.l.b16 %v1026
        %v1436 = vunpack.c.h.b16 %v1026
        %v1437 = vunpack.c.l.b16 %v1027
        %v1438 = vunpack.c.h.b16 %v1027
        %v1439 = vunpack.c.l.b16 %v1028
        %v1440 = vunpack.c.h.b16 %v1028
        %v1441 = vunpack.c.l.b16 %v1029
        %v1442 = vunpack.c.h.b16 %v1029
        %v1443 = vunpack.c.l.b16 %v1030
        %v1444 = vunpack.c.h.b16 %v1030
        %v1445 = vunpack.c.l.b16 %v1031
        %v1446 = vunpack.c.h.b16 %v1031
        %v1447 = vunpack.c.l.b16 %v1032
        %v1448 = vunpack.c.h.b16 %v1032
        %v1449 = vunpack.c.l.b16 %v1033
        %v1450 = vunpack.c.h.b16 %v1033
        %v1451 = vunpack.c.l.b16 %v1034
        %v1452 = vunpack.c.h.b16 %v1034
        %v1453 = vunpack.c.l.b16 %v1035
        %v1454 = vunpack.c.h.b16 %v1035
        %v1455 = vunpack.c.l.b16 %v1036
        %v1456 = vunpack.c.h.b16 %v1036
        %v1457 = vunpack.c.l.b16 %v1037
        %v1458 = vunpack.c.h.b16 %v1037
        %v1459 = vunpack.c.l.b16 %v1038
        %v1460 = vunpack.c.h.b16 %v1038
        %v1461 = vunpack.c.l.b16 %v1039
        %v1462 = vunpack.c.h.b16 %v1039
        %v1463 = vunpack.c.l.b16 %v1040
        %v1464 = vunpack.c.h.b16 %v1040
        %v1465 = vunpack.c.l.b16 %v1041
        %v1466 = vunpack.c.h.b16 %v1041
        %v1467 = vunpack.c.l.b16 %v1042
        %v1468 = vunpack.c.h.b16 %v1042
        %v1469 = vunpack.c.l.b16 %v1043
        %v1470 = vunpack.c.h.b16 %v1043
        %v1471 = vunpack.c.l.b16 %v1044
        %v1472 = vunpack.c.h.b16 %v1044
        %v1473 = vunpack.c.l.b16 %v1045
        %v1474 = vunpack.c.h.b16 %v1045
        %v1475 = vunpack.c.l.b16 %v1046
        %v1476 = vunpack.c.h.b16 %v1046
        %v1477 = vunpack.c.l.b16 %v1047
        %v1478 = vunpack.c.h.b16 %v1047
        %v1479 = vunpack.c.l.b16 %v1048
        %v1480 = vunpack.c.h.b16 %v1048
        %v1481 = vunpack.c.l.b16 %v1049
        %v1482 = vunpack.c.h.b16 %v1049
        %v1483 = vunpack.c.l.b16 %v1050
        %v1484 = vunpack.c.h.b16 %v1050
        %v1485 = vunpack.c.l.b16 %v1051
        %v1486 = vunpack.c.h.b16 %v1051
        %v1487 = vunpack.c.l.b16 %v1052
        %v1488 = vunpack.c.h.b16 %v1052
        %v1489 = vunpack.c.l.b16 %v1053
        %v1490 = vunpack.c.h.b16 %v1053
        %v1491 = vunpack.c.l.b16 %v1054
        %v1492 = vunpack.c.h.b16 %v1054
        %v1493 = vunpack.c.l.b16 %v1055
        %v1494 = vunpack.c.h.b16 %v1055
        %v1495 = vunpack.c.l.b16 %v1056
        %v1496 = vunpack.c.h.b16 %v1056
        %v1497 = vunpack.c.l.b16 %v1057
        %v1498 = vunpack.c.h.b16 %v1057
        %v1499 = vunpack.c.l.b16 %v1058
        %v1500 = vunpack.c.h.b16 %v1058
        %v1501 = vunpack.c.l.b16 %v1059
        %v1502 = vunpack.c.h.b16 %v1059
        %v1503 = vunpack.c.l.b16 %v1060
        %v1504 = vunpack.c.h.b16 %v1060
        %v1505 = vunpack.c.l.b16 %v1061
        %v1506 = vunpack.c.h.b16 %v1061
        %v1507 = vunpack.c.l.b16 %v1062
        %v1508 = vunpack.c.h.b16 %v1062
        %v1509 = vunpack.c.l.b16 %v1063
        %v1510 = vunpack.c.h.b16 %v1063
        %v1511 = vunpack.c.l.b16 %v1064
        %v1512 = vunpack.c.h.b16 %v1064
        %v1513 = vpack.c.b16 %v1261, %v1257
        %v1514 = vpack.c.b16 %v1262, %v1258
        %v1515 = vpack.c.b16 %v1263, %v1259
        %v1516 = vpack.c.b16 %v1264, %v1260
        %v1517 = vpack.c.b16 %v1269, %v1265
        %v1518 = vpack.c.b16 %v1270, %v1266
        %v1519 = vpack.c.b16 %v1271, %v1267
        %v1520 = vpack.c.b16 %v1272, %v1268
        %v1521 = vpack.c.b16 %v1277, %v1273
        %v1522 = vpack.c.b16 %v1278, %v1274
        %v1523 = vpack.c.b16 %v1279, %v1275
        %v1524 = vpack.c.b16 %v1280, %v1276
        %v1525 = vpack.c.b16 %v1285, %v1281
        %v1526 = vpack.c.b16 %v1286, %v1282
        %v1527 = vpack.c.b16 %v1287, %v1283
        %v1528 = vpack.c.b16 %v1288, %v1284
        %v1529 = vpack.c.b16 %v1293, %v1289
        %v1530 = vpack.c.b16 %v1294, %v1290
        %v1531 = vpack.c.b16 %v1295, %v1291
        %v1532 = vpack.c.b16 %v1296, %v1292
        %v1533 = vpack.c.b16 %v1301, %v1297
        %v1534 = vpack.c.b16 %v1302, %v1298
        %v1535 = vpack.c.b16 %v1303, %v1299
        %v1536 = vpack.c.b16 %v1304, %v1300
        %v1537 = vpack.c.b16 %v1309, %v1305
        %v1538 = vpack.c.b16 %v1310, %v1306
        %v1539 = vpack.c.b16 %v1311, %v1307
        %v1540 = vpack.c.b16 %v1312, %v1308
        %v1541 = vpack.c.b16 %v1317, %v1313
        %v1542 = vpack.c.b16 %v1318, %v1314
        %v1543 = vpack.c.b16 %v1319, %v1315
        %v1544 = vpack.c.b16 %v1320, %v1316
        %v1545 = vpack.c.b16 %v1325, %v1321
        %v1546 = vpack.c.b16 %v1326, %v1322
        %v1547 = vpack.c.b16 %v1327, %v1323
        %v1548 = vpack.c.b16 %v1328, %v1324
        %v1549 = vpack.c.b16 %v1333, %v1329
        %v1550 = vpack.c.b16 %v1334, %v1330
        %v1551 = vpack.c.b16 %v1335, %v1331
        %v1552 = vpack.c.b16 %v1336, %v1332
        %v1553 = vpack.c.b16 %v1341, %v1337
        %v1554 = vpack.c.b16 %v1342, %v1338
        %v1555 = vpack.c.b16 %v1343, %v1339
        %v1556 = vpack.c.b16 %v1344, %v1340
        %v1557 = vpack.c.b16 %v1349, %v1345
        %v1558 = vpack.c.b16 %v1350, %v1346
        %v1559 = vpack.c.b16 %v1351, %v1347
        %v1560 = vpack.c.b16 %v1352, %v1348
        %v1561 = vpack.c.b16 %v1357, %v1353
        %v1562 = vpack.c.b16 %v1358, %v1354
        %v1563 = vpack.c.b16 %v1359, %v1355
        %v1564 = vpack.c.b16 %v1360, %v1356
        %v1565 = vpack.c.b16 %v1365, %v1361
        %v1566 = vpack.c.b16 %v1366, %v1362
        %v1567 = vpack.c.b16 %v1367, %v1363
        %v1568 = vpack.c.b16 %v1368, %v1364
        %v1569 = vpack.c.b16 %v1373, %v1369
        %v1570 = vpack.c.b16 %v1374, %v1370
        %v1571 = vpack.c.b16 %v1375, %v1371
        %v1572 = vpack.c.b16 %v1376, %v1372
        %v1573 = vpack.c.b16 %v1381, %v1377
        %v1574 = vpack.c.b16 %v1382, %v1378
        %v1575 = vpack.c.b16 %v1383, %v1379
        %v1576 = vpack.c.b16 %v1384, %v1380
        %v1577 = vpack.c.b16 %v1389, %v1385
        %v1578 = vpack.c.b16 %v1390, %v1386
        %v1579 = vpack.c.b16 %v1391, %v1387
        %v1580 = vpack.c.b16 %v1392, %v1388
        %v1581 = vpack.c.b16 %v1397, %v1393
        %v1582 = vpack.c.b16 %v1398, %v1394
        %v1583 = vpack.c.b16 %v1399, %v1395
        %v1584 = vpack.c.b16 %v1400, %v1396
        %v1585 = vpack.c.b16 %v1405, %v1401
        %v1586 = vpack.c.b16 %v1406, %v1402
        %v1587 = vpack.c.b16 %v1407, %v1403
        %v1588 = vpack.c.b16 %v1408, %v1404
        %v1589 = vpack.c.b16 %v1413, %v1409
        %v1590 = vpack.c.b16 %v1414, %v1410
        %v1591 = vpack.c.b16 %v1415, %v1411
        %v1592 = vpack.c.b16 %v1416, %v1412
        %v1593 = vpack.c.b16 %v1421, %v1417
        %v1594 = vpack.c.b16 %v1422, %v1418
        %v1595 = vpack.c.b16 %v1423, %v1419
        %v1596 = vpack.c.b16 %v1424, %v1420
        %v1597 = vpack.c.b16 %v1429, %v1425
        %v1598 = vpack.c.b16 %v1430, %v1426
        %v1599 = vpack.c.b16 %v1431, %v1427
        %v1600 = vpack.c.b16 %v1432, %v1428
        %v1601 = vpack.c.b16 %v1437, %v1433
        %v1602 = vpack.c.b16 %v1438, %v1434
        %v1603 = vpack.c.b16 %v1439, %v1435
        %v1604 = vpack.c.b16 %v1440, %v1436
        %v1605 = vpack.c.b16 %v1445, %v1441
        %v1606 = vpack.c.b16 %v1446, %v1442
        %v1607 = vpack.c.b16 %v1447, %v1443
        %v1608 = vpack.c.b16 %v1448, %v1444
        %v1609 = vpack.c.b16 %v1453, %v1449
        %v1610 = vpack.c.b16 %v1454, %v1450
        %v1611 = vpack.c.b16 %v1455, %v1451
        %v1612 = vpack.c.b16 %v1456, %v1452
        %v1613 = vpack.c.b16 %v1461, %v1457
        %v1614 = vpack.c.b16 %v1462, %v1458
        %v1615 = vpack.c.b16 %v1463, %v1459
        %v1616 = vpack.c.b16 %v1464, %v1460
        %v1617 = vpack.c.b16 %v1469, %v1465
        %v1618 = vpack.c.b16 %v1470, %v1466
        %v1619 = vpack.c.b16 %v1471, %v1467
        %v1620 = vpack.c.b16 %v1472, %v1468
        %v1621 = vpack.c.b16 %v1477, %v1473
        %v1622 = vpack.c.b16 %v1478, %v1474
        %v1623 = vpack.c.b16 %v1479, %v1475
        %v1624 = vpack.c.b16 %v1480, %v1476
        %v1625 = vpack.c.b16 %v1485, %v1481
        %v1626 = vpack.c.b16 %v1486, %v1482
        %v1627 = vpack.c.b16 %v1487, %v1483
        %v1628 = vpack.c.b16 %v1488, %v1484
        %v1629 = vpack.c.b16 %v1493, %v1489
        %v1630 = vpack.c.b16 %v1494, %v1490
        %v1631 = vpack.c.b16 %v1495, %v1491
        %v1632 = vpack.c.b16 %v1496, %v1492
        %v1633 = vpack.c.b16 %v1501, %v1497
        %v1634 = vpack.c.b16 %v1502, %v1498
        %v1635 = vpack.c.b16 %v1503, %v1499
        %v1636 = vpack.c.b16 %v1504, %v1500
        %v1637 = vpack.c.b16 %v1509, %v1505
        %v1638 = vpack.c.b16 %v1510, %v1506
        %v1639 = vpack.c.b16 %v1511, %v1507
        %v1640 = vpack.c.b16 %v1512, %v1508
        %1769 = vmatprep.subr.bf16.mxu0 0
        %1770 = vmatpush1.bf16.msra.mxu0 %v905
        %1771 = vmatprep.subr.bf16.mxu0 0
        %1772 = vmatpush1.bf16.msra.mxu0 %v906
        %1773 = vmatprep.subr.bf16.mxu0 0
        %1774 = vmatpush1.bf16.msra.mxu0 %v907
        %1775 = vmatprep.subr.bf16.mxu0 0
        %1776 = vmatpush1.bf16.msra.mxu0 %v908
        %1777 = vmatprep.subr.bf16.mxu0 0
        %1778 = vmatpush1.bf16.msra.mxu0 %v909
        %1779 = vmatprep.subr.bf16.mxu0 0
        %1780 = vmatpush1.bf16.msra.mxu0 %v910
        %1781 = vmatprep.subr.bf16.mxu0 0
        %1782 = vmatpush1.bf16.msra.mxu0 %v911
        %1783 = vmatprep.subr.bf16.mxu0 0
        %1784 = vmatpush1.bf16.msra.mxu0 %v912
        %1785 = vmatprep.subr.bf16.mxu0 0
        %1786 = vmatpush1.bf16.msra.mxu0 %v913
        %1787 = vmatprep.subr.bf16.mxu0 0
        %1788 = vmatpush1.bf16.msra.mxu0 %v914
        %1789 = vmatprep.subr.bf16.mxu0 0
        %1790 = vmatpush1.bf16.msra.mxu0 %v915
        %1791 = vmatprep.subr.bf16.mxu0 0
        %1792 = vmatpush1.bf16.msra.mxu0 %v916
        %1793 = vmatprep.subr.bf16.mxu0 0
        %1794 = vmatpush1.bf16.msra.mxu0 %v917
        %1795 = vmatprep.subr.bf16.mxu0 0
        %1796 = vmatpush1.bf16.msra.mxu0 %v918
        %1797 = vmatprep.subr.bf16.mxu0 0
        %1798 = vmatpush1.bf16.msra.mxu0 %v919
        %1799 = vmatprep.subr.bf16.mxu0 0
        %1800 = vmatpush1.bf16.msra.mxu0 %v920
        %1801 = vmatprep.mubr.bf16.mxu0 %v1514
        %1802 = vmatmul.mubr.bf16.gmra.mrb[0].mxu0 %v1513
        %v1803 = vpop.f32.mrb[0].mxu0
        %v1804 = vadd.f32 %v1065, %v1803
        %v1805 = vpop.f32.mrb[0].mxu0
        %v1806 = vpop.f32.mrb[0].mxu0
        %v1807 = vadd.f32 %v1066, %v1806
        %v1808 = vpop.f32.mrb[0].mxu0
        %1809 = vmatprep.mubr.bf16.mxu0 %v1518
        %1810 = vmatmul.mubr.bf16.gmra.mrb[0].mxu0 %v1517
        %v1811 = vpop.f32.mrb[0].mxu0
        %v1812 = vadd.f32 %v1067, %v1811
        %v1813 = vpop.f32.mrb[0].mxu0
        %v1814 = vpop.f32.mrb[0].mxu0
        %v1815 = vadd.f32 %v1068, %v1814
        %v1816 = vpop.f32.mrb[0].mxu0
        %1817 = vmatprep.mubr.bf16.mxu0 %v1522
        %1818 = vmatmul.mubr.bf16.gmra.mrb[0].mxu0 %v1521
        %v1819 = vpop.f32.mrb[0].mxu0
        %v1820 = vadd.f32 %v1069, %v1819
        %v1821 = vpop.f32.mrb[0].mxu0
        %v1822 = vpop.f32.mrb[0].mxu0
        %v1823 = vadd.f32 %v1070, %v1822
        %v1824 = vpop.f32.mrb[0].mxu0
        %1825 = vmatprep.mubr.bf16.mxu0 %v1526
        %1826 = vmatmul.mubr.bf16.gmra.mrb[0].mxu0 %v1525
        %v1827 = vpop.f32.mrb[0].mxu0
        %v1828 = vadd.f32 %v1071, %v1827
        %v1829 = vpop.f32.mrb[0].mxu0
        %v1830 = vpop.f32.mrb[0].mxu0
        %v1831 = vadd.f32 %v1072, %v1830
        %v1832 = vpop.f32.mrb[0].mxu0
        %1833 = vmatprep.mubr.bf16.mxu0 %v1530
        %1834 = vmatmul.mubr.bf16.gmra.mrb[0].mxu0 %v1529
        %v1835 = vpop.f32.mrb[0].mxu0
        %v1836 = vadd.f32 %v1073, %v1835
        %v1837 = vpop.f32.mrb[0].mxu0
        %v1838 = vpop.f32.mrb[0].mxu0
        %v1839 = vadd.f32 %v1074, %v1838
        %v1840 = vpop.f32.mrb[0].mxu0
        %1841 = vmatprep.mubr.bf16.mxu0 %v1534
        %1842 = vmatmul.mubr.bf16.gmra.mrb[0].mxu0 %v1533
        %v1843 = vpop.f32.mrb[0].mxu0
        %v1844 = vadd.f32 %v1075, %v1843
        %v1845 = vpop.f32.mrb[0].mxu0
        %v1846 = vpop.f32.mrb[0].mxu0
        %v1847 = vadd.f32 %v1076, %v1846
        %v1848 = vpop.f32.mrb[0].mxu0
        %1849 = vmatprep.mubr.bf16.mxu0 %v1538
        %1850 = vmatmul.mubr.bf16.gmra.mrb[0].mxu0 %v1537
        %v1851 = vpop.f32.mrb[0].mxu0
        %v1852 = vadd.f32 %v1077, %v1851
        %v1853 = vpop.f32.mrb[0].mxu0
        %v1854 = vpop.f32.mrb[0].mxu0
        %v1855 = vadd.f32 %v1078, %v1854
        %v1856 = vpop.f32.mrb[0].mxu0
        %1857 = vmatprep.mubr.bf16.mxu0 %v1542
        %1858 = vmatmul.mubr.bf16.gmra.mrb[0].mxu0 %v1541
        %v1859 = vpop.f32.mrb[0].mxu0
        %v1860 = vadd.f32 %v1079, %v1859
        %v1861 = vpop.f32.mrb[0].mxu0
        %v1862 = vpop.f32.mrb[0].mxu0
        %v1863 = vadd.f32 %v1080, %v1862
        %v1864 = vpop.f32.mrb[0].mxu0
        %1865 = vmatprep.mubr.bf16.mxu0 %v1546
        %1866 = vmatmul.mubr.bf16.gmra.mrb[0].mxu0 %v1545
        %v1867 = vpop.f32.mrb[0].mxu0
        %v1868 = vadd.f32 %v1081, %v1867
        %v1869 = vpop.f32.mrb[0].mxu0
        %v1870 = vpop.f32.mrb[0].mxu0
        %v1871 = vadd.f32 %v1082, %v1870
        %v1872 = vpop.f32.mrb[0].mxu0
        %1873 = vmatprep.mubr.bf16.mxu0 %v1550
        %1874 = vmatmul.mubr.bf16.gmra.mrb[0].mxu0 %v1549
        %v1875 = vpop.f32.mrb[0].mxu0
        %v1876 = vadd.f32 %v1083, %v1875
        %v1877 = vpop.f32.mrb[0].mxu0
        %v1878 = vpop.f32.mrb[0].mxu0
        %v1879 = vadd.f32 %v1084, %v1878
        %v1880 = vpop.f32.mrb[0].mxu0
        %1881 = vmatprep.mubr.bf16.mxu0 %v1554
        %1882 = vmatmul.mubr.bf16.gmra.mrb[0].mxu0 %v1553
        %v1883 = vpop.f32.mrb[0].mxu0
        %v1884 = vadd.f32 %v1085, %v1883
        %v1885 = vpop.f32.mrb[0].mxu0
        %v1886 = vpop.f32.mrb[0].mxu0
        %v1887 = vadd.f32 %v1086, %v1886
        %v1888 = vpop.f32.mrb[0].mxu0
        %1889 = vmatprep.mubr.bf16.mxu0 %v1558
        %1890 = vmatmul.mubr.bf16.gmra.mrb[0].mxu0 %v1557
        %v1891 = vpop.f32.mrb[0].mxu0
        %v1892 = vadd.f32 %v1087, %v1891
        %v1893 = vpop.f32.mrb[0].mxu0
        %v1894 = vpop.f32.mrb[0].mxu0
        %v1895 = vadd.f32 %v1088, %v1894
        %v1896 = vpop.f32.mrb[0].mxu0
        %1897 = vmatprep.mubr.bf16.mxu0 %v1562
        %1898 = vmatmul.mubr.bf16.gmra.mrb[0].mxu0 %v1561
        %v1899 = vpop.f32.mrb[0].mxu0
        %v1900 = vadd.f32 %v1089, %v1899
        %v1901 = vpop.f32.mrb[0].mxu0
        %v1902 = vpop.f32.mrb[0].mxu0
        %v1903 = vadd.f32 %v1090, %v1902
        %v1904 = vpop.f32.mrb[0].mxu0
        %1905 = vmatprep.mubr.bf16.mxu0 %v1566
        %1906 = vmatmul.mubr.bf16.gmra.mrb[0].mxu0 %v1565
        %v1907 = vpop.f32.mrb[0].mxu0
        %v1908 = vadd.f32 %v1091, %v1907
        %v1909 = vpop.f32.mrb[0].mxu0
        %v1910 = vpop.f32.mrb[0].mxu0
        %v1911 = vadd.f32 %v1092, %v1910
        %v1912 = vpop.f32.mrb[0].mxu0
        %1913 = vmatprep.mubr.bf16.mxu0 %v1570
        %1914 = vmatmul.mubr.bf16.gmra.mrb[0].mxu0 %v1569
        %v1915 = vpop.f32.mrb[0].mxu0
        %v1916 = vadd.f32 %v1093, %v1915
        %v1917 = vpop.f32.mrb[0].mxu0
        %v1918 = vpop.f32.mrb[0].mxu0
        %v1919 = vadd.f32 %v1094, %v1918
        %v1920 = vpop.f32.mrb[0].mxu0
        %1921 = vmatprep.mubr.bf16.mxu0 %v1574
        %1922 = vmatmul.mubr.bf16.gmra.mrb[0].mxu0 %v1573
        %v1923 = vpop.f32.mrb[0].mxu0
        %v1924 = vadd.f32 %v1095, %v1923
        %v1925 = vpop.f32.mrb[0].mxu0
        %v1926 = vpop.f32.mrb[0].mxu0
        %v1927 = vadd.f32 %v1096, %v1926
        %v1928 = vpop.f32.mrb[0].mxu0
        %1929 = vmatprep.mubr.bf16.mxu0 %v1578
        %1930 = vmatmul.mubr.bf16.gmra.mrb[0].mxu0 %v1577
        %v1931 = vpop.f32.mrb[0].mxu0
        %v1932 = vadd.f32 %v1097, %v1931
        %v1933 = vpop.f32.mrb[0].mxu0
        %v1934 = vpop.f32.mrb[0].mxu0
        %v1935 = vadd.f32 %v1098, %v1934
        %v1936 = vpop.f32.mrb[0].mxu0
        %1937 = vmatprep.mubr.bf16.mxu0 %v1582
        %1938 = vmatmul.mubr.bf16.gmra.mrb[0].mxu0 %v1581
        %v1939 = vpop.f32.mrb[0].mxu0
        %v1940 = vadd.f32 %v1099, %v1939
        %v1941 = vpop.f32.mrb[0].mxu0
        %v1942 = vpop.f32.mrb[0].mxu0
        %v1943 = vadd.f32 %v1100, %v1942
        %v1944 = vpop.f32.mrb[0].mxu0
        %1945 = vmatprep.mubr.bf16.mxu0 %v1586
        %1946 = vmatmul.mubr.bf16.gmra.mrb[0].mxu0 %v1585
        %v1947 = vpop.f32.mrb[0].mxu0
        %v1948 = vadd.f32 %v1101, %v1947
        %v1949 = vpop.f32.mrb[0].mxu0
        %v1950 = vpop.f32.mrb[0].mxu0
        %v1951 = vadd.f32 %v1102, %v1950
        %v1952 = vpop.f32.mrb[0].mxu0
        %1953 = vmatprep.mubr.bf16.mxu0 %v1590
        %1954 = vmatmul.mubr.bf16.gmra.mrb[0].mxu0 %v1589
        %v1955 = vpop.f32.mrb[0].mxu0
        %v1956 = vadd.f32 %v1103, %v1955
        %v1957 = vpop.f32.mrb[0].mxu0
        %v1958 = vpop.f32.mrb[0].mxu0
        %v1959 = vadd.f32 %v1104, %v1958
        %v1960 = vpop.f32.mrb[0].mxu0
        %1961 = vmatprep.mubr.bf16.mxu0 %v1594
        %1962 = vmatmul.mubr.bf16.gmra.mrb[0].mxu0 %v1593
        %v1963 = vpop.f32.mrb[0].mxu0
        %v1964 = vadd.f32 %v1105, %v1963
        %v1965 = vpop.f32.mrb[0].mxu0
        %v1966 = vpop.f32.mrb[0].mxu0
        %v1967 = vadd.f32 %v1106, %v1966
        %v1968 = vpop.f32.mrb[0].mxu0
        %1969 = vmatprep.mubr.bf16.mxu0 %v1598
        %1970 = vmatmul.mubr.bf16.gmra.mrb[0].mxu0 %v1597
        %v1971 = vpop.f32.mrb[0].mxu0
        %v1972 = vadd.f32 %v1107, %v1971
        %v1973 = vpop.f32.mrb[0].mxu0
        %v1974 = vpop.f32.mrb[0].mxu0
        %v1975 = vadd.f32 %v1108, %v1974
        %v1976 = vpop.f32.mrb[0].mxu0
        %1977 = vmatprep.mubr.bf16.mxu0 %v1602
        %1978 = vmatmul.mubr.bf16.gmra.mrb[0].mxu0 %v1601
        %v1979 = vpop.f32.mrb[0].mxu0
        %v1980 = vadd.f32 %v1109, %v1979
        %v1981 = vpop.f32.mrb[0].mxu0
        %v1982 = vpop.f32.mrb[0].mxu0
        %v1983 = vadd.f32 %v1110, %v1982
        %v1984 = vpop.f32.mrb[0].mxu0
        %1985 = vmatprep.mubr.bf16.mxu0 %v1606
        %1986 = vmatmul.mubr.bf16.gmra.mrb[0].mxu0 %v1605
        %v1987 = vpop.f32.mrb[0].mxu0
        %v1988 = vadd.f32 %v1111, %v1987
        %v1989 = vpop.f32.mrb[0].mxu0
        %v1990 = vpop.f32.mrb[0].mxu0
        %v1991 = vadd.f32 %v1112, %v1990
        %v1992 = vpop.f32.mrb[0].mxu0
        %1993 = vmatprep.mubr.bf16.mxu0 %v1610
        %1994 = vmatmul.mubr.bf16.gmra.mrb[0].mxu0 %v1609
        %v1995 = vpop.f32.mrb[0].mxu0
        %v1996 = vadd.f32 %v1113, %v1995
        %v1997 = vpop.f32.mrb[0].mxu0
        %v1998 = vpop.f32.mrb[0].mxu0
        %v1999 = vadd.f32 %v1114, %v1998
        %v2000 = vpop.f32.mrb[0].mxu0
        %2001 = vmatprep.mubr.bf16.mxu0 %v1614
        %2002 = vmatmul.mubr.bf16.gmra.mrb[0].mxu0 %v1613
        %v2003 = vpop.f32.mrb[0].mxu0
        %v2004 = vadd.f32 %v1115, %v2003
        %v2005 = vpop.f32.mrb[0].mxu0
        %v2006 = vpop.f32.mrb[0].mxu0
        %v2007 = vadd.f32 %v1116, %v2006
        %v2008 = vpop.f32.mrb[0].mxu0
        %2009 = vmatprep.mubr.bf16.mxu0 %v1618
        %2010 = vmatmul.mubr.bf16.gmra.mrb[0].mxu0 %v1617
        %v2011 = vpop.f32.mrb[0].mxu0
        %v2012 = vadd.f32 %v1117, %v2011
        %v2013 = vpop.f32.mrb[0].mxu0
        %v2014 = vpop.f32.mrb[0].mxu0
        %v2015 = vadd.f32 %v1118, %v2014
        %v2016 = vpop.f32.mrb[0].mxu0
        %2017 = vmatprep.mubr.bf16.mxu0 %v1622
        %2018 = vmatmul.mubr.bf16.gmra.mrb[0].mxu0 %v1621
        %v2019 = vpop.f32.mrb[0].mxu0
        %v2020 = vadd.f32 %v1119, %v2019
        %v2021 = vpop.f32.mrb[0].mxu0
        %v2022 = vpop.f32.mrb[0].mxu0
        %v2023 = vadd.f32 %v1120, %v2022
        %v2024 = vpop.f32.mrb[0].mxu0
        %2025 = vmatprep.mubr.bf16.mxu0 %v1626
        %2026 = vmatmul.mubr.bf16.gmra.mrb[0].mxu0 %v1625
        %v2027 = vpop.f32.mrb[0].mxu0
        %v2028 = vadd.f32 %v1121, %v2027
        %v2029 = vpop.f32.mrb[0].mxu0
        %v2030 = vpop.f32.mrb[0].mxu0
        %v2031 = vadd.f32 %v1122, %v2030
        %v2032 = vpop.f32.mrb[0].mxu0
        %2033 = vmatprep.mubr.bf16.mxu0 %v1630
        %2034 = vmatmul.mubr.bf16.gmra.mrb[0].mxu0 %v1629
        %v2035 = vpop.f32.mrb[0].mxu0
        %v2036 = vadd.f32 %v1123, %v2035
        %v2037 = vpop.f32.mrb[0].mxu0
        %v2038 = vpop.f32.mrb[0].mxu0
        %v2039 = vadd.f32 %v1124, %v2038
        %v2040 = vpop.f32.mrb[0].mxu0
        %2041 = vmatprep.mubr.bf16.mxu0 %v1634
        %2042 = vmatmul.mubr.bf16.gmra.mrb[0].mxu0 %v1633
        %v2043 = vpop.f32.mrb[0].mxu0
        %v2044 = vadd.f32 %v1125, %v2043
        %v2045 = vpop.f32.mrb[0].mxu0
        %v2046 = vpop.f32.mrb[0].mxu0
        %v2047 = vadd.f32 %v1126, %v2046
        %v2048 = vpop.f32.mrb[0].mxu0
        %2049 = vmatprep.mubr.bf16.mxu0 %v1638
        %2050 = vmatmul.mubr.bf16.gmra.mrb[0].mxu0 %v1637
        %v2051 = vpop.f32.mrb[0].mxu0
        %v2052 = vadd.f32 %v1127, %v2051
        %v2053 = vpop.f32.mrb[0].mxu0
        %v2054 = vpop.f32.mrb[0].mxu0
        %v2055 = vadd.f32 %v1128, %v2054
        %v2056 = vpop.f32.mrb[0].mxu0
        %2057 = vdwg.mxu0
        %2058 = vmatprep.subr.bf16.mxu0 0
        %2059 = vmatpush1.bf16.msra.mxu0 %v921
        %2060 = vmatprep.subr.bf16.mxu0 0
        %2061 = vmatpush1.bf16.msra.mxu0 %v922
        %2062 = vmatprep.subr.bf16.mxu0 0
        %2063 = vmatpush1.bf16.msra.mxu0 %v923
        %2064 = vmatprep.subr.bf16.mxu0 0
        %2065 = vmatpush1.bf16.msra.mxu0 %v924
        %2066 = vmatprep.subr.bf16.mxu0 0
        %2067 = vmatpush1.bf16.msra.mxu0 %v925
        %2068 = vmatprep.subr.bf16.mxu0 0
        %2069 = vmatpush1.bf16.msra.mxu0 %v926
        %2070 = vmatprep.subr.bf16.mxu0 0
        %2071 = vmatpush1.bf16.msra.mxu0 %v927
        %2072 = vmatprep.subr.bf16.mxu0 0
        %2073 = vmatpush1.bf16.msra.mxu0 %v928
        %2074 = vmatprep.subr.bf16.mxu0 0
        %2075 = vmatpush1.bf16.msra.mxu0 %v929
        %2076 = vmatprep.subr.bf16.mxu0 0
        %2077 = vmatpush1.bf16.msra.mxu0 %v930
        %2078 = vmatprep.subr.bf16.mxu0 0
        %2079 = vmatpush1.bf16.msra.mxu0 %v931
        %2080 = vmatprep.subr.bf16.mxu0 0
        %2081 = vmatpush1.bf16.msra.mxu0 %v932
        %2082 = vmatprep.subr.bf16.mxu0 0
        %2083 = vmatpush1.bf16.msra.mxu0 %v933
        %2084 = vmatprep.subr.bf16.mxu0 0
        %2085 = vmatpush1.bf16.msra.mxu0 %v934
        %2086 = vmatprep.subr.bf16.mxu0 0
        %2087 = vmatpush1.bf16.msra.mxu0 %v935
        %2088 = vmatprep.subr.bf16.mxu0 0
        %2089 = vmatpush1.bf16.msra.mxu0 %v936
        %2090 = vmatprep.mubr.bf16.mxu0 %v1516
        %2091 = vmatmul.mubr.bf16.gmra.mrb[0].mxu0 %v1515
        %v2092 = vpop.f32.mrb[0].mxu0
        %v2093 = vadd.f32 %v1804, %v2092
        %v2094 = vpop.f32.mrb[0].mxu0
        %v2095 = vpop.f32.mrb[0].mxu0
        %v2096 = vadd.f32 %v1807, %v2095
        %v2097 = vpop.f32.mrb[0].mxu0
        %2098 = vmatprep.mubr.bf16.mxu0 %v1520
        %2099 = vmatmul.mubr.bf16.gmra.mrb[0].mxu0 %v1519
        %v2100 = vpop.f32.mrb[0].mxu0
        %v2101 = vadd.f32 %v1812, %v2100
        %v2102 = vpop.f32.mrb[0].mxu0
        %v2103 = vpop.f32.mrb[0].mxu0
        %v2104 = vadd.f32 %v1815, %v2103
        %v2105 = vpop.f32.mrb[0].mxu0
        %2106 = vmatprep.mubr.bf16.mxu0 %v1524
        %2107 = vmatmul.mubr.bf16.gmra.mrb[0].mxu0 %v1523
        %v2108 = vpop.f32.mrb[0].mxu0
        %v2109 = vadd.f32 %v1820, %v2108
        %v2110 = vpop.f32.mrb[0].mxu0
        %v2111 = vpop.f32.mrb[0].mxu0
        %v2112 = vadd.f32 %v1823, %v2111
        %v2113 = vpop.f32.mrb[0].mxu0
        %2114 = vmatprep.mubr.bf16.mxu0 %v1528
        %2115 = vmatmul.mubr.bf16.gmra.mrb[0].mxu0 %v1527
        %v2116 = vpop.f32.mrb[0].mxu0
        %v2117 = vadd.f32 %v1828, %v2116
        %v2118 = vpop.f32.mrb[0].mxu0
        %v2119 = vpop.f32.mrb[0].mxu0
        %v2120 = vadd.f32 %v1831, %v2119
        %v2121 = vpop.f32.mrb[0].mxu0
        %2122 = vmatprep.mubr.bf16.mxu0 %v1532
        %2123 = vmatmul.mubr.bf16.gmra.mrb[0].mxu0 %v1531
        %v2124 = vpop.f32.mrb[0].mxu0
        %v2125 = vadd.f32 %v1836, %v2124
        %v2126 = vpop.f32.mrb[0].mxu0
        %v2127 = vpop.f32.mrb[0].mxu0
        %v2128 = vadd.f32 %v1839, %v2127
        %v2129 = vpop.f32.mrb[0].mxu0
        %2130 = vmatprep.mubr.bf16.mxu0 %v1536
        %2131 = vmatmul.mubr.bf16.gmra.mrb[0].mxu0 %v1535
        %v2132 = vpop.f32.mrb[0].mxu0
        %v2133 = vadd.f32 %v1844, %v2132
        %v2134 = vpop.f32.mrb[0].mxu0
        %v2135 = vpop.f32.mrb[0].mxu0
        %v2136 = vadd.f32 %v1847, %v2135
        %v2137 = vpop.f32.mrb[0].mxu0
        %2138 = vmatprep.mubr.bf16.mxu0 %v1540
        %2139 = vmatmul.mubr.bf16.gmra.mrb[0].mxu0 %v1539
        %v2140 = vpop.f32.mrb[0].mxu0
        %v2141 = vadd.f32 %v1852, %v2140
        %v2142 = vpop.f32.mrb[0].mxu0
        %v2143 = vpop.f32.mrb[0].mxu0
        %v2144 = vadd.f32 %v1855, %v2143
        %v2145 = vpop.f32.mrb[0].mxu0
        %2146 = vmatprep.mubr.bf16.mxu0 %v1544
        %2147 = vmatmul.mubr.bf16.gmra.mrb[0].mxu0 %v1543
        %v2148 = vpop.f32.mrb[0].mxu0
        %v2149 = vadd.f32 %v1860, %v2148
        %v2150 = vpop.f32.mrb[0].mxu0
        %v2151 = vpop.f32.mrb[0].mxu0
        %v2152 = vadd.f32 %v1863, %v2151
        %v2153 = vpop.f32.mrb[0].mxu0
        %2154 = vmatprep.mubr.bf16.mxu0 %v1548
        %2155 = vmatmul.mubr.bf16.gmra.mrb[0].mxu0 %v1547
        %v2156 = vpop.f32.mrb[0].mxu0
        %v2157 = vadd.f32 %v1868, %v2156
        %v2158 = vpop.f32.mrb[0].mxu0
        %v2159 = vpop.f32.mrb[0].mxu0
        %v2160 = vadd.f32 %v1871, %v2159
        %v2161 = vpop.f32.mrb[0].mxu0
        %2162 = vmatprep.mubr.bf16.mxu0 %v1552
        %2163 = vmatmul.mubr.bf16.gmra.mrb[0].mxu0 %v1551
        %v2164 = vpop.f32.mrb[0].mxu0
        %v2165 = vadd.f32 %v1876, %v2164
        %v2166 = vpop.f32.mrb[0].mxu0
        %v2167 = vpop.f32.mrb[0].mxu0
        %v2168 = vadd.f32 %v1879, %v2167
        %v2169 = vpop.f32.mrb[0].mxu0
        %2170 = vmatprep.mubr.bf16.mxu0 %v1556
        %2171 = vmatmul.mubr.bf16.gmra.mrb[0].mxu0 %v1555
        %v2172 = vpop.f32.mrb[0].mxu0
        %v2173 = vadd.f32 %v1884, %v2172
        %v2174 = vpop.f32.mrb[0].mxu0
        %v2175 = vpop.f32.mrb[0].mxu0
        %v2176 = vadd.f32 %v1887, %v2175
        %v2177 = vpop.f32.mrb[0].mxu0
        %2178 = vmatprep.mubr.bf16.mxu0 %v1560
        %2179 = vmatmul.mubr.bf16.gmra.mrb[0].mxu0 %v1559
        %v2180 = vpop.f32.mrb[0].mxu0
        %v2181 = vadd.f32 %v1892, %v2180
        %v2182 = vpop.f32.mrb[0].mxu0
        %v2183 = vpop.f32.mrb[0].mxu0
        %v2184 = vadd.f32 %v1895, %v2183
        %v2185 = vpop.f32.mrb[0].mxu0
        %2186 = vmatprep.mubr.bf16.mxu0 %v1564
        %2187 = vmatmul.mubr.bf16.gmra.mrb[0].mxu0 %v1563
        %v2188 = vpop.f32.mrb[0].mxu0
        %v2189 = vadd.f32 %v1900, %v2188
        %v2190 = vpop.f32.mrb[0].mxu0
        %v2191 = vpop.f32.mrb[0].mxu0
        %v2192 = vadd.f32 %v1903, %v2191
        %v2193 = vpop.f32.mrb[0].mxu0
        %2194 = vmatprep.mubr.bf16.mxu0 %v1568
        %2195 = vmatmul.mubr.bf16.gmra.mrb[0].mxu0 %v1567
        %v2196 = vpop.f32.mrb[0].mxu0
        %v2197 = vadd.f32 %v1908, %v2196
        %v2198 = vpop.f32.mrb[0].mxu0
        %v2199 = vpop.f32.mrb[0].mxu0
        %v2200 = vadd.f32 %v1911, %v2199
        %v2201 = vpop.f32.mrb[0].mxu0
        %2202 = vmatprep.mubr.bf16.mxu0 %v1572
        %2203 = vmatmul.mubr.bf16.gmra.mrb[0].mxu0 %v1571
        %v2204 = vpop.f32.mrb[0].mxu0
        %v2205 = vadd.f32 %v1916, %v2204
        %v2206 = vpop.f32.mrb[0].mxu0
        %v2207 = vpop.f32.mrb[0].mxu0
        %v2208 = vadd.f32 %v1919, %v2207
        %v2209 = vpop.f32.mrb[0].mxu0
        %2210 = vmatprep.mubr.bf16.mxu0 %v1576
        %2211 = vmatmul.mubr.bf16.gmra.mrb[0].mxu0 %v1575
        %v2212 = vpop.f32.mrb[0].mxu0
        %v2213 = vadd.f32 %v1924, %v2212
        %v2214 = vpop.f32.mrb[0].mxu0
        %v2215 = vpop.f32.mrb[0].mxu0
        %v2216 = vadd.f32 %v1927, %v2215
        %v2217 = vpop.f32.mrb[0].mxu0
        %2218 = vmatprep.mubr.bf16.mxu0 %v1580
        %2219 = vmatmul.mubr.bf16.gmra.mrb[0].mxu0 %v1579
        %v2220 = vpop.f32.mrb[0].mxu0
        %v2221 = vadd.f32 %v1932, %v2220
        %v2222 = vpop.f32.mrb[0].mxu0
        %v2223 = vpop.f32.mrb[0].mxu0
        %v2224 = vadd.f32 %v1935, %v2223
        %v2225 = vpop.f32.mrb[0].mxu0
        %2226 = vmatprep.mubr.bf16.mxu0 %v1584
        %2227 = vmatmul.mubr.bf16.gmra.mrb[0].mxu0 %v1583
        %v2228 = vpop.f32.mrb[0].mxu0
        %v2229 = vadd.f32 %v1940, %v2228
        %v2230 = vpop.f32.mrb[0].mxu0
        %v2231 = vpop.f32.mrb[0].mxu0
        %v2232 = vadd.f32 %v1943, %v2231
        %v2233 = vpop.f32.mrb[0].mxu0
        %2234 = vmatprep.mubr.bf16.mxu0 %v1588
        %2235 = vmatmul.mubr.bf16.gmra.mrb[0].mxu0 %v1587
        %v2236 = vpop.f32.mrb[0].mxu0
        %v2237 = vadd.f32 %v1948, %v2236
        %v2238 = vpop.f32.mrb[0].mxu0
        %v2239 = vpop.f32.mrb[0].mxu0
        %v2240 = vadd.f32 %v1951, %v2239
        %v2241 = vpop.f32.mrb[0].mxu0
        %2242 = vmatprep.mubr.bf16.mxu0 %v1592
        %2243 = vmatmul.mubr.bf16.gmra.mrb[0].mxu0 %v1591
        %v2244 = vpop.f32.mrb[0].mxu0
        %v2245 = vadd.f32 %v1956, %v2244
        %v2246 = vpop.f32.mrb[0].mxu0
        %v2247 = vpop.f32.mrb[0].mxu0
        %v2248 = vadd.f32 %v1959, %v2247
        %v2249 = vpop.f32.mrb[0].mxu0
        %2250 = vmatprep.mubr.bf16.mxu0 %v1596
        %2251 = vmatmul.mubr.bf16.gmra.mrb[0].mxu0 %v1595
        %v2252 = vpop.f32.mrb[0].mxu0
        %v2253 = vadd.f32 %v1964, %v2252
        %v2254 = vpop.f32.mrb[0].mxu0
        %v2255 = vpop.f32.mrb[0].mxu0
        %v2256 = vadd.f32 %v1967, %v2255
        %v2257 = vpop.f32.mrb[0].mxu0
        %2258 = vmatprep.mubr.bf16.mxu0 %v1600
        %2259 = vmatmul.mubr.bf16.gmra.mrb[0].mxu0 %v1599
        %v2260 = vpop.f32.mrb[0].mxu0
        %v2261 = vadd.f32 %v1972, %v2260
        %v2262 = vpop.f32.mrb[0].mxu0
        %v2263 = vpop.f32.mrb[0].mxu0
        %v2264 = vadd.f32 %v1975, %v2263
        %v2265 = vpop.f32.mrb[0].mxu0
        %2266 = vmatprep.mubr.bf16.mxu0 %v1604
        %2267 = vmatmul.mubr.bf16.gmra.mrb[0].mxu0 %v1603
        %v2268 = vpop.f32.mrb[0].mxu0
        %v2269 = vadd.f32 %v1980, %v2268
        %v2270 = vpop.f32.mrb[0].mxu0
        %v2271 = vpop.f32.mrb[0].mxu0
        %v2272 = vadd.f32 %v1983, %v2271
        %v2273 = vpop.f32.mrb[0].mxu0
        %2274 = vmatprep.mubr.bf16.mxu0 %v1608
        %2275 = vmatmul.mubr.bf16.gmra.mrb[0].mxu0 %v1607
        %v2276 = vpop.f32.mrb[0].mxu0
        %v2277 = vadd.f32 %v1988, %v2276
        %v2278 = vpop.f32.mrb[0].mxu0
        %v2279 = vpop.f32.mrb[0].mxu0
        %v2280 = vadd.f32 %v1991, %v2279
        %v2281 = vpop.f32.mrb[0].mxu0
        %2282 = vmatprep.mubr.bf16.mxu0 %v1612
        %2283 = vmatmul.mubr.bf16.gmra.mrb[0].mxu0 %v1611
        %v2284 = vpop.f32.mrb[0].mxu0
        %v2285 = vadd.f32 %v1996, %v2284
        %v2286 = vpop.f32.mrb[0].mxu0
        %v2287 = vpop.f32.mrb[0].mxu0
        %v2288 = vadd.f32 %v1999, %v2287
        %v2289 = vpop.f32.mrb[0].mxu0
        %2290 = vmatprep.mubr.bf16.mxu0 %v1616
        %2291 = vmatmul.mubr.bf16.gmra.mrb[0].mxu0 %v1615
        %v2292 = vpop.f32.mrb[0].mxu0
        %v2293 = vadd.f32 %v2004, %v2292
        %v2294 = vpop.f32.mrb[0].mxu0
        %v2295 = vpop.f32.mrb[0].mxu0
        %v2296 = vadd.f32 %v2007, %v2295
        %v2297 = vpop.f32.mrb[0].mxu0
        %2298 = vmatprep.mubr.bf16.mxu0 %v1620
        %2299 = vmatmul.mubr.bf16.gmra.mrb[0].mxu0 %v1619
        %v2300 = vpop.f32.mrb[0].mxu0
        %v2301 = vadd.f32 %v2012, %v2300
        %v2302 = vpop.f32.mrb[0].mxu0
        %v2303 = vpop.f32.mrb[0].mxu0
        %v2304 = vadd.f32 %v2015, %v2303
        %v2305 = vpop.f32.mrb[0].mxu0
        %2306 = vmatprep.mubr.bf16.mxu0 %v1624
        %2307 = vmatmul.mubr.bf16.gmra.mrb[0].mxu0 %v1623
        %v2308 = vpop.f32.mrb[0].mxu0
        %v2309 = vadd.f32 %v2020, %v2308
        %v2310 = vpop.f32.mrb[0].mxu0
        %v2311 = vpop.f32.mrb[0].mxu0
        %v2312 = vadd.f32 %v2023, %v2311
        %v2313 = vpop.f32.mrb[0].mxu0
        %2314 = vmatprep.mubr.bf16.mxu0 %v1628
        %2315 = vmatmul.mubr.bf16.gmra.mrb[0].mxu0 %v1627
        %v2316 = vpop.f32.mrb[0].mxu0
        %v2317 = vadd.f32 %v2028, %v2316
        %v2318 = vpop.f32.mrb[0].mxu0
        %v2319 = vpop.f32.mrb[0].mxu0
        %v2320 = vadd.f32 %v2031, %v2319
        %v2321 = vpop.f32.mrb[0].mxu0
        %2322 = vmatprep.mubr.bf16.mxu0 %v1632
        %2323 = vmatmul.mubr.bf16.gmra.mrb[0].mxu0 %v1631
        %v2324 = vpop.f32.mrb[0].mxu0
        %v2325 = vadd.f32 %v2036, %v2324
        %v2326 = vpop.f32.mrb[0].mxu0
        %v2327 = vpop.f32.mrb[0].mxu0
        %v2328 = vadd.f32 %v2039, %v2327
        %v2329 = vpop.f32.mrb[0].mxu0
        %2330 = vmatprep.mubr.bf16.mxu0 %v1636
        %2331 = vmatmul.mubr.bf16.gmra.mrb[0].mxu0 %v1635
        %v2332 = vpop.f32.mrb[0].mxu0
        %v2333 = vadd.f32 %v2044, %v2332
        %v2334 = vpop.f32.mrb[0].mxu0
        %v2335 = vpop.f32.mrb[0].mxu0
        %v2336 = vadd.f32 %v2047, %v2335
        %v2337 = vpop.f32.mrb[0].mxu0
        %2338 = vmatprep.mubr.bf16.mxu0 %v1640
        %2339 = vmatmul.mubr.bf16.gmra.mrb[0].mxu0 %v1639
        %v2340 = vpop.f32.mrb[0].mxu0
        %v2341 = vadd.f32 %v2052, %v2340
        %v2342 = vpop.f32.mrb[0].mxu0
        %v2343 = vpop.f32.mrb[0].mxu0
        %v2344 = vadd.f32 %v2055, %v2343
        %v2345 = vpop.f32.mrb[0].mxu0
        %2346 = vdwg.mxu0
        %v2347 = vpack.c.bf16 %v2096, %v2093
        %v2348 = vpack.c.bf16 %v2104, %v2101
        %v2349 = vpack.c.bf16 %v2112, %v2109
        %v2350 = vpack.c.bf16 %v2120, %v2117
        %v2351 = vpack.c.bf16 %v2128, %v2125
        %v2352 = vpack.c.bf16 %v2136, %v2133
        %v2353 = vpack.c.bf16 %v2144, %v2141
        %v2354 = vpack.c.bf16 %v2152, %v2149
        %v2355 = vpack.c.bf16 %v2160, %v2157
        %v2356 = vpack.c.bf16 %v2168, %v2165
        %v2357 = vpack.c.bf16 %v2176, %v2173
        %v2358 = vpack.c.bf16 %v2184, %v2181
        %v2359 = vpack.c.bf16 %v2192, %v2189
        %v2360 = vpack.c.bf16 %v2200, %v2197
        %v2361 = vpack.c.bf16 %v2208, %v2205
        %v2362 = vpack.c.bf16 %v2216, %v2213
        %v2363 = vpack.c.bf16 %v2224, %v2221
        %v2364 = vpack.c.bf16 %v2232, %v2229
        %v2365 = vpack.c.bf16 %v2240, %v2237
        %v2366 = vpack.c.bf16 %v2248, %v2245
        %v2367 = vpack.c.bf16 %v2256, %v2253
        %v2368 = vpack.c.bf16 %v2264, %v2261
        %v2369 = vpack.c.bf16 %v2272, %v2269
        %v2370 = vpack.c.bf16 %v2280, %v2277
        %v2371 = vpack.c.bf16 %v2288, %v2285
        %v2372 = vpack.c.bf16 %v2296, %v2293
        %v2373 = vpack.c.bf16 %v2304, %v2301
        %v2374 = vpack.c.bf16 %v2312, %v2309
        %v2375 = vpack.c.bf16 %v2320, %v2317
        %v2376 = vpack.c.bf16 %v2328, %v2325
        %v2377 = vpack.c.bf16 %v2336, %v2333
        %v2378 = vpack.c.bf16 %v2344, %v2341
        %v2379 = vld [vmem:[%s532] sm:$0xf]
        %v2380 = vld [vmem:[%s532 + $0x4] sm:$0xf]
        %v2381 = vld [vmem:[%s532 + $0x8] sm:$0xf]
        %v2382 = vld [vmem:[%s532 + $0xc] sm:$0xf]
        %v2383 = vld [vmem:[%s532 + $0x10] sm:$0xf]
        %v2384 = vld [vmem:[%s532 + $0x14] sm:$0xf]
        %v2385 = vld [vmem:[%s532 + $0x18] sm:$0xf]
        %v2386 = vld [vmem:[%s532 + $0x1c] sm:$0xf]
        %v2387 = vld [vmem:[%s532 + $0x20] sm:$0xf]
        %v2388 = vld [vmem:[%s532 + $0x24] sm:$0xf]
        %v2389 = vld [vmem:[%s532 + $0x28] sm:$0xf]
        %v2390 = vld [vmem:[%s532 + $0x2c] sm:$0xf]
        %v2391 = vld [vmem:[%s532 + $0x30] sm:$0xf]
        %v2392 = vld [vmem:[%s532 + $0x34] sm:$0xf]
        %v2393 = vld [vmem:[%s532 + $0x38] sm:$0xf]
        %v2394 = vld [vmem:[%s532 + $0x3c] sm:$0xf]
        %v2395 = vld [vmem:[%s608] sm:$0x1]
        %v2397 = vlaneseq
        %v2398 = vshrl.u32 %v2397, 7
        %v2399 = vsub.s32 0, %v2398
        %v2400 = vrot.slane %v2395, %v2399
        %v2418 = vunpack.c.l.b16 %v2379
        %v2419 = vunpack.c.l.b16 %v2380
        %v2420 = vunpack.c.l.b16 %v2381
        %v2421 = vunpack.c.l.b16 %v2382
        %v2422 = vunpack.c.l.b16 %v2383
        %v2423 = vunpack.c.l.b16 %v2384
        %v2424 = vunpack.c.l.b16 %v2385
        %v2425 = vunpack.c.l.b16 %v2386
        %v2426 = vunpack.c.l.b16 %v2387
        %v2427 = vunpack.c.l.b16 %v2388
        %v2428 = vunpack.c.l.b16 %v2389
        %v2429 = vunpack.c.l.b16 %v2390
        %v2430 = vunpack.c.l.b16 %v2391
        %v2431 = vunpack.c.l.b16 %v2392
        %v2432 = vunpack.c.l.b16 %v2393
        %v2433 = vunpack.c.l.b16 %v2394
        %v2434 = vpack.c.b16 %v2419, %v2418
        %v2435 = vpack.c.b16 %v2421, %v2420
        %v2436 = vpack.c.b16 %v2423, %v2422
        %v2437 = vpack.c.b16 %v2425, %v2424
        %v2438 = vpack.c.b16 %v2427, %v2426
        %v2439 = vpack.c.b16 %v2429, %v2428
        %v2440 = vpack.c.b16 %v2431, %v2430
        %v2441 = vpack.c.b16 %v2433, %v2432
        %2450 = vmatprep.subr.bf16.mxu0 0
        %2451 = vmatpush1.bf16.msra.mxu0 %v2434
        %2452 = vmatprep.subr.bf16.mxu0 0
        %2453 = vmatpush1.bf16.msra.mxu0 %v2435
        %2454 = vmatprep.subr.bf16.mxu0 0
        %2455 = vmatpush1.bf16.msra.mxu0 %v2436
        %2456 = vmatprep.subr.bf16.mxu0 0
        %2457 = vmatpush1.bf16.msra.mxu0 %v2437
        %2458 = vmatprep.subr.bf16.mxu0 0
        %2459 = vmatpush1.bf16.msra.mxu0 %v2438
        %2460 = vmatprep.subr.bf16.mxu0 0
        %2461 = vmatpush1.bf16.msra.mxu0 %v2439
        %2462 = vmatprep.subr.bf16.mxu0 0
        %2463 = vmatpush1.bf16.msra.mxu0 %v2440
        %2464 = vmatprep.subr.bf16.mxu0 0
        %2465 = vmatpush1.bf16.msra.mxu0 %v2441
        %2466 = vmatprep.subr.bf16.mxu0 0
        %2467 = vmatpush1.bf16.msra.mxu0 0
        %2468 = vmatprep.subr.bf16.mxu0 0
        %2469 = vmatpush1.bf16.msra.mxu0 0
        %2470 = vmatprep.subr.bf16.mxu0 0
        %2471 = vmatpush1.bf16.msra.mxu0 0
        %2472 = vmatprep.subr.bf16.mxu0 0
        %2473 = vmatpush1.bf16.msra.mxu0 0
        %2474 = vmatprep.subr.bf16.mxu0 0
        %2475 = vmatpush1.bf16.msra.mxu0 0
        %2476 = vmatprep.subr.bf16.mxu0 0
        %2477 = vmatpush1.bf16.msra.mxu0 0
        %2478 = vmatprep.subr.bf16.mxu0 0
        %2479 = vmatpush1.bf16.msra.mxu0 0
        %2480 = vmatprep.subr.bf16.mxu0 0
        %2481 = vmatpush1.bf16.msra.mxu0 0
        %2482 = vmatprep.mubr.bf16.mxu0 0
        %2483 = vmatmul.mubr.bf16.gmra.mrb[0].mxu0 %v2347
        %v2484 = vpop.f32.mrb[0].mxu0
        %v2485 = vadd.f32 %v2400, %v2484
        %v2486 = vpop.f32.mrb[0].mxu0
        %v2487 = vpop.f32.mrb[0].mxu0
        %v2488 = vadd.f32 %v2400, %v2487
        %v2489 = vpop.f32.mrb[0].mxu0
        %2490 = vmatprep.mubr.bf16.mxu0 0
        %2491 = vmatmul.mubr.bf16.gmra.mrb[0].mxu0 %v2348
        %v2492 = vpop.f32.mrb[0].mxu0
        %v2493 = vadd.f32 %v2400, %v2492
        %v2494 = vpop.f32.mrb[0].mxu0
        %v2495 = vpop.f32.mrb[0].mxu0
        %v2496 = vadd.f32 %v2400, %v2495
        %v2497 = vpop.f32.mrb[0].mxu0
        %2498 = vmatprep.mubr.bf16.mxu0 0
        %2499 = vmatmul.mubr.bf16.gmra.mrb[0].mxu0 %v2349
        %v2500 = vpop.f32.mrb[0].mxu0
        %v2501 = vadd.f32 %v2400, %v2500
        %v2502 = vpop.f32.mrb[0].mxu0
        %v2503 = vpop.f32.mrb[0].mxu0
        %v2504 = vadd.f32 %v2400, %v2503
        %v2505 = vpop.f32.mrb[0].mxu0
        %2506 = vmatprep.mubr.bf16.mxu0 0
        %2507 = vmatmul.mubr.bf16.gmra.mrb[0].mxu0 %v2350
        %v2508 = vpop.f32.mrb[0].mxu0
        %v2509 = vadd.f32 %v2400, %v2508
        %v2510 = vpop.f32.mrb[0].mxu0
        %v2511 = vpop.f32.mrb[0].mxu0
        %v2512 = vadd.f32 %v2400, %v2511
        %v2513 = vpop.f32.mrb[0].mxu0
        %2514 = vmatprep.mubr.bf16.mxu0 0
        %2515 = vmatmul.mubr.bf16.gmra.mrb[0].mxu0 %v2351
        %v2516 = vpop.f32.mrb[0].mxu0
        %v2517 = vadd.f32 %v2400, %v2516
        %v2518 = vpop.f32.mrb[0].mxu0
        %v2519 = vpop.f32.mrb[0].mxu0
        %v2520 = vadd.f32 %v2400, %v2519
        %v2521 = vpop.f32.mrb[0].mxu0
        %2522 = vmatprep.mubr.bf16.mxu0 0
        %2523 = vmatmul.mubr.bf16.gmra.mrb[0].mxu0 %v2352
        %v2524 = vpop.f32.mrb[0].mxu0
        %v2525 = vadd.f32 %v2400, %v2524
        %v2526 = vpop.f32.mrb[0].mxu0
        %v2527 = vpop.f32.mrb[0].mxu0
        %v2528 = vadd.f32 %v2400, %v2527
        %v2529 = vpop.f32.mrb[0].mxu0
        %2530 = vmatprep.mubr.bf16.mxu0 0
        %2531 = vmatmul.mubr.bf16.gmra.mrb[0].mxu0 %v2353
        %v2532 = vpop.f32.mrb[0].mxu0
        %v2533 = vadd.f32 %v2400, %v2532
        %v2534 = vpop.f32.mrb[0].mxu0
        %v2535 = vpop.f32.mrb[0].mxu0
        %v2536 = vadd.f32 %v2400, %v2535
        %v2537 = vpop.f32.mrb[0].mxu0
        %2538 = vmatprep.mubr.bf16.mxu0 0
        %2539 = vmatmul.mubr.bf16.gmra.mrb[0].mxu0 %v2354
        %v2540 = vpop.f32.mrb[0].mxu0
        %v2541 = vadd.f32 %v2400, %v2540
        %v2542 = vpop.f32.mrb[0].mxu0
        %v2543 = vpop.f32.mrb[0].mxu0
        %v2544 = vadd.f32 %v2400, %v2543
        %v2545 = vpop.f32.mrb[0].mxu0
        %2546 = vmatprep.mubr.bf16.mxu0 0
        %2547 = vmatmul.mubr.bf16.gmra.mrb[0].mxu0 %v2355
        %v2548 = vpop.f32.mrb[0].mxu0
        %v2549 = vadd.f32 %v2400, %v2548
        %v2550 = vpop.f32.mrb[0].mxu0
        %v2551 = vpop.f32.mrb[0].mxu0
        %v2552 = vadd.f32 %v2400, %v2551
        %v2553 = vpop.f32.mrb[0].mxu0
        %2554 = vmatprep.mubr.bf16.mxu0 0
        %2555 = vmatmul.mubr.bf16.gmra.mrb[0].mxu0 %v2356
        %v2556 = vpop.f32.mrb[0].mxu0
        %v2557 = vadd.f32 %v2400, %v2556
        %v2558 = vpop.f32.mrb[0].mxu0
        %v2559 = vpop.f32.mrb[0].mxu0
        %v2560 = vadd.f32 %v2400, %v2559
        %v2561 = vpop.f32.mrb[0].mxu0
        %2562 = vmatprep.mubr.bf16.mxu0 0
        %2563 = vmatmul.mubr.bf16.gmra.mrb[0].mxu0 %v2357
        %v2564 = vpop.f32.mrb[0].mxu0
        %v2565 = vadd.f32 %v2400, %v2564
        %v2566 = vpop.f32.mrb[0].mxu0
        %v2567 = vpop.f32.mrb[0].mxu0
        %v2568 = vadd.f32 %v2400, %v2567
        %v2569 = vpop.f32.mrb[0].mxu0
        %2570 = vmatprep.mubr.bf16.mxu0 0
        %2571 = vmatmul.mubr.bf16.gmra.mrb[0].mxu0 %v2358
        %v2572 = vpop.f32.mrb[0].mxu0
        %v2573 = vadd.f32 %v2400, %v2572
        %v2574 = vpop.f32.mrb[0].mxu0
        %v2575 = vpop.f32.mrb[0].mxu0
        %v2576 = vadd.f32 %v2400, %v2575
        %v2577 = vpop.f32.mrb[0].mxu0
        %2578 = vmatprep.mubr.bf16.mxu0 0
        %2579 = vmatmul.mubr.bf16.gmra.mrb[0].mxu0 %v2359
        %v2580 = vpop.f32.mrb[0].mxu0
        %v2581 = vadd.f32 %v2400, %v2580
        %v2582 = vpop.f32.mrb[0].mxu0
        %v2583 = vpop.f32.mrb[0].mxu0
        %v2584 = vadd.f32 %v2400, %v2583
        %v2585 = vpop.f32.mrb[0].mxu0
        %2586 = vmatprep.mubr.bf16.mxu0 0
        %2587 = vmatmul.mubr.bf16.gmra.mrb[0].mxu0 %v2360
        %v2588 = vpop.f32.mrb[0].mxu0
        %v2589 = vadd.f32 %v2400, %v2588
        %v2590 = vpop.f32.mrb[0].mxu0
        %v2591 = vpop.f32.mrb[0].mxu0
        %v2592 = vadd.f32 %v2400, %v2591
        %v2593 = vpop.f32.mrb[0].mxu0
        %2594 = vmatprep.mubr.bf16.mxu0 0
        %2595 = vmatmul.mubr.bf16.gmra.mrb[0].mxu0 %v2361
        %v2596 = vpop.f32.mrb[0].mxu0
        %v2597 = vadd.f32 %v2400, %v2596
        %v2598 = vpop.f32.mrb[0].mxu0
        %v2599 = vpop.f32.mrb[0].mxu0
        %v2600 = vadd.f32 %v2400, %v2599
        %v2601 = vpop.f32.mrb[0].mxu0
        %2602 = vmatprep.mubr.bf16.mxu0 0
        %2603 = vmatmul.mubr.bf16.gmra.mrb[0].mxu0 %v2362
        %v2604 = vpop.f32.mrb[0].mxu0
        %v2605 = vadd.f32 %v2400, %v2604
        %v2606 = vpop.f32.mrb[0].mxu0
        %v2607 = vpop.f32.mrb[0].mxu0
        %v2608 = vadd.f32 %v2400, %v2607
        %v2609 = vpop.f32.mrb[0].mxu0
        %2610 = vmatprep.mubr.bf16.mxu0 0
        %2611 = vmatmul.mubr.bf16.gmra.mrb[0].mxu0 %v2363
        %v2612 = vpop.f32.mrb[0].mxu0
        %v2613 = vadd.f32 %v2400, %v2612
        %v2614 = vpop.f32.mrb[0].mxu0
        %v2615 = vpop.f32.mrb[0].mxu0
        %v2616 = vadd.f32 %v2400, %v2615
        %v2617 = vpop.f32.mrb[0].mxu0
        %2618 = vmatprep.mubr.bf16.mxu0 0
        %2619 = vmatmul.mubr.bf16.gmra.mrb[0].mxu0 %v2364
        %v2620 = vpop.f32.mrb[0].mxu0
        %v2621 = vadd.f32 %v2400, %v2620
        %v2622 = vpop.f32.mrb[0].mxu0
        %v2623 = vpop.f32.mrb[0].mxu0
        %v2624 = vadd.f32 %v2400, %v2623
        %v2625 = vpop.f32.mrb[0].mxu0
        %2626 = vmatprep.mubr.bf16.mxu0 0
        %2627 = vmatmul.mubr.bf16.gmra.mrb[0].mxu0 %v2365
        %v2628 = vpop.f32.mrb[0].mxu0
        %v2629 = vadd.f32 %v2400, %v2628
        %v2630 = vpop.f32.mrb[0].mxu0
        %v2631 = vpop.f32.mrb[0].mxu0
        %v2632 = vadd.f32 %v2400, %v2631
        %v2633 = vpop.f32.mrb[0].mxu0
        %2634 = vmatprep.mubr.bf16.mxu0 0
        %2635 = vmatmul.mubr.bf16.gmra.mrb[0].mxu0 %v2366
        %v2636 = vpop.f32.mrb[0].mxu0
        %v2637 = vadd.f32 %v2400, %v2636
        %v2638 = vpop.f32.mrb[0].mxu0
        %v2639 = vpop.f32.mrb[0].mxu0
        %v2640 = vadd.f32 %v2400, %v2639
        %v2641 = vpop.f32.mrb[0].mxu0
        %2642 = vmatprep.mubr.bf16.mxu0 0
        %2643 = vmatmul.mubr.bf16.gmra.mrb[0].mxu0 %v2367
        %v2644 = vpop.f32.mrb[0].mxu0
        %v2645 = vadd.f32 %v2400, %v2644
        %v2646 = vpop.f32.mrb[0].mxu0
        %v2647 = vpop.f32.mrb[0].mxu0
        %v2648 = vadd.f32 %v2400, %v2647
        %v2649 = vpop.f32.mrb[0].mxu0
        %2650 = vmatprep.mubr.bf16.mxu0 0
        %2651 = vmatmul.mubr.bf16.gmra.mrb[0].mxu0 %v2368
        %v2652 = vpop.f32.mrb[0].mxu0
        %v2653 = vadd.f32 %v2400, %v2652
        %v2654 = vpop.f32.mrb[0].mxu0
        %v2655 = vpop.f32.mrb[0].mxu0
        %v2656 = vadd.f32 %v2400, %v2655
        %v2657 = vpop.f32.mrb[0].mxu0
        %2658 = vmatprep.mubr.bf16.mxu0 0
        %2659 = vmatmul.mubr.bf16.gmra.mrb[0].mxu0 %v2369
        %v2660 = vpop.f32.mrb[0].mxu0
        %v2661 = vadd.f32 %v2400, %v2660
        %v2662 = vpop.f32.mrb[0].mxu0
        %v2663 = vpop.f32.mrb[0].mxu0
        %v2664 = vadd.f32 %v2400, %v2663
        %v2665 = vpop.f32.mrb[0].mxu0
        %2666 = vmatprep.mubr.bf16.mxu0 0
        %2667 = vmatmul.mubr.bf16.gmra.mrb[0].mxu0 %v2370
        %v2668 = vpop.f32.mrb[0].mxu0
        %v2669 = vadd.f32 %v2400, %v2668
        %v2670 = vpop.f32.mrb[0].mxu0
        %v2671 = vpop.f32.mrb[0].mxu0
        %v2672 = vadd.f32 %v2400, %v2671
        %v2673 = vpop.f32.mrb[0].mxu0
        %2674 = vmatprep.mubr.bf16.mxu0 0
        %2675 = vmatmul.mubr.bf16.gmra.mrb[0].mxu0 %v2371
        %v2676 = vpop.f32.mrb[0].mxu0
        %v2677 = vadd.f32 %v2400, %v2676
        %v2678 = vpop.f32.mrb[0].mxu0
        %v2679 = vpop.f32.mrb[0].mxu0
        %v2680 = vadd.f32 %v2400, %v2679
        %v2681 = vpop.f32.mrb[0].mxu0
        %2682 = vmatprep.mubr.bf16.mxu0 0
        %2683 = vmatmul.mubr.bf16.gmra.mrb[0].mxu0 %v2372
        %v2684 = vpop.f32.mrb[0].mxu0
        %v2685 = vadd.f32 %v2400, %v2684
        %v2686 = vpop.f32.mrb[0].mxu0
        %v2687 = vpop.f32.mrb[0].mxu0
        %v2688 = vadd.f32 %v2400, %v2687
        %v2689 = vpop.f32.mrb[0].mxu0
        %2690 = vmatprep.mubr.bf16.mxu0 0
        %2691 = vmatmul.mubr.bf16.gmra.mrb[0].mxu0 %v2373
        %v2692 = vpop.f32.mrb[0].mxu0
        %v2693 = vadd.f32 %v2400, %v2692
        %v2694 = vpop.f32.mrb[0].mxu0
        %v2695 = vpop.f32.mrb[0].mxu0
        %v2696 = vadd.f32 %v2400, %v2695
        %v2697 = vpop.f32.mrb[0].mxu0
        %2698 = vmatprep.mubr.bf16.mxu0 0
        %2699 = vmatmul.mubr.bf16.gmra.mrb[0].mxu0 %v2374
        %v2700 = vpop.f32.mrb[0].mxu0
        %v2701 = vadd.f32 %v2400, %v2700
        %v2702 = vpop.f32.mrb[0].mxu0
        %v2703 = vpop.f32.mrb[0].mxu0
        %v2704 = vadd.f32 %v2400, %v2703
        %v2705 = vpop.f32.mrb[0].mxu0
        %2706 = vmatprep.mubr.bf16.mxu0 0
        %2707 = vmatmul.mubr.bf16.gmra.mrb[0].mxu0 %v2375
        %v2708 = vpop.f32.mrb[0].mxu0
        %v2709 = vadd.f32 %v2400, %v2708
        %v2710 = vpop.f32.mrb[0].mxu0
        %v2711 = vpop.f32.mrb[0].mxu0
        %v2712 = vadd.f32 %v2400, %v2711
        %v2713 = vpop.f32.mrb[0].mxu0
        %2714 = vmatprep.mubr.bf16.mxu0 0
        %2715 = vmatmul.mubr.bf16.gmra.mrb[0].mxu0 %v2376
        %v2716 = vpop.f32.mrb[0].mxu0
        %v2717 = vadd.f32 %v2400, %v2716
        %v2718 = vpop.f32.mrb[0].mxu0
        %v2719 = vpop.f32.mrb[0].mxu0
        %v2720 = vadd.f32 %v2400, %v2719
        %v2721 = vpop.f32.mrb[0].mxu0
        %2722 = vmatprep.mubr.bf16.mxu0 0
        %2723 = vmatmul.mubr.bf16.gmra.mrb[0].mxu0 %v2377
        %v2724 = vpop.f32.mrb[0].mxu0
        %v2725 = vadd.f32 %v2400, %v2724
        %v2726 = vpop.f32.mrb[0].mxu0
        %v2727 = vpop.f32.mrb[0].mxu0
        %v2728 = vadd.f32 %v2400, %v2727
        %v2729 = vpop.f32.mrb[0].mxu0
        %2730 = vmatprep.mubr.bf16.mxu0 0
        %2731 = vmatmul.mubr.bf16.gmra.mrb[0].mxu0 %v2378
        %v2732 = vpop.f32.mrb[0].mxu0
        %v2733 = vadd.f32 %v2400, %v2732
        %v2734 = vpop.f32.mrb[0].mxu0
        %v2735 = vpop.f32.mrb[0].mxu0
        %v2736 = vadd.f32 %v2400, %v2735
        %v2737 = vpop.f32.mrb[0].mxu0
        %2738 = vdwg.mxu0
        %v2739 = vmax.f32 %v2485, 0.0
        %v2740 = vmax.f32 %v2488, 0.0
        %v2741 = vmax.f32 %v2493, 0.0
        %v2742 = vmax.f32 %v2496, 0.0
        %v2743 = vmax.f32 %v2501, 0.0
        %v2744 = vmax.f32 %v2504, 0.0
        %v2745 = vmax.f32 %v2509, 0.0
        %v2746 = vmax.f32 %v2512, 0.0
        %v2747 = vmax.f32 %v2517, 0.0
        %v2748 = vmax.f32 %v2520, 0.0
        %v2749 = vmax.f32 %v2525, 0.0
        %v2750 = vmax.f32 %v2528, 0.0
        %v2751 = vmax.f32 %v2533, 0.0
        %v2752 = vmax.f32 %v2536, 0.0
        %v2753 = vmax.f32 %v2541, 0.0
        %v2754 = vmax.f32 %v2544, 0.0
        %v2755 = vmax.f32 %v2549, 0.0
        %v2756 = vmax.f32 %v2552, 0.0
        %v2757 = vmax.f32 %v2557, 0.0
        %v2758 = vmax.f32 %v2560, 0.0
        %v2759 = vmax.f32 %v2565, 0.0
        %v2760 = vmax.f32 %v2568, 0.0
        %v2761 = vmax.f32 %v2573, 0.0
        %v2762 = vmax.f32 %v2576, 0.0
        %v2763 = vmax.f32 %v2581, 0.0
        %v2764 = vmax.f32 %v2584, 0.0
        %v2765 = vmax.f32 %v2589, 0.0
        %v2766 = vmax.f32 %v2592, 0.0
        %v2767 = vmax.f32 %v2597, 0.0
        %v2768 = vmax.f32 %v2600, 0.0
        %v2769 = vmax.f32 %v2605, 0.0
        %v2770 = vmax.f32 %v2608, 0.0
        %v2771 = vmax.f32 %v2613, 0.0
        %v2772 = vmax.f32 %v2616, 0.0
        %v2773 = vmax.f32 %v2621, 0.0
        %v2774 = vmax.f32 %v2624, 0.0
        %v2775 = vmax.f32 %v2629, 0.0
        %v2776 = vmax.f32 %v2632, 0.0
        %v2777 = vmax.f32 %v2637, 0.0
        %v2778 = vmax.f32 %v2640, 0.0
        %v2779 = vmax.f32 %v2645, 0.0
        %v2780 = vmax.f32 %v2648, 0.0
        %v2781 = vmax.f32 %v2653, 0.0
        %v2782 = vmax.f32 %v2656, 0.0
        %v2783 = vmax.f32 %v2661, 0.0
        %v2784 = vmax.f32 %v2664, 0.0
        %v2785 = vmax.f32 %v2669, 0.0
        %v2786 = vmax.f32 %v2672, 0.0
        %v2787 = vmax.f32 %v2677, 0.0
        %v2788 = vmax.f32 %v2680, 0.0
        %v2789 = vmax.f32 %v2685, 0.0
        %v2790 = vmax.f32 %v2688, 0.0
        %v2791 = vmax.f32 %v2693, 0.0
        %v2792 = vmax.f32 %v2696, 0.0
        %v2793 = vmax.f32 %v2701, 0.0
        %v2794 = vmax.f32 %v2704, 0.0
        %v2795 = vmax.f32 %v2709, 0.0
        %v2796 = vmax.f32 %v2712, 0.0
        %v2797 = vmax.f32 %v2717, 0.0
        %v2798 = vmax.f32 %v2720, 0.0
        %v2799 = vmax.f32 %v2725, 0.0
        %v2800 = vmax.f32 %v2728, 0.0
        %v2801 = vmax.f32 %v2733, 0.0
        %v2802 = vmax.f32 %v2736, 0.0
        %v2803 = vpack.c.bf16 %v2740, %v2739
        %v2804 = vpack.c.bf16 %v2742, %v2741
        %v2805 = vpack.c.bf16 %v2744, %v2743
        %v2806 = vpack.c.bf16 %v2746, %v2745
        %v2807 = vpack.c.bf16 %v2748, %v2747
        %v2808 = vpack.c.bf16 %v2750, %v2749
        %v2809 = vpack.c.bf16 %v2752, %v2751
        %v2810 = vpack.c.bf16 %v2754, %v2753
        %v2811 = vpack.c.bf16 %v2756, %v2755
        %v2812 = vpack.c.bf16 %v2758, %v2757
        %v2813 = vpack.c.bf16 %v2760, %v2759
        %v2814 = vpack.c.bf16 %v2762, %v2761
        %v2815 = vpack.c.bf16 %v2764, %v2763
        %v2816 = vpack.c.bf16 %v2766, %v2765
        %v2817 = vpack.c.bf16 %v2768, %v2767
        %v2818 = vpack.c.bf16 %v2770, %v2769
        %v2819 = vpack.c.bf16 %v2772, %v2771
        %v2820 = vpack.c.bf16 %v2774, %v2773
        %v2821 = vpack.c.bf16 %v2776, %v2775
        %v2822 = vpack.c.bf16 %v2778, %v2777
        %v2823 = vpack.c.bf16 %v2780, %v2779
        %v2824 = vpack.c.bf16 %v2782, %v2781
        %v2825 = vpack.c.bf16 %v2784, %v2783
        %v2826 = vpack.c.bf16 %v2786, %v2785
        %v2827 = vpack.c.bf16 %v2788, %v2787
        %v2828 = vpack.c.bf16 %v2790, %v2789
        %v2829 = vpack.c.bf16 %v2792, %v2791
        %v2830 = vpack.c.bf16 %v2794, %v2793
        %v2831 = vpack.c.bf16 %v2796, %v2795
        %v2832 = vpack.c.bf16 %v2798, %v2797
        %v2833 = vpack.c.bf16 %v2800, %v2799
        %v2834 = vpack.c.bf16 %v2802, %v2801
        %v2835 = vld [vmem:[%s541] sm:$0xf]
        %v2836 = vld [vmem:[%s541 + $0x4] sm:$0xf]
        %v2837 = vld [vmem:[%s541 + $0x8] sm:$0xf]
        %v2838 = vld [vmem:[%s541 + $0xc] sm:$0xf]
        %v2839 = vld [vmem:[%s541 + $0x10] sm:$0xf]
        %v2840 = vld [vmem:[%s541 + $0x14] sm:$0xf]
        %v2841 = vld [vmem:[%s541 + $0x18] sm:$0xf]
        %v2842 = vld [vmem:[%s541 + $0x1c] sm:$0xf]
        %v2843 = vld [vmem:[%s541 + $0x20] sm:$0xf]
        %v2844 = vld [vmem:[%s541 + $0x24] sm:$0xf]
        %v2845 = vld [vmem:[%s541 + $0x28] sm:$0xf]
        %v2846 = vld [vmem:[%s541 + $0x2c] sm:$0xf]
        %v2847 = vld [vmem:[%s541 + $0x30] sm:$0xf]
        %v2848 = vld [vmem:[%s541 + $0x34] sm:$0xf]
        %v2849 = vld [vmem:[%s541 + $0x38] sm:$0xf]
        %v2850 = vld [vmem:[%s541 + $0x3c] sm:$0xf]
        %v2851 = vld [vmem:[%s611] sm:$0x1]
        %v2853 = vlaneseq
        %v2854 = vshrl.u32 %v2853, 7
        %v2855 = vsub.s32 0, %v2854
        %v2856 = vrot.slane %v2851, %v2855
        %v2874 = vunpack.c.l.b16 %v2835
        %v2875 = vunpack.c.l.b16 %v2836
        %v2876 = vunpack.c.l.b16 %v2837
        %v2877 = vunpack.c.l.b16 %v2838
        %v2878 = vunpack.c.l.b16 %v2839
        %v2879 = vunpack.c.l.b16 %v2840
        %v2880 = vunpack.c.l.b16 %v2841
        %v2881 = vunpack.c.l.b16 %v2842
        %v2882 = vunpack.c.l.b16 %v2843
        %v2883 = vunpack.c.l.b16 %v2844
        %v2884 = vunpack.c.l.b16 %v2845
        %v2885 = vunpack.c.l.b16 %v2846
        %v2886 = vunpack.c.l.b16 %v2847
        %v2887 = vunpack.c.l.b16 %v2848
        %v2888 = vunpack.c.l.b16 %v2849
        %v2889 = vunpack.c.l.b16 %v2850
        %v2890 = vpack.c.b16 %v2875, %v2874
        %v2891 = vpack.c.b16 %v2877, %v2876
        %v2892 = vpack.c.b16 %v2879, %v2878
        %v2893 = vpack.c.b16 %v2881, %v2880
        %v2894 = vpack.c.b16 %v2883, %v2882
        %v2895 = vpack.c.b16 %v2885, %v2884
        %v2896 = vpack.c.b16 %v2887, %v2886
        %v2897 = vpack.c.b16 %v2889, %v2888
        %2906 = vmatprep.subr.bf16.mxu0 0
        %2907 = vmatpush1.bf16.msra.mxu0 %v2890
        %2908 = vmatprep.subr.bf16.mxu0 0
        %2909 = vmatpush1.bf16.msra.mxu0 %v2891
        %2910 = vmatprep.subr.bf16.mxu0 0
        %2911 = vmatpush1.bf16.msra.mxu0 %v2892
        %2912 = vmatprep.subr.bf16.mxu0 0
        %2913 = vmatpush1.bf16.msra.mxu0 %v2893
        %2914 = vmatprep.subr.bf16.mxu0 0
        %2915 = vmatpush1.bf16.msra.mxu0 %v2894
        %2916 = vmatprep.subr.bf16.mxu0 0
        %2917 = vmatpush1.bf16.msra.mxu0 %v2895
        %2918 = vmatprep.subr.bf16.mxu0 0
        %2919 = vmatpush1.bf16.msra.mxu0 %v2896
        %2920 = vmatprep.subr.bf16.mxu0 0
        %2921 = vmatpush1.bf16.msra.mxu0 %v2897
        %2922 = vmatprep.subr.bf16.mxu0 0
        %2923 = vmatpush1.bf16.msra.mxu0 0
        %2924 = vmatprep.subr.bf16.mxu0 0
        %2925 = vmatpush1.bf16.msra.mxu0 0
        %2926 = vmatprep.subr.bf16.mxu0 0
        %2927 = vmatpush1.bf16.msra.mxu0 0
        %2928 = vmatprep.subr.bf16.mxu0 0
        %2929 = vmatpush1.bf16.msra.mxu0 0
        %2930 = vmatprep.subr.bf16.mxu0 0
        %2931 = vmatpush1.bf16.msra.mxu0 0
        %2932 = vmatprep.subr.bf16.mxu0 0
        %2933 = vmatpush1.bf16.msra.mxu0 0
        %2934 = vmatprep.subr.bf16.mxu0 0
        %2935 = vmatpush1.bf16.msra.mxu0 0
        %2936 = vmatprep.subr.bf16.mxu0 0
        %2937 = vmatpush1.bf16.msra.mxu0 0
        %2938 = vmatprep.mubr.bf16.mxu0 0
        %2939 = vmatmul.mubr.bf16.gmra.mrb[0].mxu0 %v2803
        %v2940 = vpop.f32.mrb[0].mxu0
        %v2941 = vadd.f32 %v2856, %v2940
        %v2942 = vpop.f32.mrb[0].mxu0
        %v2943 = vpop.f32.mrb[0].mxu0
        %v2944 = vadd.f32 %v2856, %v2943
        %v2945 = vpop.f32.mrb[0].mxu0
        %2946 = vmatprep.mubr.bf16.mxu0 0
        %2947 = vmatmul.mubr.bf16.gmra.mrb[0].mxu0 %v2804
        %v2948 = vpop.f32.mrb[0].mxu0
        %v2949 = vadd.f32 %v2856, %v2948
        %v2950 = vpop.f32.mrb[0].mxu0
        %v2951 = vpop.f32.mrb[0].mxu0
        %v2952 = vadd.f32 %v2856, %v2951
        %v2953 = vpop.f32.mrb[0].mxu0
        %2954 = vmatprep.mubr.bf16.mxu0 0
        %2955 = vmatmul.mubr.bf16.gmra.mrb[0].mxu0 %v2805
        %v2956 = vpop.f32.mrb[0].mxu0
        %v2957 = vadd.f32 %v2856, %v2956
        %v2958 = vpop.f32.mrb[0].mxu0
        %v2959 = vpop.f32.mrb[0].mxu0
        %v2960 = vadd.f32 %v2856, %v2959
        %v2961 = vpop.f32.mrb[0].mxu0
        %2962 = vmatprep.mubr.bf16.mxu0 0
        %2963 = vmatmul.mubr.bf16.gmra.mrb[0].mxu0 %v2806
        %v2964 = vpop.f32.mrb[0].mxu0
        %v2965 = vadd.f32 %v2856, %v2964
        %v2966 = vpop.f32.mrb[0].mxu0
        %v2967 = vpop.f32.mrb[0].mxu0
        %v2968 = vadd.f32 %v2856, %v2967
        %v2969 = vpop.f32.mrb[0].mxu0
        %2970 = vmatprep.mubr.bf16.mxu0 0
        %2971 = vmatmul.mubr.bf16.gmra.mrb[0].mxu0 %v2807
        %v2972 = vpop.f32.mrb[0].mxu0
        %v2973 = vadd.f32 %v2856, %v2972
        %v2974 = vpop.f32.mrb[0].mxu0
        %v2975 = vpop.f32.mrb[0].mxu0
        %v2976 = vadd.f32 %v2856, %v2975
        %v2977 = vpop.f32.mrb[0].mxu0
        %2978 = vmatprep.mubr.bf16.mxu0 0
        %2979 = vmatmul.mubr.bf16.gmra.mrb[0].mxu0 %v2808
        %v2980 = vpop.f32.mrb[0].mxu0
        %v2981 = vadd.f32 %v2856, %v2980
        %v2982 = vpop.f32.mrb[0].mxu0
        %v2983 = vpop.f32.mrb[0].mxu0
        %v2984 = vadd.f32 %v2856, %v2983
        %v2985 = vpop.f32.mrb[0].mxu0
        %2986 = vmatprep.mubr.bf16.mxu0 0
        %2987 = vmatmul.mubr.bf16.gmra.mrb[0].mxu0 %v2809
        %v2988 = vpop.f32.mrb[0].mxu0
        %v2989 = vadd.f32 %v2856, %v2988
        %v2990 = vpop.f32.mrb[0].mxu0
        %v2991 = vpop.f32.mrb[0].mxu0
        %v2992 = vadd.f32 %v2856, %v2991
        %v2993 = vpop.f32.mrb[0].mxu0
        %2994 = vmatprep.mubr.bf16.mxu0 0
        %2995 = vmatmul.mubr.bf16.gmra.mrb[0].mxu0 %v2810
        %v2996 = vpop.f32.mrb[0].mxu0
        %v2997 = vadd.f32 %v2856, %v2996
        %v2998 = vpop.f32.mrb[0].mxu0
        %v2999 = vpop.f32.mrb[0].mxu0
        %v3000 = vadd.f32 %v2856, %v2999
        %v3001 = vpop.f32.mrb[0].mxu0
        %3002 = vmatprep.mubr.bf16.mxu0 0
        %3003 = vmatmul.mubr.bf16.gmra.mrb[0].mxu0 %v2811
        %v3004 = vpop.f32.mrb[0].mxu0
        %v3005 = vadd.f32 %v2856, %v3004
        %v3006 = vpop.f32.mrb[0].mxu0
        %v3007 = vpop.f32.mrb[0].mxu0
        %v3008 = vadd.f32 %v2856, %v3007
        %v3009 = vpop.f32.mrb[0].mxu0
        %3010 = vmatprep.mubr.bf16.mxu0 0
        %3011 = vmatmul.mubr.bf16.gmra.mrb[0].mxu0 %v2812
        %v3012 = vpop.f32.mrb[0].mxu0
        %v3013 = vadd.f32 %v2856, %v3012
        %v3014 = vpop.f32.mrb[0].mxu0
        %v3015 = vpop.f32.mrb[0].mxu0
        %v3016 = vadd.f32 %v2856, %v3015
        %v3017 = vpop.f32.mrb[0].mxu0
        %3018 = vmatprep.mubr.bf16.mxu0 0
        %3019 = vmatmul.mubr.bf16.gmra.mrb[0].mxu0 %v2813
        %v3020 = vpop.f32.mrb[0].mxu0
        %v3021 = vadd.f32 %v2856, %v3020
        %v3022 = vpop.f32.mrb[0].mxu0
        %v3023 = vpop.f32.mrb[0].mxu0
        %v3024 = vadd.f32 %v2856, %v3023
        %v3025 = vpop.f32.mrb[0].mxu0
        %3026 = vmatprep.mubr.bf16.mxu0 0
        %3027 = vmatmul.mubr.bf16.gmra.mrb[0].mxu0 %v2814
        %v3028 = vpop.f32.mrb[0].mxu0
        %v3029 = vadd.f32 %v2856, %v3028
        %v3030 = vpop.f32.mrb[0].mxu0
        %v3031 = vpop.f32.mrb[0].mxu0
        %v3032 = vadd.f32 %v2856, %v3031
        %v3033 = vpop.f32.mrb[0].mxu0
        %3034 = vmatprep.mubr.bf16.mxu0 0
        %3035 = vmatmul.mubr.bf16.gmra.mrb[0].mxu0 %v2815
        %v3036 = vpop.f32.mrb[0].mxu0
        %v3037 = vadd.f32 %v2856, %v3036
        %v3038 = vpop.f32.mrb[0].mxu0
        %v3039 = vpop.f32.mrb[0].mxu0
        %v3040 = vadd.f32 %v2856, %v3039
        %v3041 = vpop.f32.mrb[0].mxu0
        %3042 = vmatprep.mubr.bf16.mxu0 0
        %3043 = vmatmul.mubr.bf16.gmra.mrb[0].mxu0 %v2816
        %v3044 = vpop.f32.mrb[0].mxu0
        %v3045 = vadd.f32 %v2856, %v3044
        %v3046 = vpop.f32.mrb[0].mxu0
        %v3047 = vpop.f32.mrb[0].mxu0
        %v3048 = vadd.f32 %v2856, %v3047
        %v3049 = vpop.f32.mrb[0].mxu0
        %3050 = vmatprep.mubr.bf16.mxu0 0
        %3051 = vmatmul.mubr.bf16.gmra.mrb[0].mxu0 %v2817
        %v3052 = vpop.f32.mrb[0].mxu0
        %v3053 = vadd.f32 %v2856, %v3052
        %v3054 = vpop.f32.mrb[0].mxu0
        %v3055 = vpop.f32.mrb[0].mxu0
        %v3056 = vadd.f32 %v2856, %v3055
        %v3057 = vpop.f32.mrb[0].mxu0
        %3058 = vmatprep.mubr.bf16.mxu0 0
        %3059 = vmatmul.mubr.bf16.gmra.mrb[0].mxu0 %v2818
        %v3060 = vpop.f32.mrb[0].mxu0
        %v3061 = vadd.f32 %v2856, %v3060
        %v3062 = vpop.f32.mrb[0].mxu0
        %v3063 = vpop.f32.mrb[0].mxu0
        %v3064 = vadd.f32 %v2856, %v3063
        %v3065 = vpop.f32.mrb[0].mxu0
        %3066 = vmatprep.mubr.bf16.mxu0 0
        %3067 = vmatmul.mubr.bf16.gmra.mrb[0].mxu0 %v2819
        %v3068 = vpop.f32.mrb[0].mxu0
        %v3069 = vadd.f32 %v2856, %v3068
        %v3070 = vpop.f32.mrb[0].mxu0
        %v3071 = vpop.f32.mrb[0].mxu0
        %v3072 = vadd.f32 %v2856, %v3071
        %v3073 = vpop.f32.mrb[0].mxu0
        %3074 = vmatprep.mubr.bf16.mxu0 0
        %3075 = vmatmul.mubr.bf16.gmra.mrb[0].mxu0 %v2820
        %v3076 = vpop.f32.mrb[0].mxu0
        %v3077 = vadd.f32 %v2856, %v3076
        %v3078 = vpop.f32.mrb[0].mxu0
        %v3079 = vpop.f32.mrb[0].mxu0
        %v3080 = vadd.f32 %v2856, %v3079
        %v3081 = vpop.f32.mrb[0].mxu0
        %3082 = vmatprep.mubr.bf16.mxu0 0
        %3083 = vmatmul.mubr.bf16.gmra.mrb[0].mxu0 %v2821
        %v3084 = vpop.f32.mrb[0].mxu0
        %v3085 = vadd.f32 %v2856, %v3084
        %v3086 = vpop.f32.mrb[0].mxu0
        %v3087 = vpop.f32.mrb[0].mxu0
        %v3088 = vadd.f32 %v2856, %v3087
        %v3089 = vpop.f32.mrb[0].mxu0
        %3090 = vmatprep.mubr.bf16.mxu0 0
        %3091 = vmatmul.mubr.bf16.gmra.mrb[0].mxu0 %v2822
        %v3092 = vpop.f32.mrb[0].mxu0
        %v3093 = vadd.f32 %v2856, %v3092
        %v3094 = vpop.f32.mrb[0].mxu0
        %v3095 = vpop.f32.mrb[0].mxu0
        %v3096 = vadd.f32 %v2856, %v3095
        %v3097 = vpop.f32.mrb[0].mxu0
        %3098 = vmatprep.mubr.bf16.mxu0 0
        %3099 = vmatmul.mubr.bf16.gmra.mrb[0].mxu0 %v2823
        %v3100 = vpop.f32.mrb[0].mxu0
        %v3101 = vadd.f32 %v2856, %v3100
        %v3102 = vpop.f32.mrb[0].mxu0
        %v3103 = vpop.f32.mrb[0].mxu0
        %v3104 = vadd.f32 %v2856, %v3103
        %v3105 = vpop.f32.mrb[0].mxu0
        %3106 = vmatprep.mubr.bf16.mxu0 0
        %3107 = vmatmul.mubr.bf16.gmra.mrb[0].mxu0 %v2824
        %v3108 = vpop.f32.mrb[0].mxu0
        %v3109 = vadd.f32 %v2856, %v3108
        %v3110 = vpop.f32.mrb[0].mxu0
        %v3111 = vpop.f32.mrb[0].mxu0
        %v3112 = vadd.f32 %v2856, %v3111
        %v3113 = vpop.f32.mrb[0].mxu0
        %3114 = vmatprep.mubr.bf16.mxu0 0
        %3115 = vmatmul.mubr.bf16.gmra.mrb[0].mxu0 %v2825
        %v3116 = vpop.f32.mrb[0].mxu0
        %v3117 = vadd.f32 %v2856, %v3116
        %v3118 = vpop.f32.mrb[0].mxu0
        %v3119 = vpop.f32.mrb[0].mxu0
        %v3120 = vadd.f32 %v2856, %v3119
        %v3121 = vpop.f32.mrb[0].mxu0
        %3122 = vmatprep.mubr.bf16.mxu0 0
        %3123 = vmatmul.mubr.bf16.gmra.mrb[0].mxu0 %v2826
        %v3124 = vpop.f32.mrb[0].mxu0
        %v3125 = vadd.f32 %v2856, %v3124
        %v3126 = vpop.f32.mrb[0].mxu0
        %v3127 = vpop.f32.mrb[0].mxu0
        %v3128 = vadd.f32 %v2856, %v3127
        %v3129 = vpop.f32.mrb[0].mxu0
        %3130 = vmatprep.mubr.bf16.mxu0 0
        %3131 = vmatmul.mubr.bf16.gmra.mrb[0].mxu0 %v2827
        %v3132 = vpop.f32.mrb[0].mxu0
        %v3133 = vadd.f32 %v2856, %v3132
        %v3134 = vpop.f32.mrb[0].mxu0
        %v3135 = vpop.f32.mrb[0].mxu0
        %v3136 = vadd.f32 %v2856, %v3135
        %v3137 = vpop.f32.mrb[0].mxu0
        %3138 = vmatprep.mubr.bf16.mxu0 0
        %3139 = vmatmul.mubr.bf16.gmra.mrb[0].mxu0 %v2828
        %v3140 = vpop.f32.mrb[0].mxu0
        %v3141 = vadd.f32 %v2856, %v3140
        %v3142 = vpop.f32.mrb[0].mxu0
        %v3143 = vpop.f32.mrb[0].mxu0
        %v3144 = vadd.f32 %v2856, %v3143
        %v3145 = vpop.f32.mrb[0].mxu0
        %3146 = vmatprep.mubr.bf16.mxu0 0
        %3147 = vmatmul.mubr.bf16.gmra.mrb[0].mxu0 %v2829
        %v3148 = vpop.f32.mrb[0].mxu0
        %v3149 = vadd.f32 %v2856, %v3148
        %v3150 = vpop.f32.mrb[0].mxu0
        %v3151 = vpop.f32.mrb[0].mxu0
        %v3152 = vadd.f32 %v2856, %v3151
        %v3153 = vpop.f32.mrb[0].mxu0
        %3154 = vmatprep.mubr.bf16.mxu0 0
        %3155 = vmatmul.mubr.bf16.gmra.mrb[0].mxu0 %v2830
        %v3156 = vpop.f32.mrb[0].mxu0
        %v3157 = vadd.f32 %v2856, %v3156
        %v3158 = vpop.f32.mrb[0].mxu0
        %v3159 = vpop.f32.mrb[0].mxu0
        %v3160 = vadd.f32 %v2856, %v3159
        %v3161 = vpop.f32.mrb[0].mxu0
        %3162 = vmatprep.mubr.bf16.mxu0 0
        %3163 = vmatmul.mubr.bf16.gmra.mrb[0].mxu0 %v2831
        %v3164 = vpop.f32.mrb[0].mxu0
        %v3165 = vadd.f32 %v2856, %v3164
        %v3166 = vpop.f32.mrb[0].mxu0
        %v3167 = vpop.f32.mrb[0].mxu0
        %v3168 = vadd.f32 %v2856, %v3167
        %v3169 = vpop.f32.mrb[0].mxu0
        %3170 = vmatprep.mubr.bf16.mxu0 0
        %3171 = vmatmul.mubr.bf16.gmra.mrb[0].mxu0 %v2832
        %v3172 = vpop.f32.mrb[0].mxu0
        %v3173 = vadd.f32 %v2856, %v3172
        %v3174 = vpop.f32.mrb[0].mxu0
        %v3175 = vpop.f32.mrb[0].mxu0
        %v3176 = vadd.f32 %v2856, %v3175
        %v3177 = vpop.f32.mrb[0].mxu0
        %3178 = vmatprep.mubr.bf16.mxu0 0
        %3179 = vmatmul.mubr.bf16.gmra.mrb[0].mxu0 %v2833
        %v3180 = vpop.f32.mrb[0].mxu0
        %v3181 = vadd.f32 %v2856, %v3180
        %v3182 = vpop.f32.mrb[0].mxu0
        %v3183 = vpop.f32.mrb[0].mxu0
        %v3184 = vadd.f32 %v2856, %v3183
        %v3185 = vpop.f32.mrb[0].mxu0
        %3186 = vmatprep.mubr.bf16.mxu0 0
        %3187 = vmatmul.mubr.bf16.gmra.mrb[0].mxu0 %v2834
        %v3188 = vpop.f32.mrb[0].mxu0
        %v3189 = vadd.f32 %v2856, %v3188
        %v3190 = vpop.f32.mrb[0].mxu0
        %v3191 = vpop.f32.mrb[0].mxu0
        %v3192 = vadd.f32 %v2856, %v3191
        %v3193 = vpop.f32.mrb[0].mxu0
        %3194 = vdwg.mxu0
        %v3195 = vmax.f32 %v2941, 0.0
        %v3196 = vmax.f32 %v2944, 0.0
        %v3197 = vmax.f32 %v2949, 0.0
        %v3198 = vmax.f32 %v2952, 0.0
        %v3199 = vmax.f32 %v2957, 0.0
        %v3200 = vmax.f32 %v2960, 0.0
        %v3201 = vmax.f32 %v2965, 0.0
        %v3202 = vmax.f32 %v2968, 0.0
        %v3203 = vmax.f32 %v2973, 0.0
        %v3204 = vmax.f32 %v2976, 0.0
        %v3205 = vmax.f32 %v2981, 0.0
        %v3206 = vmax.f32 %v2984, 0.0
        %v3207 = vmax.f32 %v2989, 0.0
        %v3208 = vmax.f32 %v2992, 0.0
        %v3209 = vmax.f32 %v2997, 0.0
        %v3210 = vmax.f32 %v3000, 0.0
        %v3211 = vmax.f32 %v3005, 0.0
        %v3212 = vmax.f32 %v3008, 0.0
        %v3213 = vmax.f32 %v3013, 0.0
        %v3214 = vmax.f32 %v3016, 0.0
        %v3215 = vmax.f32 %v3021, 0.0
        %v3216 = vmax.f32 %v3024, 0.0
        %v3217 = vmax.f32 %v3029, 0.0
        %v3218 = vmax.f32 %v3032, 0.0
        %v3219 = vmax.f32 %v3037, 0.0
        %v3220 = vmax.f32 %v3040, 0.0
        %v3221 = vmax.f32 %v3045, 0.0
        %v3222 = vmax.f32 %v3048, 0.0
        %v3223 = vmax.f32 %v3053, 0.0
        %v3224 = vmax.f32 %v3056, 0.0
        %v3225 = vmax.f32 %v3061, 0.0
        %v3226 = vmax.f32 %v3064, 0.0
        %v3227 = vmax.f32 %v3069, 0.0
        %v3228 = vmax.f32 %v3072, 0.0
        %v3229 = vmax.f32 %v3077, 0.0
        %v3230 = vmax.f32 %v3080, 0.0
        %v3231 = vmax.f32 %v3085, 0.0
        %v3232 = vmax.f32 %v3088, 0.0
        %v3233 = vmax.f32 %v3093, 0.0
        %v3234 = vmax.f32 %v3096, 0.0
        %v3235 = vmax.f32 %v3101, 0.0
        %v3236 = vmax.f32 %v3104, 0.0
        %v3237 = vmax.f32 %v3109, 0.0
        %v3238 = vmax.f32 %v3112, 0.0
        %v3239 = vmax.f32 %v3117, 0.0
        %v3240 = vmax.f32 %v3120, 0.0
        %v3241 = vmax.f32 %v3125, 0.0
        %v3242 = vmax.f32 %v3128, 0.0
        %v3243 = vmax.f32 %v3133, 0.0
        %v3244 = vmax.f32 %v3136, 0.0
        %v3245 = vmax.f32 %v3141, 0.0
        %v3246 = vmax.f32 %v3144, 0.0
        %v3247 = vmax.f32 %v3149, 0.0
        %v3248 = vmax.f32 %v3152, 0.0
        %v3249 = vmax.f32 %v3157, 0.0
        %v3250 = vmax.f32 %v3160, 0.0
        %v3251 = vmax.f32 %v3165, 0.0
        %v3252 = vmax.f32 %v3168, 0.0
        %v3253 = vmax.f32 %v3173, 0.0
        %v3254 = vmax.f32 %v3176, 0.0
        %v3255 = vmax.f32 %v3181, 0.0
        %v3256 = vmax.f32 %v3184, 0.0
        %v3257 = vmax.f32 %v3189, 0.0
        %v3258 = vmax.f32 %v3192, 0.0
        %v3259 = vpack.c.bf16 %v3196, %v3195
        %v3260 = vpack.c.bf16 %v3198, %v3197
        %v3261 = vpack.c.bf16 %v3200, %v3199
        %v3262 = vpack.c.bf16 %v3202, %v3201
        %v3263 = vpack.c.bf16 %v3204, %v3203
        %v3264 = vpack.c.bf16 %v3206, %v3205
        %v3265 = vpack.c.bf16 %v3208, %v3207
        %v3266 = vpack.c.bf16 %v3210, %v3209
        %v3267 = vpack.c.bf16 %v3212, %v3211
        %v3268 = vpack.c.bf16 %v3214, %v3213
        %v3269 = vpack.c.bf16 %v3216, %v3215
        %v3270 = vpack.c.bf16 %v3218, %v3217
        %v3271 = vpack.c.bf16 %v3220, %v3219
        %v3272 = vpack.c.bf16 %v3222, %v3221
        %v3273 = vpack.c.bf16 %v3224, %v3223
        %v3274 = vpack.c.bf16 %v3226, %v3225
        %v3275 = vpack.c.bf16 %v3228, %v3227
        %v3276 = vpack.c.bf16 %v3230, %v3229
        %v3277 = vpack.c.bf16 %v3232, %v3231
        %v3278 = vpack.c.bf16 %v3234, %v3233
        %v3279 = vpack.c.bf16 %v3236, %v3235
        %v3280 = vpack.c.bf16 %v3238, %v3237
        %v3281 = vpack.c.bf16 %v3240, %v3239
        %v3282 = vpack.c.bf16 %v3242, %v3241
        %v3283 = vpack.c.bf16 %v3244, %v3243
        %v3284 = vpack.c.bf16 %v3246, %v3245
        %v3285 = vpack.c.bf16 %v3248, %v3247
        %v3286 = vpack.c.bf16 %v3250, %v3249
        %v3287 = vpack.c.bf16 %v3252, %v3251
        %v3288 = vpack.c.bf16 %v3254, %v3253
        %v3289 = vpack.c.bf16 %v3256, %v3255
        %v3290 = vpack.c.bf16 %v3258, %v3257
        %3291 = vst [vmem:[#allocation2] sm:$0xff] %v3259
        %3292 = vst [vmem:[#allocation2 + $0x8] sm:$0xff] %v3260
        %3293 = vst [vmem:[#allocation2 + $0x10] sm:$0xff] %v3261
        %3294 = vst [vmem:[#allocation2 + $0x18] sm:$0xff] %v3262
        %3295 = vst [vmem:[#allocation2 + $0x20] sm:$0xff] %v3263
        %3296 = vst [vmem:[#allocation2 + $0x28] sm:$0xff] %v3264
        %3297 = vst [vmem:[#allocation2 + $0x30] sm:$0xff] %v3265
        %3298 = vst [vmem:[#allocation2 + $0x38] sm:$0xff] %v3266
        %3299 = vst [vmem:[#allocation2 + $0x40] sm:$0xff] %v3267
        %3300 = vst [vmem:[#allocation2 + $0x48] sm:$0xff] %v3268
        %3301 = vst [vmem:[#allocation2 + $0x50] sm:$0xff] %v3269
        %3302 = vst [vmem:[#allocation2 + $0x58] sm:$0xff] %v3270
        %3303 = vst [vmem:[#allocation2 + $0x60] sm:$0xff] %v3271
        %3304 = vst [vmem:[#allocation2 + $0x68] sm:$0xff] %v3272
        %3305 = vst [vmem:[#allocation2 + $0x70] sm:$0xff] %v3273
        %3306 = vst [vmem:[#allocation2 + $0x78] sm:$0xff] %v3274
        %3307 = vst [vmem:[#allocation2 + $0x80] sm:$0xff] %v3275
        %3308 = vst [vmem:[#allocation2 + $0x88] sm:$0xff] %v3276
        %3309 = vst [vmem:[#allocation2 + $0x90] sm:$0xff] %v3277
        %3310 = vst [vmem:[#allocation2 + $0x98] sm:$0xff] %v3278
        %3311 = vst [vmem:[#allocation2 + $0xa0] sm:$0xff] %v3279
        %3312 = vst [vmem:[#allocation2 + $0xa8] sm:$0xff] %v3280
        %3313 = vst [vmem:[#allocation2 + $0xb0] sm:$0xff] %v3281
        %3314 = vst [vmem:[#allocation2 + $0xb8] sm:$0xff] %v3282
        %3315 = vst [vmem:[#allocation2 + $0xc0] sm:$0xff] %v3283
        %3316 = vst [vmem:[#allocation2 + $0xc8] sm:$0xff] %v3284
        %3317 = vst [vmem:[#allocation2 + $0xd0] sm:$0xff] %v3285
        %3318 = vst [vmem:[#allocation2 + $0xd8] sm:$0xff] %v3286
        %3319 = vst [vmem:[#allocation2 + $0xe0] sm:$0xff] %v3287
        %3320 = vst [vmem:[#allocation2 + $0xe8] sm:$0xff] %v3288
        %3321 = vst [vmem:[#allocation2 + $0xf0] sm:$0xff] %v3289
        %3322 = vst [vmem:[#allocation2 + $0xf8] sm:$0xff] %v3290
        %v3323 = vld [vmem:[#allocation10] sm:$0xff]
        %v3324 = vld [vmem:[#allocation10 + $0x8] sm:$0xff]
        %v3327 = vunpack.c.l.b16 %v3323
        %v3328 = vunpack.c.h.b16 %v3323
        %v3329 = vunpack.c.l.b16 %v3324
        %v3330 = vunpack.c.h.b16 %v3324
        %v3331 = vpack.c.b16 %v3327, %v3327
        %v3332 = vpack.c.b16 %v3328, %v3328
        %v3333 = vpack.c.b16 %v3329, %v3329
        %v3334 = vpack.c.b16 %v3330, %v3330
        %3339 = vmatprep.subr.bf16.mxu0 0
        %3340 = vmatpush1.bf16.msra.mxu0 %v3259
        %3341 = vmatprep.subr.bf16.mxu0 0
        %3342 = vmatpush1.bf16.msra.mxu0 %v3260
        %3343 = vmatprep.subr.bf16.mxu0 0
        %3344 = vmatpush1.bf16.msra.mxu0 %v3261
        %3345 = vmatprep.subr.bf16.mxu0 0
        %3346 = vmatpush1.bf16.msra.mxu0 %v3262
        %3347 = vmatprep.subr.bf16.mxu0 0
        %3348 = vmatpush1.bf16.msra.mxu0 %v3263
        %3349 = vmatprep.subr.bf16.mxu0 0
        %3350 = vmatpush1.bf16.msra.mxu0 %v3264
        %3351 = vmatprep.subr.bf16.mxu0 0
        %3352 = vmatpush1.bf16.msra.mxu0 %v3265
        %3353 = vmatprep.subr.bf16.mxu0 0
        %3354 = vmatpush1.bf16.msra.mxu0 %v3266
        %3355 = vmatprep.subr.bf16.mxu0 0
        %3356 = vmatpush1.bf16.msra.mxu0 %v3267
        %3357 = vmatprep.subr.bf16.mxu0 0
        %3358 = vmatpush1.bf16.msra.mxu0 %v3268
        %3359 = vmatprep.subr.bf16.mxu0 0
        %3360 = vmatpush1.bf16.msra.mxu0 %v3269
        %3361 = vmatprep.subr.bf16.mxu0 0
        %3362 = vmatpush1.bf16.msra.mxu0 %v3270
        %3363 = vmatprep.subr.bf16.mxu0 0
        %3364 = vmatpush1.bf16.msra.mxu0 %v3271
        %3365 = vmatprep.subr.bf16.mxu0 0
        %3366 = vmatpush1.bf16.msra.mxu0 %v3272
        %3367 = vmatprep.subr.bf16.mxu0 0
        %3368 = vmatpush1.bf16.msra.mxu0 %v3273
        %3369 = vmatprep.subr.bf16.mxu0 0
        %3370 = vmatpush1.bf16.msra.mxu0 %v3274
        %3371 = vmatprep.mubr.bf16.mxu0 %v3332
        %3372 = vmatmul.mubr.bf16.gmra.mrb[0].mxu0 %v3331
        %v3373 = vpop.f32.mrb[0].mxu0
        %v3374 = vadd.f32 0.0, %v3373
        %v3375 = vpop.f32.mrb[0].mxu0
        %v3376 = vpop.f32.mrb[0].mxu0
        %v3377 = vpop.f32.mrb[0].mxu0
        %3378 = vdwg.mxu0
        %3379 = vmatprep.subr.bf16.mxu0 0
        %3380 = vmatpush1.bf16.msra.mxu0 %v3275
        %3381 = vmatprep.subr.bf16.mxu0 0
        %3382 = vmatpush1.bf16.msra.mxu0 %v3276
        %3383 = vmatprep.subr.bf16.mxu0 0
        %3384 = vmatpush1.bf16.msra.mxu0 %v3277
        %3385 = vmatprep.subr.bf16.mxu0 0
        %3386 = vmatpush1.bf16.msra.mxu0 %v3278
        %3387 = vmatprep.subr.bf16.mxu0 0
        %3388 = vmatpush1.bf16.msra.mxu0 %v3279
        %3389 = vmatprep.subr.bf16.mxu0 0
        %3390 = vmatpush1.bf16.msra.mxu0 %v3280
        %3391 = vmatprep.subr.bf16.mxu0 0
        %3392 = vmatpush1.bf16.msra.mxu0 %v3281
        %3393 = vmatprep.subr.bf16.mxu0 0
        %3394 = vmatpush1.bf16.msra.mxu0 %v3282
        %3395 = vmatprep.subr.bf16.mxu0 0
        %3396 = vmatpush1.bf16.msra.mxu0 %v3283
        %3397 = vmatprep.subr.bf16.mxu0 0
        %3398 = vmatpush1.bf16.msra.mxu0 %v3284
        %3399 = vmatprep.subr.bf16.mxu0 0
        %3400 = vmatpush1.bf16.msra.mxu0 %v3285
        %3401 = vmatprep.subr.bf16.mxu0 0
        %3402 = vmatpush1.bf16.msra.mxu0 %v3286
        %3403 = vmatprep.subr.bf16.mxu0 0
        %3404 = vmatpush1.bf16.msra.mxu0 %v3287
        %3405 = vmatprep.subr.bf16.mxu0 0
        %3406 = vmatpush1.bf16.msra.mxu0 %v3288
        %3407 = vmatprep.subr.bf16.mxu0 0
        %3408 = vmatpush1.bf16.msra.mxu0 %v3289
        %3409 = vmatprep.subr.bf16.mxu0 0
        %3410 = vmatpush1.bf16.msra.mxu0 %v3290
        %3411 = vmatprep.mubr.bf16.mxu0 %v3334
        %3412 = vmatmul.mubr.bf16.gmra.mrb[0].mxu0 %v3333
        %v3413 = vpop.f32.mrb[0].mxu0
        %v3414 = vadd.f32 %v3374, %v3413
        %v3415 = vpop.f32.mrb[0].mxu0
        %v3416 = vpop.f32.mrb[0].mxu0
        %v3417 = vpop.f32.mrb[0].mxu0
        %3418 = vdwg.mxu0
        // Predicated region
        $region113: #{tpu_custom_call.1} parent=71 // pred_check
          %p3419 = pneg %p613
        $region114: #{tpu_custom_call.1} parent=71 // pred_check_branch
          %3421 = sbr.rel (%p3419) target = $region116
        $region115: #{tpu_custom_call.1} parent=71 // pred_region
          %3422 = vst [vmem:[#allocation3] sm:$0xff] %v3414
        $region116: #{tpu_custom_call.1} parent=71 // pred_fallthru
          _
        %p3423 = scmp.eq.s32.totalorder %s32, 1
        // Predicated region
        $region117: #{tpu_custom_call.1} parent=71 // pred_check
          %p3424 = pneg %p3423
        $region118: #{tpu_custom_call.1} parent=71 // pred_check_branch
          %3426 = sbr.rel (%p3424) target = $region120
        $region119: #{tpu_custom_call.1} parent=71 // pred_region
          %3427 = vst [vmem:[#allocation4] sm:$0xff] %v3414
        $region120: #{tpu_custom_call.1} parent=71 // pred_fallthru
          _
        %p3428 = scmp.eq.s32.totalorder %s32, 2
        // Predicated region
        $region121: #{tpu_custom_call.1} parent=71 // pred_check
          %p3429 = pneg %p3428
        $region122: #{tpu_custom_call.1} parent=71 // pred_check_branch
          %3431 = sbr.rel (%p3429) target = $region124
        $region123: #{tpu_custom_call.1} parent=71 // pred_region
          %v3432 = vld [vmem:[#allocation3] sm:$0xff]
          %v3433 = vpack.c.bf16 %v3432, %v3432
          %v3434 = vld [vmem:[#allocation14] sm:$0xf]
          %v3435 = vld [vmem:[#allocation14 + $0x4] sm:$0xf]
          %v3436 = vld [vmem:[#allocation14 + $0x8] sm:$0xf]
          %v3437 = vld [vmem:[#allocation14 + $0xc] sm:$0xf]
          %v3438 = vld [vmem:[#allocation14 + $0x10] sm:$0xf]
          %v3439 = vld [vmem:[#allocation14 + $0x14] sm:$0xf]
          %v3440 = vld [vmem:[#allocation14 + $0x18] sm:$0xf]
          %v3441 = vld [vmem:[#allocation14 + $0x1c] sm:$0xf]
          %v3442 = vld [vmem:[#allocation14 + $0x20] sm:$0xf]
          %v3443 = vld [vmem:[#allocation14 + $0x24] sm:$0xf]
          %v3444 = vld [vmem:[#allocation14 + $0x28] sm:$0xf]
          %v3445 = vld [vmem:[#allocation14 + $0x2c] sm:$0xf]
          %v3446 = vld [vmem:[#allocation14 + $0x30] sm:$0xf]
          %v3447 = vld [vmem:[#allocation14 + $0x34] sm:$0xf]
          %v3448 = vld [vmem:[#allocation14 + $0x38] sm:$0xf]
          %v3449 = vld [vmem:[#allocation14 + $0x3c] sm:$0xf]
          %v3450 = vld [vmem:[#allocation4] sm:$0xff]
          %v3451 = vpack.c.bf16 %v3450, %v3450
          %v3452 = vld [vmem:[#allocation16] sm:$0xf]
          %v3453 = vld [vmem:[#allocation16 + $0x4] sm:$0xf]
          %v3454 = vld [vmem:[#allocation16 + $0x8] sm:$0xf]
          %v3455 = vld [vmem:[#allocation16 + $0xc] sm:$0xf]
          %v3456 = vld [vmem:[#allocation16 + $0x10] sm:$0xf]
          %v3457 = vld [vmem:[#allocation16 + $0x14] sm:$0xf]
          %v3458 = vld [vmem:[#allocation16 + $0x18] sm:$0xf]
          %v3459 = vld [vmem:[#allocation16 + $0x1c] sm:$0xf]
          %v3460 = vld [vmem:[#allocation16 + $0x20] sm:$0xf]
          %v3461 = vld [vmem:[#allocation16 + $0x24] sm:$0xf]
          %v3462 = vld [vmem:[#allocation16 + $0x28] sm:$0xf]
          %v3463 = vld [vmem:[#allocation16 + $0x2c] sm:$0xf]
          %v3464 = vld [vmem:[#allocation16 + $0x30] sm:$0xf]
          %v3465 = vld [vmem:[#allocation16 + $0x34] sm:$0xf]
          %v3466 = vld [vmem:[#allocation16 + $0x38] sm:$0xf]
          %v3467 = vld [vmem:[#allocation16 + $0x3c] sm:$0xf]
          %v3484 = vunpack.c.l.b16 %v3452
          %v3485 = vunpack.c.l.b16 %v3453
          %v3486 = vunpack.c.l.b16 %v3454
          %v3487 = vunpack.c.l.b16 %v3455
          %v3488 = vunpack.c.l.b16 %v3456
          %v3489 = vunpack.c.l.b16 %v3457
          %v3490 = vunpack.c.l.b16 %v3458
          %v3491 = vunpack.c.l.b16 %v3459
          %v3492 = vunpack.c.l.b16 %v3460
          %v3493 = vunpack.c.l.b16 %v3461
          %v3494 = vunpack.c.l.b16 %v3462
          %v3495 = vunpack.c.l.b16 %v3463
          %v3496 = vunpack.c.l.b16 %v3464
          %v3497 = vunpack.c.l.b16 %v3465
          %v3498 = vunpack.c.l.b16 %v3466
          %v3499 = vunpack.c.l.b16 %v3467
          %v3500 = vpack.c.b16 %v3485, %v3484
          %v3501 = vpack.c.b16 %v3487, %v3486
          %v3502 = vpack.c.b16 %v3489, %v3488
          %v3503 = vpack.c.b16 %v3491, %v3490
          %v3504 = vpack.c.b16 %v3493, %v3492
          %v3505 = vpack.c.b16 %v3495, %v3494
          %v3506 = vpack.c.b16 %v3497, %v3496
          %v3507 = vpack.c.b16 %v3499, %v3498
          %3516 = vmatprep.subr.bf16.mxu0 0
          %3517 = vmatpush1.bf16.msra.mxu0 %v3500
          %3518 = vmatprep.subr.bf16.mxu0 0
          %3519 = vmatpush1.bf16.msra.mxu0 %v3501
          %3520 = vmatprep.subr.bf16.mxu0 0
          %3521 = vmatpush1.bf16.msra.mxu0 %v3502
          %3522 = vmatprep.subr.bf16.mxu0 0
          %3523 = vmatpush1.bf16.msra.mxu0 %v3503
          %3524 = vmatprep.subr.bf16.mxu0 0
          %3525 = vmatpush1.bf16.msra.mxu0 %v3504
          %3526 = vmatprep.subr.bf16.mxu0 0
          %3527 = vmatpush1.bf16.msra.mxu0 %v3505
          %3528 = vmatprep.subr.bf16.mxu0 0
          %3529 = vmatpush1.bf16.msra.mxu0 %v3506
          %3530 = vmatprep.subr.bf16.mxu0 0
          %3531 = vmatpush1.bf16.msra.mxu0 %v3507
          %3532 = vmatprep.subr.bf16.mxu0 0
          %3533 = vmatpush1.bf16.msra.mxu0 0
          %3534 = vmatprep.subr.bf16.mxu0 0
          %3535 = vmatpush1.bf16.msra.mxu0 0
          %3536 = vmatprep.subr.bf16.mxu0 0
          %3537 = vmatpush1.bf16.msra.mxu0 0
          %3538 = vmatprep.subr.bf16.mxu0 0
          %3539 = vmatpush1.bf16.msra.mxu0 0
          %3540 = vmatprep.subr.bf16.mxu0 0
          %3541 = vmatpush1.bf16.msra.mxu0 0
          %3542 = vmatprep.subr.bf16.mxu0 0
          %3543 = vmatpush1.bf16.msra.mxu0 0
          %3544 = vmatprep.subr.bf16.mxu0 0
          %3545 = vmatpush1.bf16.msra.mxu0 0
          %3546 = vmatprep.subr.bf16.mxu0 0
          %3547 = vmatpush1.bf16.msra.mxu0 0
          %3548 = vmatprep.mubr.bf16.mxu0 0
          %3549 = vmatmul.mubr.bf16.gmra.mrb[0].mxu0 %v3451
          %v3550 = vpop.f32.mrb[0].mxu0
          %v3551 = vadd.f32 0.0, %v3550
          %v3552 = vpop.f32.mrb[0].mxu0
          %v3553 = vpop.f32.mrb[0].mxu0
          %v3554 = vpop.f32.mrb[0].mxu0
          %3555 = vdwg.mxu0
          %v3572 = vunpack.c.l.b16 %v3434
          %v3573 = vunpack.c.l.b16 %v3435
          %v3574 = vunpack.c.l.b16 %v3436
          %v3575 = vunpack.c.l.b16 %v3437
          %v3576 = vunpack.c.l.b16 %v3438
          %v3577 = vunpack.c.l.b16 %v3439
          %v3578 = vunpack.c.l.b16 %v3440
          %v3579 = vunpack.c.l.b16 %v3441
          %v3580 = vunpack.c.l.b16 %v3442
          %v3581 = vunpack.c.l.b16 %v3443
          %v3582 = vunpack.c.l.b16 %v3444
          %v3583 = vunpack.c.l.b16 %v3445
          %v3584 = vunpack.c.l.b16 %v3446
          %v3585 = vunpack.c.l.b16 %v3447
          %v3586 = vunpack.c.l.b16 %v3448
          %v3587 = vunpack.c.l.b16 %v3449
          %v3588 = vpack.c.b16 %v3573, %v3572
          %v3589 = vpack.c.b16 %v3575, %v3574
          %v3590 = vpack.c.b16 %v3577, %v3576
          %v3591 = vpack.c.b16 %v3579, %v3578
          %v3592 = vpack.c.b16 %v3581, %v3580
          %v3593 = vpack.c.b16 %v3583, %v3582
          %v3594 = vpack.c.b16 %v3585, %v3584
          %v3595 = vpack.c.b16 %v3587, %v3586
          %3604 = vmatprep.subr.bf16.mxu0 0
          %3605 = vmatpush1.bf16.msra.mxu0 %v3588
          %3606 = vmatprep.subr.bf16.mxu0 0
          %3607 = vmatpush1.bf16.msra.mxu0 %v3589
          %3608 = vmatprep.subr.bf16.mxu0 0
          %3609 = vmatpush1.bf16.msra.mxu0 %v3590
          %3610 = vmatprep.subr.bf16.mxu0 0
          %3611 = vmatpush1.bf16.msra.mxu0 %v3591
          %3612 = vmatprep.subr.bf16.mxu0 0
          %3613 = vmatpush1.bf16.msra.mxu0 %v3592
          %3614 = vmatprep.subr.bf16.mxu0 0
          %3615 = vmatpush1.bf16.msra.mxu0 %v3593
          %3616 = vmatprep.subr.bf16.mxu0 0
          %3617 = vmatpush1.bf16.msra.mxu0 %v3594
          %3618 = vmatprep.subr.bf16.mxu0 0
          %3619 = vmatpush1.bf16.msra.mxu0 %v3595
          %3620 = vmatprep.subr.bf16.mxu0 0
          %3621 = vmatpush1.bf16.msra.mxu0 0
          %3622 = vmatprep.subr.bf16.mxu0 0
          %3623 = vmatpush1.bf16.msra.mxu0 0
          %3624 = vmatprep.subr.bf16.mxu0 0
          %3625 = vmatpush1.bf16.msra.mxu0 0
          %3626 = vmatprep.subr.bf16.mxu0 0
          %3627 = vmatpush1.bf16.msra.mxu0 0
          %3628 = vmatprep.subr.bf16.mxu0 0
          %3629 = vmatpush1.bf16.msra.mxu0 0
          %3630 = vmatprep.subr.bf16.mxu0 0
          %3631 = vmatpush1.bf16.msra.mxu0 0
          %3632 = vmatprep.subr.bf16.mxu0 0
          %3633 = vmatpush1.bf16.msra.mxu0 0
          %3634 = vmatprep.subr.bf16.mxu0 0
          %3635 = vmatpush1.bf16.msra.mxu0 0
          %3636 = vmatprep.mubr.bf16.mxu0 0
          %3637 = vmatmul.mubr.bf16.gmra.mrb[0].mxu0 %v3433
          %v3638 = vpop.f32.mrb[0].mxu0
          %v3639 = vadd.f32 %v3551, %v3638
          %v3640 = vpop.f32.mrb[0].mxu0
          %v3641 = vpop.f32.mrb[0].mxu0
          %v3642 = vpop.f32.mrb[0].mxu0
          %3643 = vdwg.mxu0
          %v3644 = vpack.c.bf16 %v3414, %v3414
          %v3645 = vld [vmem:[#allocation17] sm:$0xf]
          %v3646 = vld [vmem:[#allocation17 + $0x4] sm:$0xf]
          %v3647 = vld [vmem:[#allocation17 + $0x8] sm:$0xf]
          %v3648 = vld [vmem:[#allocation17 + $0xc] sm:$0xf]
          %v3649 = vld [vmem:[#allocation17 + $0x10] sm:$0xf]
          %v3650 = vld [vmem:[#allocation17 + $0x14] sm:$0xf]
          %v3651 = vld [vmem:[#allocation17 + $0x18] sm:$0xf]
          %v3652 = vld [vmem:[#allocation17 + $0x1c] sm:$0xf]
          %v3653 = vld [vmem:[#allocation17 + $0x20] sm:$0xf]
          %v3654 = vld [vmem:[#allocation17 + $0x24] sm:$0xf]
          %v3655 = vld [vmem:[#allocation17 + $0x28] sm:$0xf]
          %v3656 = vld [vmem:[#allocation17 + $0x2c] sm:$0xf]
          %v3657 = vld [vmem:[#allocation17 + $0x30] sm:$0xf]
          %v3658 = vld [vmem:[#allocation17 + $0x34] sm:$0xf]
          %v3659 = vld [vmem:[#allocation17 + $0x38] sm:$0xf]
          %v3660 = vld [vmem:[#allocation17 + $0x3c] sm:$0xf]
          %v3677 = vunpack.c.l.b16 %v3645
          %v3678 = vunpack.c.l.b16 %v3646
          %v3679 = vunpack.c.l.b16 %v3647
          %v3680 = vunpack.c.l.b16 %v3648
          %v3681 = vunpack.c.l.b16 %v3649
          %v3682 = vunpack.c.l.b16 %v3650
          %v3683 = vunpack.c.l.b16 %v3651
          %v3684 = vunpack.c.l.b16 %v3652
          %v3685 = vunpack.c.l.b16 %v3653
          %v3686 = vunpack.c.l.b16 %v3654
          %v3687 = vunpack.c.l.b16 %v3655
          %v3688 = vunpack.c.l.b16 %v3656
          %v3689 = vunpack.c.l.b16 %v3657
          %v3690 = vunpack.c.l.b16 %v3658
          %v3691 = vunpack.c.l.b16 %v3659
          %v3692 = vunpack.c.l.b16 %v3660
          %v3693 = vpack.c.b16 %v3678, %v3677
          %v3694 = vpack.c.b16 %v3680, %v3679
          %v3695 = vpack.c.b16 %v3682, %v3681
          %v3696 = vpack.c.b16 %v3684, %v3683
          %v3697 = vpack.c.b16 %v3686, %v3685
          %v3698 = vpack.c.b16 %v3688, %v3687
          %v3699 = vpack.c.b16 %v3690, %v3689
          %v3700 = vpack.c.b16 %v3692, %v3691
          %3709 = vmatprep.subr.bf16.mxu0 0
          %3710 = vmatpush1.bf16.msra.mxu0 %v3693
          %3711 = vmatprep.subr.bf16.mxu0 0
          %3712 = vmatpush1.bf16.msra.mxu0 %v3694
          %3713 = vmatprep.subr.bf16.mxu0 0
          %3714 = vmatpush1.bf16.msra.mxu0 %v3695
          %3715 = vmatprep.subr.bf16.mxu0 0
          %3716 = vmatpush1.bf16.msra.mxu0 %v3696
          %3717 = vmatprep.subr.bf16.mxu0 0
          %3718 = vmatpush1.bf16.msra.mxu0 %v3697
          %3719 = vmatprep.subr.bf16.mxu0 0
          %3720 = vmatpush1.bf16.msra.mxu0 %v3698
          %3721 = vmatprep.subr.bf16.mxu0 0
          %3722 = vmatpush1.bf16.msra.mxu0 %v3699
          %3723 = vmatprep.subr.bf16.mxu0 0
          %3724 = vmatpush1.bf16.msra.mxu0 %v3700
          %3725 = vmatprep.subr.bf16.mxu0 0
          %3726 = vmatpush1.bf16.msra.mxu0 0
          %3727 = vmatprep.subr.bf16.mxu0 0
          %3728 = vmatpush1.bf16.msra.mxu0 0
          %3729 = vmatprep.subr.bf16.mxu0 0
          %3730 = vmatpush1.bf16.msra.mxu0 0
          %3731 = vmatprep.subr.bf16.mxu0 0
          %3732 = vmatpush1.bf16.msra.mxu0 0
          %3733 = vmatprep.subr.bf16.mxu0 0
          %3734 = vmatpush1.bf16.msra.mxu0 0
          %3735 = vmatprep.subr.bf16.mxu0 0
          %3736 = vmatpush1.bf16.msra.mxu0 0
          %3737 = vmatprep.subr.bf16.mxu0 0
          %3738 = vmatpush1.bf16.msra.mxu0 0
          %3739 = vmatprep.subr.bf16.mxu0 0
          %3740 = vmatpush1.bf16.msra.mxu0 0
          %3741 = vmatprep.mubr.bf16.mxu0 0
          %3742 = vmatmul.mubr.bf16.gmra.mrb[0].mxu0 %v3644
          %v3743 = vpop.f32.mrb[0].mxu0
          %v3744 = vadd.f32 0.0, %v3743
          %v3745 = vpop.f32.mrb[0].mxu0
          %v3746 = vpop.f32.mrb[0].mxu0
          %v3747 = vpop.f32.mrb[0].mxu0
          %3748 = vdwg.mxu0
          %v3749 = vadd.f32 %v3639, %v3744
          %v3750 = vld [vmem:[%s10] sm:$0x1]
          %v3752 = vlaneseq
          %v3753 = vshrl.u32 %v3752, 7
          %v3754 = vsub.s32 0, %v3753
          %v3755 = vrot.slane %v3750, %v3754
          %v3757 = vadd.f32 %v3749, %v3755
          %v3758 = vmax.f32 %v3757, 0.0
          %v3759 = vpack.c.bf16 %v3758, %v3758
          %v3760 = vld [vmem:[#allocation19] sm:$0xf]
          %v3761 = vld [vmem:[#allocation19 + $0x4] sm:$0xf]
          %v3762 = vld [vmem:[#allocation19 + $0x8] sm:$0xf]
          %v3763 = vld [vmem:[#allocation19 + $0xc] sm:$0xf]
          %v3764 = vld [vmem:[#allocation19 + $0x10] sm:$0xf]
          %v3765 = vld [vmem:[#allocation19 + $0x14] sm:$0xf]
          %v3766 = vld [vmem:[#allocation19 + $0x18] sm:$0xf]
          %v3767 = vld [vmem:[#allocation19 + $0x1c] sm:$0xf]
          %v3768 = vld [vmem:[#allocation19 + $0x20] sm:$0xf]
          %v3769 = vld [vmem:[#allocation19 + $0x24] sm:$0xf]
          %v3770 = vld [vmem:[#allocation19 + $0x28] sm:$0xf]
          %v3771 = vld [vmem:[#allocation19 + $0x2c] sm:$0xf]
          %v3772 = vld [vmem:[#allocation19 + $0x30] sm:$0xf]
          %v3773 = vld [vmem:[#allocation19 + $0x34] sm:$0xf]
          %v3774 = vld [vmem:[#allocation19 + $0x38] sm:$0xf]
          %v3775 = vld [vmem:[#allocation19 + $0x3c] sm:$0xf]
          %v3776 = vld [vmem:[%s12] sm:$0x1]
          %v3778 = vlaneseq
          %v3779 = vshrl.u32 %v3778, 7
          %v3780 = vsub.s32 0, %v3779
          %v3781 = vrot.slane %v3776, %v3780
          %v3799 = vunpack.c.l.b16 %v3760
          %v3800 = vunpack.c.l.b16 %v3761
          %v3801 = vunpack.c.l.b16 %v3762
          %v3802 = vunpack.c.l.b16 %v3763
          %v3803 = vunpack.c.l.b16 %v3764
          %v3804 = vunpack.c.l.b16 %v3765
          %v3805 = vunpack.c.l.b16 %v3766
          %v3806 = vunpack.c.l.b16 %v3767
          %v3807 = vunpack.c.l.b16 %v3768
          %v3808 = vunpack.c.l.b16 %v3769
          %v3809 = vunpack.c.l.b16 %v3770
          %v3810 = vunpack.c.l.b16 %v3771
          %v3811 = vunpack.c.l.b16 %v3772
          %v3812 = vunpack.c.l.b16 %v3773
          %v3813 = vunpack.c.l.b16 %v3774
          %v3814 = vunpack.c.l.b16 %v3775
          %v3815 = vpack.c.b16 %v3800, %v3799
          %v3816 = vpack.c.b16 %v3802, %v3801
          %v3817 = vpack.c.b16 %v3804, %v3803
          %v3818 = vpack.c.b16 %v3806, %v3805
          %v3819 = vpack.c.b16 %v3808, %v3807
          %v3820 = vpack.c.b16 %v3810, %v3809
          %v3821 = vpack.c.b16 %v3812, %v3811
          %v3822 = vpack.c.b16 %v3814, %v3813
          %3831 = vmatprep.subr.bf16.mxu0 0
          %3832 = vmatpush1.bf16.msra.mxu0 %v3815
          %3833 = vmatprep.subr.bf16.mxu0 0
          %3834 = vmatpush1.bf16.msra.mxu0 %v3816
          %3835 = vmatprep.subr.bf16.mxu0 0
          %3836 = vmatpush1.bf16.msra.mxu0 %v3817
          %3837 = vmatprep.subr.bf16.mxu0 0
          %3838 = vmatpush1.bf16.msra.mxu0 %v3818
          %3839 = vmatprep.subr.bf16.mxu0 0
          %3840 = vmatpush1.bf16.msra.mxu0 %v3819
          %3841 = vmatprep.subr.bf16.mxu0 0
          %3842 = vmatpush1.bf16.msra.mxu0 %v3820
          %3843 = vmatprep.subr.bf16.mxu0 0
          %3844 = vmatpush1.bf16.msra.mxu0 %v3821
          %3845 = vmatprep.subr.bf16.mxu0 0
          %3846 = vmatpush1.bf16.msra.mxu0 %v3822
          %3847 = vmatprep.subr.bf16.mxu0 0
          %3848 = vmatpush1.bf16.msra.mxu0 0
          %3849 = vmatprep.subr.bf16.mxu0 0
          %3850 = vmatpush1.bf16.msra.mxu0 0
          %3851 = vmatprep.subr.bf16.mxu0 0
          %3852 = vmatpush1.bf16.msra.mxu0 0
          %3853 = vmatprep.subr.bf16.mxu0 0
          %3854 = vmatpush1.bf16.msra.mxu0 0
          %3855 = vmatprep.subr.bf16.mxu0 0
          %3856 = vmatpush1.bf16.msra.mxu0 0
          %3857 = vmatprep.subr.bf16.mxu0 0
          %3858 = vmatpush1.bf16.msra.mxu0 0
          %3859 = vmatprep.subr.bf16.mxu0 0
          %3860 = vmatpush1.bf16.msra.mxu0 0
          %3861 = vmatprep.subr.bf16.mxu0 0
          %3862 = vmatpush1.bf16.msra.mxu0 0
          %3863 = vmatprep.mubr.bf16.mxu0 0
          %3864 = vmatmul.mubr.bf16.gmra.mrb[0].mxu0 %v3759
          %v3865 = vpop.f32.mrb[0].mxu0
          %v3866 = vadd.f32 %v3781, %v3865
          %v3867 = vpop.f32.mrb[0].mxu0
          %v3868 = vpop.f32.mrb[0].mxu0
          %v3869 = vpop.f32.mrb[0].mxu0
          %3870 = vdwg.mxu0
          %3871 = vst [vmem:[#allocation20] sm:$0xff] %v3866
        $region124: #{tpu_custom_call.1} parent=71 // pred_fallthru
          _
        // Predicated region
        $region125: #{tpu_custom_call.1} parent=71 // pred_check
          %p3872 = pneg %p338
        $region126: #{tpu_custom_call.1} parent=71 // pred_check_branch
          %3874 = sbr.rel (%p3872) target = $region128
        $region127: #{tpu_custom_call.1} parent=71 // pred_region
          %s3876 = ssub.s32 128, 128
          %3877 = vsyncadd [#allocation7], %s3876
          %s3879 = sshll.u32 [#allocation20], 4
          %s3880 = int_to_ptr.vmem [resolvable:$true] %s3879
          %3882 = dma.vmem_to_hbm [thread:$0]  %s3880, 128, %s13, [#allocation7]
        $region128: #{tpu_custom_call.1} parent=71 // pred_fallthru
          _
        // Predicated region
        $region129: #{tpu_custom_call.1} parent=71 // pred_check
          %p3883 = pneg %p338
        $region130: #{tpu_custom_call.1} parent=71 // pred_check_branch
          %3885 = sbr.rel (%p3883) target = $region132
        $region131: #{tpu_custom_call.1} parent=71 // pred_region
          %3886 = dma.done [#allocation7], 128
        $region132: #{tpu_custom_call.1} parent=71 // pred_fallthru
          _
      $region72: #{tpu_custom_call.1} parent=5 // pred_fallthru
        _
      %p3887 = scmp.le.s32.totalorder 2, %s27
      // Predicated region
      $region133: #{tpu_custom_call.1} parent=5 // pred_check
        %p3888 = pneg %p3887
      $region134: #{tpu_custom_call.1} parent=5 // pred_check_branch
        %3890 = sbr.rel (%p3888) target = $region136
      $region135: #{tpu_custom_call.1} parent=5 // pred_region
        %s3891 = ssub.s32 %s27, 2
      $region136: #{tpu_custom_call.1} parent=5 // pred_fallthru
        _
    $region6: #{tpu_custom_call.1} parent=1 // loop_footer
      %s31 = sadd.s32 1, %s27
    $region7: #{tpu_custom_call.1} parent=1 // loop_footer_branch
      %26 = sbr.rel target = $region3
    $region8: #{tpu_custom_call.1} parent=1 // loop_exit
      _
    %3892 = vsyncpa [#allocation6], 1
    %s3893 = scalar_lea.sflag [#allocation6], 1
    %3894 = vsyncpa %s3893, 1
    %3895 = vsyncpa [#allocation9], 1
    %3896 = vsyncpa [#allocation12], 1
    %s3897 = scalar_lea.sflag [#allocation12], 1
    %3898 = vsyncpa %s3897, 1
    %3899 = vsyncpa [#allocation15], 1
    %3900 = vsyncpa [#allocation18], 1
    %3901 = vsyncpa [#allocation7], 1
    %s3902 = scalar_lea.sflag [#allocation7], 1
    %3903 = vsyncpa %s3902, 1

</llo_original>
